<compile_context>
chip_gen: v7x
topology: tpu7x:2x2x1
jax: 0.10.0
libtpu: 0.0.40
codegen_flags: <defaults>
</compile_context>

<pallas_src>
import math

import jax
import jax.numpy as jnp
from jax import lax
from jax.experimental import pallas as pl
from jax.experimental.pallas import tpu as pltpu


def _mha_kernel(q_ref, k_ref, v_ref, wqkv_ref, bqkv_ref, wo_ref, bo_ref,
                out_ref, attn_ref):
    f32 = jnp.float32
    x_q = q_ref[0]                       # (TQ, D)  compute dtype (f32 or bf16)
    x_k = k_ref[0]                       # (Sk, D)
    x_v = v_ref[0]                       # (Sk, D)
    cdt = x_q.dtype                      # MXU operand dtype

    H, d_k, D = wo_ref.shape
    TQ = x_q.shape[0]
    Sk = x_k.shape[0]

    wq = wqkv_ref[0]                     # (D, D)  = Wq * 1/sqrt(d_k)   (out, in)
    wk = wqkv_ref[1]                     # (D, D)
    wv = wqkv_ref[2]                     # (D, D)
    bq = bqkv_ref[0]                     # (D, 1)  f32, scale folded in
    bk = bqkv_ref[1]
    bv = bqkv_ref[2]

    # Full-width projections (K = D contraction, full MXU fill), f32 accumulation,
    # produced in (D_out, S) orientation so the head split below is a free
    # major-dim reshape (d_k is a multiple of the 8-row sublane tile).
    dn_proj = (((1,), (1,)), ((), ()))
    QhT = (lax.dot_general(wq, x_q, dn_proj, preferred_element_type=f32) + bq
           ).reshape(H, d_k, TQ)                                   # (H, d_k, TQ)
    KhT = (lax.dot_general(wk, x_k, dn_proj, preferred_element_type=f32) + bk
           ).reshape(H, d_k, Sk)                                   # (H, d_k, Sk)
    VhT = (lax.dot_general(wv, x_v, dn_proj, preferred_element_type=f32) + bv
           ).reshape(H, d_k, Sk)                                   # (H, d_k, Sk)

    # Scores for all heads at once: batched over H, contracting d_k.
    # (1/sqrt(d_k) already folded into wq/bq.)
    s = lax.dot_general(QhT.astype(cdt), KhT.astype(cdt),
                        (((1,), (1,)), ((0,), (0,))),
                        preferred_element_type=f32)                # (H, TQ, Sk)

    # Exact softmax in f32: stored weights sum to 1 and are exactly the
    # weights used for the context below.
    m = jnp.max(s, axis=-1, keepdims=True)
    e = jnp.exp(s - m)
    attn = e / jnp.sum(e, axis=-1, keepdims=True)                  # (H, TQ, Sk)
    attn_ref[0] = attn.astype(attn_ref.dtype)

    # Context per head: batched over H, contracting Sk.
    ctx = lax.dot_general(attn.astype(cdt), VhT.astype(cdt),
                          (((2,), (2,)), ((0,), (0,))),
                          preferred_element_type=f32)              # (H, TQ, d_k)

    # Output projection: per-head slabs of Wo^T, summed over heads.
    # Avoids a (H, TQ, d_k) -> (TQ, D) relayout; the head-sum is cheap VPU work.
    proj = lax.dot_general(ctx.astype(cdt), wo_ref[...],
                           (((2,), (1,)), ((0,), (0,))),
                           preferred_element_type=f32)             # (H, TQ, D)
    out_ref[0] = (jnp.sum(proj, axis=0) + bo_ref[...]).astype(out_ref.dtype)


def prepare_params(params, *, num_heads, compute_dtype=jnp.float32):
    """One-time host-side weight packing (keep OUT of the per-call hot path).

    nn.Linear weights are (out, in); the kernel computes W @ x^T directly, so
    Wq/Wk/Wv stay in (out, in) orientation, packed into a single (3, D, D)
    slab (Wq pre-scaled by 1/sqrt(d_k)).  Wo^T is split into per-head
    (d_k, D) slabs so the output projection needs no in-kernel relayout.
    """
    D = params["wq"].shape[0]
    d_k = D // num_heads
    scale = 1.0 / math.sqrt(d_k)

    wqkv = jnp.stack([params["wq"] * scale, params["wk"], params["wv"]],
                     axis=0).astype(compute_dtype)                 # (3, D, D)
    bqkv = jnp.stack([params["bq"] * scale, params["bk"], params["bv"]],
                     axis=0).reshape(3, D, 1).astype(jnp.float32)  # (3, D, 1)
    wo_h = jnp.transpose(params["wo"]).reshape(num_heads, d_k, D
                                               ).astype(compute_dtype)  # (H, d_k, D)
    bo = params["bo"].reshape(1, D).astype(jnp.float32)            # (1, D)
    return {"wqkv": wqkv, "bqkv": bqkv, "wo": wo_h, "bo": bo}


def mha_forward(q, k, v, prep, *, num_heads):
    B, Sq, D = q.shape
    Sk = k.shape[1]
    d_k = D // num_heads
    cdt = prep["wqkv"].dtype            # compute dtype chosen in prepare_params
    itm = jnp.dtype(cdt).itemsize

    # q-tile: keep the whole (small) sequence per step; tile down at realistic
    # lengths so the attn block stays within VMEM (re-derived for v7x 64 MiB).
    TQ = Sq
    if Sq > 256:
        for t in (512, 256, 128):
            if Sq % t == 0 and 2 * num_heads * t * Sk * 4 <= 24 * 2**20:
                TQ = t
                break
    assert Sq % TQ == 0
    nq = Sq // TQ

    qc = q.astype(cdt)
    kc = k.astype(cdt)
    vc = v.astype(cdt)

    # Advisory cost estimate (lets XLA schedule around the custom call).
    flops = int(B * (2 * D * D * (2 * Sq + 2 * Sk) + 4 * Sq * Sk * D))
    bytes_accessed = int(
        (qc.size + kc.size + vc.size) * itm
        + sum(int(a.size) * a.dtype.itemsize for a in prep.values())
        + B * Sq * D * 4 + B * num_heads * Sq * Sk * 4)

    # Per-step VMEM footprint (double-buffered blocks) + resident weights.
    step_bytes = 2 * (TQ * D * itm + 2 * Sk * D * itm
                      + TQ * D * 4 + num_heads * TQ * Sk * 4)
    weight_bytes = (3 * D * D + num_heads * d_k * D) * itm + (3 * D + D) * 4
    vmem_limit = int(min(64 * 2**20,
                         max(32 * 2**20, 4 * (step_bytes + weight_bytes))))

    out, attn = pl.pallas_call(
        _mha_kernel,
        out_shape=(
            jax.ShapeDtypeStruct((B, Sq, D), jnp.float32),
            jax.ShapeDtypeStruct((B, num_heads, Sq, Sk), jnp.float32),
        ),
        grid=(B, nq),
        in_specs=[
            pl.BlockSpec((1, TQ, D), lambda b, i: (b, i, 0)),        # q tile
            pl.BlockSpec((1, Sk, D), lambda b, i: (b, 0, 0)),        # k (resident over q tiles)
            pl.BlockSpec((1, Sk, D), lambda b, i: (b, 0, 0)),        # v (resident over q tiles)
            pl.BlockSpec((3, D, D), lambda b, i: (0, 0, 0)),         # Wq*scale|Wk|Wv (resident)
            pl.BlockSpec((3, D, 1), lambda b, i: (0, 0, 0)),         # packed biases  (resident)
            pl.BlockSpec((num_heads, d_k, D), lambda b, i: (0, 0, 0)),  # Wo^T per-head (resident)
            pl.BlockSpec((1, D), lambda b, i: (0, 0)),               # b_o            (resident)
        ],
        out_specs=(
            pl.BlockSpec((1, TQ, D), lambda b, i: (b, i, 0)),
            pl.BlockSpec((1, num_heads, TQ, Sk), lambda b, i: (b, 0, i, 0)),
        ),
        compiler_params=pltpu.CompilerParams(
            dimension_semantics=("parallel", "parallel"),
            vmem_limit_bytes=vmem_limit,
        ),
        cost_estimate=pl.CostEstimate(
            flops=flops,
            transcendentals=int(B * num_heads * Sq * Sk),
            bytes_accessed=bytes_accessed,
        ),
    )(qc, kc, vc, prep["wqkv"], prep["bqkv"], prep["wo"], prep["bo"])
    return out, attn


def mha_reference(q, k, v, params, *, num_heads):
    """Pure-JAX replica of the PyTorch StandardMultiHeadAttention.forward."""
    B, Sq, D = q.shape
    d_k = D // num_heads
    Q = q @ params["wq"].T + params["bq"]
    K = k @ params["wk"].T + params["bk"]
    V = v @ params["wv"].T + params["bv"]
    Q = Q.reshape(B, Sq, num_heads, d_k).transpose(0, 2, 1, 3)
    K = K.reshape(B, -1, num_heads, d_k).transpose(0, 2, 1, 3)
    V = V.reshape(B, -1, num_heads, d_k).transpose(0, 2, 1, 3)
    scores = jnp.einsum("bhqd,bhkd->bhqk", Q, K) / math.sqrt(d_k)
    attn = jax.nn.softmax(scores, axis=-1)
    ctx = jnp.einsum("bhqk,bhkd->bhqd", attn, V)
    ctx = ctx.transpose(0, 2, 1, 3).reshape(B, Sq, D)
    out = ctx @ params["wo"].T + params["bo"]
    return out, attn


if __name__ == "__main__":
    d_model, num_heads = 64, 8
    d_k = d_model // num_heads
    B, Sq, Sk = 2, 8, 8

    key = jax.random.PRNGKey(0)
    ks = jax.random.split(key, 11)
    # PyTorch Linear weight shapes: (out_features, in_features).
    params = {
        "wq": jax.random.normal(ks[0], (d_model, d_model), jnp.float32) * 0.1,
        "bq": jax.random.normal(ks[1], (d_model,), jnp.float32) * 0.1,
        "wk": jax.random.normal(ks[2], (d_model, d_model), jnp.float32) * 0.1,
        "bk": jax.random.normal(ks[3], (d_model,), jnp.float32) * 0.1,
        "wv": jax.random.normal(ks[4], (d_model, d_model), jnp.float32) * 0.1,
        "bv": jax.random.normal(ks[5], (d_model,), jnp.float32) * 0.1,
        "wo": jax.random.normal(ks[6], (d_model, d_model), jnp.float32) * 0.1,
        "bo": jax.random.normal(ks[7], (d_model,), jnp.float32) * 0.1,
    }
    q = jax.random.normal(ks[8], (B, Sq, d_model), jnp.float32)
    k = jax.random.normal(ks[9], (B, Sk, d_model), jnp.float32)
    v = jax.random.normal(ks[10], (B, Sk, d_model), jnp.float32)

    ref_out, ref_attn = mha_reference(q, k, v, params, num_heads=num_heads)

    # f32 MXU operands (accuracy configuration).
    prep32 = prepare_params(params, num_heads=num_heads, compute_dtype=jnp.float32)
    out, attn = mha_forward(q, k, v, prep32, num_heads=num_heads)
    jax.block_until_ready((out, attn))
    assert out.shape == (B, Sq, d_model)
    assert attn.shape == (B, num_heads, Sq, Sk)
    assert jnp.allclose(out, ref_out, atol=2e-3, rtol=2e-3)
    assert jnp.allclose(attn, ref_attn, atol=2e-3, rtol=2e-3)

    # bf16 MXU operands, f32 accumulation + f32 softmax (perf configuration).
    # NOTE: projections / attn are re-quantized to bf16 between matmuls; this
    # is the intended precision/perf trade (hence the 5e-2 tolerance).
    prep16 = prepare_params(params, num_heads=num_heads, compute_dtype=jnp.bfloat16)
    out16, attn16 = mha_forward(q, k, v, prep16, num_heads=num_heads)
    jax.block_until_ready((out16, attn16))
    assert jnp.allclose(out16, ref_out, atol=5e-2, rtol=5e-2)
    assert jnp.allclose(attn16, ref_attn, atol=5e-2, rtol=5e-2)

    print("KERNEL_OK")
</pallas_src>

<mosaic_0001>
module attributes {stable_mosaic.version = 11 : i64} {
  func.func @_mha_kernel(%arg0: i32, %arg1: i32, %arg2: memref<1x8x64xf32, #tpu.memory_space<vmem>>, %arg3: memref<1x8x64xf32, #tpu.memory_space<vmem>>, %arg4: memref<1x8x64xf32, #tpu.memory_space<vmem>>, %arg5: memref<3x64x64xf32, #tpu.memory_space<vmem>>, %arg6: memref<3x64x1xf32, #tpu.memory_space<vmem>>, %arg7: memref<8x8x64xf32, #tpu.memory_space<vmem>>, %arg8: memref<1x64xf32, #tpu.memory_space<vmem>>, %arg9: memref<1x8x64xf32, #tpu.memory_space<vmem>>, %arg10: memref<1x8x8x8xf32, #tpu.memory_space<vmem>>) attributes {dimension_semantics = [#tpu.dimension_semantics<parallel>, #tpu.dimension_semantics<parallel>], iteration_bounds = array<i64: 2, 1>, scalar_prefetch = 0 : i64, scratch_operands = 0 : i64, tpu.core_type = #tpu.core_type<tc>, window_params = [{transform_indices = @transform_0, window_bounds = array<i64: 1, 8, 64>}, {transform_indices = @transform_1, window_bounds = array<i64: 1, 8, 64>}, {transform_indices = @transform_2, window_bounds = array<i64: 1, 8, 64>}, {pipeline_mode = #tpu.pipeline_mode<synchronous>, transform_indices = @transform_3, window_bounds = array<i64: 3, 64, 64>}, {pipeline_mode = #tpu.pipeline_mode<synchronous>, transform_indices = @transform_4, window_bounds = array<i64: 3, 64, 1>}, {pipeline_mode = #tpu.pipeline_mode<synchronous>, transform_indices = @transform_5, window_bounds = array<i64: 8, 8, 64>}, {pipeline_mode = #tpu.pipeline_mode<synchronous>, transform_indices = @transform_6, window_bounds = array<i64: 1, 64>}, {transform_indices = @transform_7, window_bounds = array<i64: 1, 8, 64>}, {transform_indices = @transform_8, window_bounds = array<i64: 1, 8, 8, 8>}]} {
    %c0 = arith.constant 0 : index
    %c0_0 = arith.constant 0 : index
    %c0_1 = arith.constant 0 : index
    %0 = vector.load %arg2[%c0, %c0_0, %c0_1] : memref<1x8x64xf32, #tpu.memory_space<vmem>>, vector<1x8x64xf32>
    %1 = vector.shape_cast %0 : vector<1x8x64xf32> to vector<8x64xf32>
    %c0_2 = arith.constant 0 : index
    %c0_3 = arith.constant 0 : index
    %c0_4 = arith.constant 0 : index
    %2 = vector.load %arg3[%c0_2, %c0_3, %c0_4] : memref<1x8x64xf32, #tpu.memory_space<vmem>>, vector<1x8x64xf32>
    %3 = vector.shape_cast %2 : vector<1x8x64xf32> to vector<8x64xf32>
    %c0_5 = arith.constant 0 : index
    %c0_6 = arith.constant 0 : index
    %c0_7 = arith.constant 0 : index
    %4 = vector.load %arg4[%c0_5, %c0_6, %c0_7] : memref<1x8x64xf32, #tpu.memory_space<vmem>>, vector<1x8x64xf32>
    %5 = vector.shape_cast %4 : vector<1x8x64xf32> to vector<8x64xf32>
    %c0_8 = arith.constant 0 : index
    %c0_9 = arith.constant 0 : index
    %c0_10 = arith.constant 0 : index
    %6 = vector.load %arg5[%c0_8, %c0_9, %c0_10] : memref<3x64x64xf32, #tpu.memory_space<vmem>>, vector<1x64x64xf32>
    %7 = vector.shape_cast %6 : vector<1x64x64xf32> to vector<64x64xf32>
    %c1 = arith.constant 1 : index
    %c0_11 = arith.constant 0 : index
    %c0_12 = arith.constant 0 : index
    %8 = vector.load %arg5[%c1, %c0_11, %c0_12] : memref<3x64x64xf32, #tpu.memory_space<vmem>>, vector<1x64x64xf32>
    %9 = vector.shape_cast %8 : vector<1x64x64xf32> to vector<64x64xf32>
    %c2 = arith.constant 2 : index
    %c0_13 = arith.constant 0 : index
    %c0_14 = arith.constant 0 : index
    %10 = vector.load %arg5[%c2, %c0_13, %c0_14] : memref<3x64x64xf32, #tpu.memory_space<vmem>>, vector<1x64x64xf32>
    %11 = vector.shape_cast %10 : vector<1x64x64xf32> to vector<64x64xf32>
    %c0_15 = arith.constant 0 : index
    %c0_16 = arith.constant 0 : index
    %c0_17 = arith.constant 0 : index
    %12 = vector.load %arg6[%c0_15, %c0_16, %c0_17] : memref<3x64x1xf32, #tpu.memory_space<vmem>>, vector<1x64x1xf32>
    %13 = vector.shape_cast %12 : vector<1x64x1xf32> to vector<64x1xf32>
    %c1_18 = arith.constant 1 : index
    %c0_19 = arith.constant 0 : index
    %c0_20 = arith.constant 0 : index
    %14 = vector.load %arg6[%c1_18, %c0_19, %c0_20] : memref<3x64x1xf32, #tpu.memory_space<vmem>>, vector<1x64x1xf32>
    %15 = vector.shape_cast %14 : vector<1x64x1xf32> to vector<64x1xf32>
    %c2_21 = arith.constant 2 : index
    %c0_22 = arith.constant 0 : index
    %c0_23 = arith.constant 0 : index
    %16 = vector.load %arg6[%c2_21, %c0_22, %c0_23] : memref<3x64x1xf32, #tpu.memory_space<vmem>>, vector<1x64x1xf32>
    %17 = vector.shape_cast %16 : vector<1x64x1xf32> to vector<64x1xf32>
    %cst = arith.constant dense<0.000000e+00> : vector<64x8xf32>
    %18 = tpu.matmul %7, %1, %cst {dimension_numbers = #tpu.dot_dimension_numbers<[1], [1], [0], [0], [0, 0, 1, 0], [], []>} : vector<64x64xf32>, vector<8x64xf32>, vector<64x8xf32> -> vector<64x8xf32>
    %19 = vector.broadcast %13 : vector<64x1xf32> to vector<64x8xf32>
    %20 = arith.addf %18, %19 : vector<64x8xf32>
    %21 = vector.shape_cast %20 : vector<64x8xf32> to vector<8x8x8xf32>
    %cst_24 = arith.constant dense<0.000000e+00> : vector<64x8xf32>
    %22 = tpu.matmul %9, %3, %cst_24 {dimension_numbers = #tpu.dot_dimension_numbers<[1], [1], [0], [0], [0, 0, 1, 0], [], []>} : vector<64x64xf32>, vector<8x64xf32>, vector<64x8xf32> -> vector<64x8xf32>
    %23 = vector.broadcast %15 : vector<64x1xf32> to vector<64x8xf32>
    %24 = arith.addf %22, %23 : vector<64x8xf32>
    %25 = vector.shape_cast %24 : vector<64x8xf32> to vector<8x8x8xf32>
    %cst_25 = arith.constant dense<0.000000e+00> : vector<64x8xf32>
    %26 = tpu.matmul %11, %5, %cst_25 {dimension_numbers = #tpu.dot_dimension_numbers<[1], [1], [0], [0], [0, 0, 1, 0], [], []>} : vector<64x64xf32>, vector<8x64xf32>, vector<64x8xf32> -> vector<64x8xf32>
    %27 = vector.broadcast %17 : vector<64x1xf32> to vector<64x8xf32>
    %28 = arith.addf %26, %27 : vector<64x8xf32>
    %29 = vector.shape_cast %28 : vector<64x8xf32> to vector<8x8x8xf32>
    %cst_26 = arith.constant dense<0.000000e+00> : vector<8x8x8xf32>
    %30 = tpu.matmul %21, %25, %cst_26 {dimension_numbers = #tpu.dot_dimension_numbers<[1], [1], [2], [2], [0, 0, 0, 2, 1, 2], [0], [0]>} : vector<8x8x8xf32>, vector<8x8x8xf32>, vector<8x8x8xf32> -> vector<8x8x8xf32>
    %cst_27 = arith.constant dense<0xFF800000> : vector<8x8xf32>
    %31 = vector.multi_reduction <maximumf>, %30, %cst_27 [2] : vector<8x8x8xf32> to vector<8x8xf32>
    %32 = vector.shape_cast %31 : vector<8x8xf32> to vector<8x8x1xf32>
    %33 = vector.broadcast %32 : vector<8x8x1xf32> to vector<8x8x8xf32>
    %34 = arith.subf %30, %33 : vector<8x8x8xf32>
    %35 = math.exp %34 : vector<8x8x8xf32>
    %cst_28 = arith.constant dense<0.000000e+00> : vector<8x8xf32>
    %36 = vector.multi_reduction <add>, %35, %cst_28 [2] : vector<8x8x8xf32> to vector<8x8xf32>
    %37 = vector.shape_cast %36 : vector<8x8xf32> to vector<8x8x1xf32>
    %38 = vector.broadcast %37 : vector<8x8x1xf32> to vector<8x8x8xf32>
    %39 = arith.divf %35, %38 : vector<8x8x8xf32>
    %c0_29 = arith.constant 0 : index
    %c0_30 = arith.constant 0 : index
    %c0_31 = arith.constant 0 : index
    %c0_32 = arith.constant 0 : index
    %40 = vector.load %arg10[%c0_29, %c0_30, %c0_31, %c0_32] : memref<1x8x8x8xf32, #tpu.memory_space<vmem>>, vector<1x8x8x8xf32>
    %41 = vector.shape_cast %40 : vector<1x8x8x8xf32> to vector<8x8x8xf32>
    %42 = vector.shape_cast %39 : vector<8x8x8xf32> to vector<1x8x8x8xf32>
    tpu.vector_store %arg10[%c0_29, %c0_30, %c0_31, %c0_32], %42 {strides = array<i32>} : memref<1x8x8x8xf32, #tpu.memory_space<vmem>>, vector<1x8x8x8xf32>,
    %cst_33 = arith.constant dense<0.000000e+00> : vector<8x8x8xf32>
    %43 = tpu.matmul %39, %29, %cst_33 {dimension_numbers = #tpu.dot_dimension_numbers<[2], [2], [1], [1], [0, 0, 0, 1, 1, 1], [0], [0]>} : vector<8x8x8xf32>, vector<8x8x8xf32>, vector<8x8x8xf32> -> vector<8x8x8xf32>
    %c0_34 = arith.constant 0 : index
    %c0_35 = arith.constant 0 : index
    %c0_36 = arith.constant 0 : index
    %44 = vector.load %arg7[%c0_34, %c0_35, %c0_36] : memref<8x8x64xf32, #tpu.memory_space<vmem>>, vector<8x8x64xf32>
    %cst_37 = arith.constant dense<0.000000e+00> : vector<8x8x64xf32>
    %45 = tpu.matmul %43, %44, %cst_37 {dimension_numbers = #tpu.dot_dimension_numbers<[2], [1], [1], [2], [0, 0, 0, 1, 1, 2], [0], [0]>} : vector<8x8x8xf32>, vector<8x8x64xf32>, vector<8x8x64xf32> -> vector<8x8x64xf32>
    %cst_38 = arith.constant dense<0.000000e+00> : vector<8x64xf32>
    %46 = vector.multi_reduction <add>, %45, %cst_38 [0] : vector<8x8x64xf32> to vector<8x64xf32>
    %c0_39 = arith.constant 0 : index
    %c0_40 = arith.constant 0 : index
    %47 = vector.load %arg8[%c0_39, %c0_40] : memref<1x64xf32, #tpu.memory_space<vmem>>, vector<1x64xf32>
    %48 = vector.broadcast %47 : vector<1x64xf32> to vector<8x64xf32>
    %49 = arith.addf %46, %48 : vector<8x64xf32>
    %c0_41 = arith.constant 0 : index
    %c0_42 = arith.constant 0 : index
    %c0_43 = arith.constant 0 : index
    %50 = vector.load %arg9[%c0_41, %c0_42, %c0_43] : memref<1x8x64xf32, #tpu.memory_space<vmem>>, vector<1x8x64xf32>
    %51 = vector.shape_cast %50 : vector<1x8x64xf32> to vector<8x64xf32>
    %52 = vector.shape_cast %49 : vector<8x64xf32> to vector<1x8x64xf32>
    tpu.vector_store %arg9[%c0_41, %c0_42, %c0_43], %52 {strides = array<i32>} : memref<1x8x64xf32, #tpu.memory_space<vmem>>, vector<1x8x64xf32>,
    return
  }
  func.func @transform_0(%arg0: i32, %arg1: i32) -> (i32, i32, i32) {
    %c0_i32 = arith.constant 0 : i32
    %c0_i32_0 = arith.constant 0 : i32
    return %arg0, %arg1, %c0_i32 : i32, i32, i32
  }
  func.func @transform_1(%arg0: i32, %arg1: i32) -> (i32, i32, i32) {
    %c0_i32 = arith.constant 0 : i32
    %c0_i32_0 = arith.constant 0 : i32
    %c0_i32_1 = arith.constant 0 : i32
    return %arg0, %c0_i32, %c0_i32_0 : i32, i32, i32
  }
  func.func @transform_2(%arg0: i32, %arg1: i32) -> (i32, i32, i32) {
    %c0_i32 = arith.constant 0 : i32
    %c0_i32_0 = arith.constant 0 : i32
    %c0_i32_1 = arith.constant 0 : i32
    return %arg0, %c0_i32, %c0_i32_0 : i32, i32, i32
  }
  func.func @transform_3(%arg0: i32, %arg1: i32) -> (i32, i32, i32) {
    %c0_i32 = arith.constant 0 : i32
    %c0_i32_0 = arith.constant 0 : i32
    %c0_i32_1 = arith.constant 0 : i32
    %c0_i32_2 = arith.constant 0 : i32
    return %c0_i32, %c0_i32_0, %c0_i32_1 : i32, i32, i32
  }
  func.func @transform_4(%arg0: i32, %arg1: i32) -> (i32, i32, i32) {
    %c0_i32 = arith.constant 0 : i32
    %c0_i32_0 = arith.constant 0 : i32
    %c0_i32_1 = arith.constant 0 : i32
    %c0_i32_2 = arith.constant 0 : i32
    return %c0_i32, %c0_i32_0, %c0_i32_1 : i32, i32, i32
  }
  func.func @transform_5(%arg0: i32, %arg1: i32) -> (i32, i32, i32) {
    %c0_i32 = arith.constant 0 : i32
    %c0_i32_0 = arith.constant 0 : i32
    %c0_i32_1 = arith.constant 0 : i32
    %c0_i32_2 = arith.constant 0 : i32
    return %c0_i32, %c0_i32_0, %c0_i32_1 : i32, i32, i32
  }
  func.func @transform_6(%arg0: i32, %arg1: i32) -> (i32, i32) {
    %c0_i32 = arith.constant 0 : i32
    %c0_i32_0 = arith.constant 0 : i32
    %c0_i32_1 = arith.constant 0 : i32
    return %c0_i32, %c0_i32_0 : i32, i32
  }
  func.func @transform_7(%arg0: i32, %arg1: i32) -> (i32, i32, i32) {
    %c0_i32 = arith.constant 0 : i32
    %c0_i32_0 = arith.constant 0 : i32
    return %arg0, %arg1, %c0_i32 : i32, i32, i32
  }
  func.func @transform_8(%arg0: i32, %arg1: i32) -> (i32, i32, i32, i32) {
    %c0_i32 = arith.constant 0 : i32
    %c0_i32_0 = arith.constant 0 : i32
    %c0_i32_1 = arith.constant 0 : i32
    return %arg0, %c0_i32, %arg1, %c0_i32_0 : i32, i32, i32, i32
  }
}

</mosaic_0001>

<llo_original>
// kernel: tpu_custom_call.1
$region0: #{tpu_custom_call.1}
  #allocation0 [shape = 'u32[]', space=smem, size = 0x4, offset = 0x4, fixed_abs, tag = 'smem constant byte address 0x4 - core index']
  #allocation1 [shape = 'u32[144,128]{1,0:T(1,128)}', space=vmem, size = 0x12000, scoped, tag = 'internal scratch']
  %s0 = inlined_call_operand.hbm [shape: f32[2,8,64], index: 0, kind: input, shape index: {}]
  %s1 = inlined_call_operand.hbm [shape: f32[2,8,64], index: 1, kind: input, shape index: {}]
  %s2 = inlined_call_operand.hbm [shape: f32[2,8,64], index: 2, kind: input, shape index: {}]
  %s3 = inlined_call_operand.vmem [shape: f32[3,64,64], index: 3, kind: input, shape index: {}]
  %s4 = inlined_call_operand.vmem [shape: f32[3,64,1], index: 4, kind: input, shape index: {}]
  %s5 = inlined_call_operand.hbm [shape: f32[8,8,64], index: 5, kind: input, shape index: {}]
  %s6 = inlined_call_operand.vmem [shape: f32[1,64], index: 6, kind: input, shape index: {}]
  %s7 = inlined_call_operand.hbm [shape: f32[2,8,64], index: 7, kind: output, shape index: {0}]
  %s8 = inlined_call_operand.hbm [shape: f32[2,8,8,8], index: 8, kind: output, shape index: {1}]
  %9 = xla_tuple %s7, %s8
  %s10 = sld [smem:[#allocation0]]
  $region85: #{tpu_custom_call.1} parent=0
    _
  %s12 = ssub.s32 1, %s10
  %s13 = scalar_select 0, %s12, %s10
  $region1: #{tpu_custom_call.1} parent=0
    #allocation2 [shape = 'u8[8192]{0}', space=vmem, size = 0x2000, scoped, tag = 'input window, operand 0']
    #allocation3 [shape = 's32[2]{0}', space=sflag, size = 0x8, scoped, tag = 'scoped memory for tpu_custom_call.1']
    #allocation4 [shape = 's32[2]{0}', space=sflag, size = 0x8, scoped, tag = 'scoped memory for tpu_custom_call.1']
    #allocation5 [shape = 'u8[8192]{0}', space=vmem, size = 0x2000, scoped, tag = 'input window, operand 1']
    #allocation6 [shape = 's32[2]{0}', space=sflag, size = 0x8, scoped, tag = 'scoped memory for tpu_custom_call.1']
    #allocation7 [shape = 'u8[8192]{0}', space=vmem, size = 0x2000, scoped, tag = 'input window, operand 2']
    #allocation8 [shape = 'u8[32768]{0}', space=vmem, size = 0x8000, scoped, tag = 'input window, operand 5, single buffered']
    #allocation9 [shape = 's32[1]{0}', space=sflag, size = 0x4, scoped, tag = 'scoped memory for tpu_custom_call.1']
    #allocation10 [shape = 'u8[8192]{0}', space=vmem, size = 0x2000, scoped, tag = 'output window, operand 0']
    #allocation11 [shape = 'u8[65536]{0}', space=vmem, size = 0x10000, scoped, tag = 'output window, operand 1']
    #allocation12 [shape = 's32[2]{0}', space=sflag, size = 0x8, scoped, tag = 'scoped memory for tpu_custom_call.1']
    %14 = vsyncpa [#allocation3], 0
    %s15 = scalar_lea.sflag [#allocation3], 1
    %16 = vsyncpa %s15, 0
    %17 = vsyncpa [#allocation6], 0
    %s18 = scalar_lea.sflag [#allocation6], 1
    %19 = vsyncpa %s18, 0
    %20 = vsyncpa [#allocation9], 0
    %21 = vsyncpa [#allocation4], 0
    %s22 = scalar_lea.sflag [#allocation4], 1
    %23 = vsyncpa %s22, 0
    %24 = vsyncpa [#allocation12], 0
    %s25 = scalar_lea.sflag [#allocation12], 1
    %26 = vsyncpa %s25, 0
    loop: start=0, step=1, limit=4
    $region2: #{tpu_custom_call.1} parent=1 // loop_pre_header
      _
    $region3: #{tpu_custom_call.1} parent=1 // loop_header
      %s28 = sphi 0, %s32
      %p29 = scmp.ge.s32.totalorder %s28, 4
      %s35 = sphi 0, %s47
      %s36 = sphi 0, %s43
      %s37 = sphi 0, %s35
      %s38 = sphi 0, %s36
      %s39 = sphi 0, %s37
      %s40 = sphi 0, %s38
      %s52 = sphi 0, %s54
      %s55 = sphi 0, %s52
      %s56 = sphi 0, %s55
      %s72 = sphi 0, %s56
      %s78 = sphi 0, %s80
      %s81 = sphi 0, %s78
      %s82 = sphi 0, %s81
      %s98 = sphi 0, %s82
      %s104 = sphi 0, %s106
      %s107 = sphi 0, %s104
      %s108 = sphi 0, %s107
      %s124 = sphi 0, %s108
      %s128 = sphi 0, %s128
      %s130 = sphi 0, %s128
      %s131 = sphi 0, %s130
      %s145 = sphi 0, %s131
      %s149 = sphi 0, %s149
      %s151 = sphi 0, %s149
      %s152 = sphi 0, %s151
      %s166 = sphi 0, %s152
      %s170 = sphi 0, %s170
      %s172 = sphi 0, %s170
      %s173 = sphi 0, %s172
      %s187 = sphi 0, %s173
      %s191 = sphi 0, %s191
      %s193 = sphi 0, %s191
      %s194 = sphi 0, %s193
      %s208 = sphi 0, %s194
      %s216 = sphi 0, %s218
      %s219 = sphi 0, %s216
      %s220 = sphi 0, %s219
      %s236 = sphi 0, %s220
      %s244 = sphi 0, %s246
      %s247 = sphi 0, %s244
      %s248 = sphi 0, %s247
      %s264 = sphi 0, %s248
    $region4: #{tpu_custom_call.1} parent=1 // loop_header_branch
      %31 = sbr.rel (%p29) target = $region8
    $region5: #{tpu_custom_call.1} parent=1 // loop_body
      %s33 = ssub.s32 %s28, 1
      %s34 = ssub.s32 %s28, 2
      %s41 = sadd.s32 1, %s36
      %p42 = scmp.ge.s32.totalorder %s41, 1
      %s43 = scalar_select %p42, 0, %s41
      %s44 = sadd.s32 1, %s35
      %s45 = scalar_select %p42, %s44, %s35
      %p46 = scmp.ge.s32.totalorder %s45, 2
      %s47 = scalar_select %p46, 0, %s45
      %s48 = ssub.s32 %s35, %s47
      %s49 = ssub.s32 %s36, %s43
      %s50 = sor.u32 %s48, %s49
      %p51 = scmp.eq.s32.totalorder %s50, 0
      %s53 = sadd.s32 %s52, 1
      %s54 = scalar_select %p51, %s52, %s53
      %p57 = pneg %p51
      %p58 = scmp.eq.s32.totalorder %s28, 1
      %p59 = por %p57, %p58
      %p60 = scmp.ne.s32.totalorder %s52, %s55
      %p61 = scmp.eq.s32.totalorder %s28, 0
      %p62 = por %p60, %p61
      %p63 = scmp.ne.s32.totalorder %s52, %s55
      %p64 = scmp.eq.s32.totalorder %s33, 1
      %p65 = por %p63, %p64
      %p66 = scmp.ne.s32.totalorder %s55, %s56
      %p67 = scmp.eq.s32.totalorder %s33, 0
      %p68 = por %p66, %p67
      %p69 = scmp.ne.s32.totalorder %s55, %s56
      %p70 = scmp.eq.s32.totalorder %s34, 1
      %p71 = por %p69, %p70
      %p73 = scmp.ne.s32.totalorder %s56, %s72
      %p74 = scmp.eq.s32.totalorder %s34, 0
      %p75 = por %p73, %p74
      %s76 = ssub.s32 %s35, %s47
      %p77 = scmp.eq.s32.totalorder %s76, 0
      %s79 = sadd.s32 %s78, 1
      %s80 = scalar_select %p77, %s78, %s79
      %p83 = pneg %p77
      %p84 = scmp.eq.s32.totalorder %s28, 1
      %p85 = por %p83, %p84
      %p86 = scmp.ne.s32.totalorder %s78, %s81
      %p87 = scmp.eq.s32.totalorder %s28, 0
      %p88 = por %p86, %p87
      %p89 = scmp.ne.s32.totalorder %s78, %s81
      %p90 = scmp.eq.s32.totalorder %s33, 1
      %p91 = por %p89, %p90
      %p92 = scmp.ne.s32.totalorder %s81, %s82
      %p93 = scmp.eq.s32.totalorder %s33, 0
      %p94 = por %p92, %p93
      %p95 = scmp.ne.s32.totalorder %s81, %s82
      %p96 = scmp.eq.s32.totalorder %s34, 1
      %p97 = por %p95, %p96
      %p99 = scmp.ne.s32.totalorder %s82, %s98
      %p100 = scmp.eq.s32.totalorder %s34, 0
      %p101 = por %p99, %p100
      %s102 = ssub.s32 %s35, %s47
      %p103 = scmp.eq.s32.totalorder %s102, 0
      %s105 = sadd.s32 %s104, 1
      %s106 = scalar_select %p103, %s104, %s105
      %p109 = pneg %p103
      %p110 = scmp.eq.s32.totalorder %s28, 1
      %p111 = por %p109, %p110
      %p112 = scmp.ne.s32.totalorder %s104, %s107
      %p113 = scmp.eq.s32.totalorder %s28, 0
      %p114 = por %p112, %p113
      %p115 = scmp.ne.s32.totalorder %s104, %s107
      %p116 = scmp.eq.s32.totalorder %s33, 1
      %p117 = por %p115, %p116
      %p118 = scmp.ne.s32.totalorder %s107, %s108
      %p119 = scmp.eq.s32.totalorder %s33, 0
      %p120 = por %p118, %p119
      %p121 = scmp.ne.s32.totalorder %s107, %s108
      %p122 = scmp.eq.s32.totalorder %s34, 1
      %p123 = por %p121, %p122
      %p125 = scmp.ne.s32.totalorder %s108, %s124
      %p126 = scmp.eq.s32.totalorder %s34, 0
      %p127 = por %p125, %p126
      %s129 = sadd.s32 %s128, 1
      %p132 = scmp.eq.s32.totalorder %s28, 1
      %p133 = scmp.ne.s32.totalorder %s128, %s130
      %p134 = scmp.eq.s32.totalorder %s28, 0
      %p135 = por %p133, %p134
      %p136 = scmp.ne.s32.totalorder %s128, %s130
      %p137 = scmp.eq.s32.totalorder %s33, 1
      %p138 = por %p136, %p137
      %p139 = scmp.ne.s32.totalorder %s130, %s131
      %p140 = scmp.eq.s32.totalorder %s33, 0
      %p141 = por %p139, %p140
      %p142 = scmp.ne.s32.totalorder %s130, %s131
      %p143 = scmp.eq.s32.totalorder %s34, 1
      %p144 = por %p142, %p143
      %p146 = scmp.ne.s32.totalorder %s131, %s145
      %p147 = scmp.eq.s32.totalorder %s34, 0
      %p148 = por %p146, %p147
      %s150 = sadd.s32 %s149, 1
      %p153 = scmp.eq.s32.totalorder %s28, 1
      %p154 = scmp.ne.s32.totalorder %s149, %s151
      %p155 = scmp.eq.s32.totalorder %s28, 0
      %p156 = por %p154, %p155
      %p157 = scmp.ne.s32.totalorder %s149, %s151
      %p158 = scmp.eq.s32.totalorder %s33, 1
      %p159 = por %p157, %p158
      %p160 = scmp.ne.s32.totalorder %s151, %s152
      %p161 = scmp.eq.s32.totalorder %s33, 0
      %p162 = por %p160, %p161
      %p163 = scmp.ne.s32.totalorder %s151, %s152
      %p164 = scmp.eq.s32.totalorder %s34, 1
      %p165 = por %p163, %p164
      %p167 = scmp.ne.s32.totalorder %s152, %s166
      %p168 = scmp.eq.s32.totalorder %s34, 0
      %p169 = por %p167, %p168
      %s171 = sadd.s32 %s170, 1
      %p174 = scmp.eq.s32.totalorder %s28, 1
      %p175 = scmp.ne.s32.totalorder %s170, %s172
      %p176 = scmp.eq.s32.totalorder %s28, 0
      %p177 = por %p175, %p176
      %p178 = scmp.ne.s32.totalorder %s170, %s172
      %p179 = scmp.eq.s32.totalorder %s33, 1
      %p180 = por %p178, %p179
      %p181 = scmp.ne.s32.totalorder %s172, %s173
      %p182 = scmp.eq.s32.totalorder %s33, 0
      %p183 = por %p181, %p182
      %p184 = scmp.ne.s32.totalorder %s172, %s173
      %p185 = scmp.eq.s32.totalorder %s34, 1
      %p186 = por %p184, %p185
      %p188 = scmp.ne.s32.totalorder %s173, %s187
      %p189 = scmp.eq.s32.totalorder %s34, 0
      %p190 = por %p188, %p189
      %s192 = sadd.s32 %s191, 1
      %p195 = scmp.eq.s32.totalorder %s28, 1
      %p196 = scmp.ne.s32.totalorder %s191, %s193
      %p197 = scmp.eq.s32.totalorder %s28, 0
      %p198 = por %p196, %p197
      %p199 = scmp.ne.s32.totalorder %s191, %s193
      %p200 = scmp.eq.s32.totalorder %s33, 1
      %p201 = por %p199, %p200
      %p202 = scmp.ne.s32.totalorder %s193, %s194
      %p203 = scmp.eq.s32.totalorder %s33, 0
      %p204 = por %p202, %p203
      %p205 = scmp.ne.s32.totalorder %s193, %s194
      %p206 = scmp.eq.s32.totalorder %s34, 1
      %p207 = por %p205, %p206
      %p209 = scmp.ne.s32.totalorder %s194, %s208
      %p210 = scmp.eq.s32.totalorder %s34, 0
      %p211 = por %p209, %p210
      %s212 = ssub.s32 %s35, %s47
      %s213 = ssub.s32 %s36, %s43
      %s214 = sor.u32 %s212, %s213
      %p215 = scmp.eq.s32.totalorder %s214, 0
      %s217 = sadd.s32 %s216, 1
      %s218 = scalar_select %p215, %s216, %s217
      %p221 = pneg %p215
      %p222 = scmp.eq.s32.totalorder %s28, 1
      %p223 = por %p221, %p222
      %p224 = scmp.ne.s32.totalorder %s216, %s219
      %p225 = scmp.eq.s32.totalorder %s28, 0
      %p226 = por %p224, %p225
      %p227 = scmp.ne.s32.totalorder %s216, %s219
      %p228 = scmp.eq.s32.totalorder %s33, 1
      %p229 = por %p227, %p228
      %p230 = scmp.ne.s32.totalorder %s219, %s220
      %p231 = scmp.eq.s32.totalorder %s33, 0
      %p232 = por %p230, %p231
      %p233 = scmp.ne.s32.totalorder %s219, %s220
      %p234 = scmp.eq.s32.totalorder %s34, 1
      %p235 = por %p233, %p234
      %p237 = scmp.ne.s32.totalorder %s220, %s236
      %p238 = scmp.eq.s32.totalorder %s34, 0
      %p239 = por %p237, %p238
      %s240 = ssub.s32 %s35, %s47
      %s241 = ssub.s32 %s36, %s43
      %s242 = sor.u32 %s240, %s241
      %p243 = scmp.eq.s32.totalorder %s242, 0
      %s245 = sadd.s32 %s244, 1
      %s246 = scalar_select %p243, %s244, %s245
      %p249 = pneg %p243
      %p250 = scmp.eq.s32.totalorder %s28, 1
      %p251 = por %p249, %p250
      %p252 = scmp.ne.s32.totalorder %s244, %s247
      %p253 = scmp.eq.s32.totalorder %s28, 0
      %p254 = por %p252, %p253
      %p255 = scmp.ne.s32.totalorder %s244, %s247
      %p256 = scmp.eq.s32.totalorder %s33, 1
      %p257 = por %p255, %p256
      %p258 = scmp.ne.s32.totalorder %s247, %s248
      %p259 = scmp.eq.s32.totalorder %s33, 0
      %p260 = por %p258, %p259
      %p261 = scmp.ne.s32.totalorder %s247, %s248
      %p262 = scmp.eq.s32.totalorder %s34, 1
      %p263 = por %p261, %p262
      %p265 = scmp.ne.s32.totalorder %s248, %s264
      %p266 = scmp.eq.s32.totalorder %s34, 0
      %p267 = por %p265, %p266
      %p268 = scmp.le.s32.totalorder 1, %s28
      %p269 = scmp.lt.s32.totalorder %s28, 3
      %p270 = pnand %p268, %p269
      %p271 = pneg %p270
      // Predicated region
      $region9: #{tpu_custom_call.1} parent=5 // pred_check
        _
      $region10: #{tpu_custom_call.1} parent=5 // pred_check_branch
        %273 = sbr.rel (%p270) target = $region12
      $region11: #{tpu_custom_call.1} parent=5 // pred_region
        %s274 = ssub.s32 %s28, 1
        // Predicated region
        $region13: #{tpu_custom_call.1} parent=11 // pred_check
          %p275 = pneg %p141
        $region14: #{tpu_custom_call.1} parent=11 // pred_check_branch
          %277 = sbr.rel (%p275) target = $region16
        $region15: #{tpu_custom_call.1} parent=11 // pred_region
          _
        $region16: #{tpu_custom_call.1} parent=11 // pred_fallthru
          _
        // Predicated region
        $region17: #{tpu_custom_call.1} parent=11 // pred_check
          %p278 = pneg %p162
        $region18: #{tpu_custom_call.1} parent=11 // pred_check_branch
          %280 = sbr.rel (%p278) target = $region20
        $region19: #{tpu_custom_call.1} parent=11 // pred_region
          _
        $region20: #{tpu_custom_call.1} parent=11 // pred_fallthru
          _
        // Predicated region
        $region21: #{tpu_custom_call.1} parent=11 // pred_check
          %p281 = pneg %p183
        $region22: #{tpu_custom_call.1} parent=11 // pred_check_branch
          %283 = sbr.rel (%p281) target = $region24
        $region23: #{tpu_custom_call.1} parent=11 // pred_region
          %s285 = ssub.s32 1024, 1024
          %286 = vsyncadd [#allocation9], %s285
          %s287 = sshll.u32 [#allocation8], 4
          %s288 = int_to_ptr.vmem [resolvable:$true] %s287
          %293 = dma.hbm_to_vmem [thread:$0]  %s5, 1024, %s288, [#allocation9], 128, 128, 8
        $region24: #{tpu_custom_call.1} parent=11 // pred_fallthru
          _
        // Predicated region
        $region25: #{tpu_custom_call.1} parent=11 // pred_check
          %p294 = pneg %p204
        $region26: #{tpu_custom_call.1} parent=11 // pred_check_branch
          %296 = sbr.rel (%p294) target = $region28
        $region27: #{tpu_custom_call.1} parent=11 // pred_region
          _
        $region28: #{tpu_custom_call.1} parent=11 // pred_fallthru
          _
      $region12: #{tpu_custom_call.1} parent=5 // pred_fallthru
        _
      %p297 = scmp.lt.s32.totalorder %s28, 2
      // Predicated region
      $region29: #{tpu_custom_call.1} parent=5 // pred_check
        %p298 = pneg %p297
      $region30: #{tpu_custom_call.1} parent=5 // pred_check_branch
        %300 = sbr.rel (%p298) target = $region32
      $region31: #{tpu_custom_call.1} parent=5 // pred_region
        // Predicated region
        $region33: #{tpu_custom_call.1} parent=31 // pred_check
          %p301 = pneg %p62
        $region34: #{tpu_custom_call.1} parent=31 // pred_check_branch
          %303 = sbr.rel (%p301) target = $region36
        $region35: #{tpu_custom_call.1} parent=31 // pred_region
          %s304 = sand.u32 %s52, 1
          %s305 = scalar_lea.sflag [#allocation3], %s304
          %s306 = sand.u32 %s52, 1
          %s307 = smul.addr %s306, 8
          %s308 = scalar_lea.vmem [#allocation2], %s307
          %s310 = ssub.s32 128, 128
          %311 = vsyncadd %s305, %s310
          %s312 = sadd.s32 %s36, %s35
          %s313 = smul.addr %s312, 128
          %s314 = scalar_lea.hbm %s0, %s313
          %s316 = sshll.u32 %s308, 4
          %s317 = int_to_ptr.vmem [resolvable:$true] %s316
          %319 = dma.hbm_to_vmem [thread:$0]  %s314, 128, %s317, %s305
        $region36: #{tpu_custom_call.1} parent=31 // pred_fallthru
          _
        // Predicated region
        $region37: #{tpu_custom_call.1} parent=31 // pred_check
          %p320 = pneg %p88
        $region38: #{tpu_custom_call.1} parent=31 // pred_check_branch
          %322 = sbr.rel (%p320) target = $region40
        $region39: #{tpu_custom_call.1} parent=31 // pred_region
          %s323 = sand.u32 %s28, 1
          %s324 = scalar_lea.sflag [#allocation6], %s323
          %s325 = sand.u32 %s78, 1
          %s326 = smul.addr %s325, 8
          %s327 = scalar_lea.vmem [#allocation5], %s326
          %s329 = ssub.s32 128, 128
          %330 = vsyncadd %s324, %s329
          %s331 = smul.addr %s35, 128
          %s332 = scalar_lea.hbm %s1, %s331
          %s334 = sshll.u32 %s327, 4
          %s335 = int_to_ptr.vmem [resolvable:$true] %s334
          %337 = dma.hbm_to_vmem [thread:$0]  %s332, 128, %s335, %s324
        $region40: #{tpu_custom_call.1} parent=31 // pred_fallthru
          _
        // Predicated region
        $region41: #{tpu_custom_call.1} parent=31 // pred_check
          %p338 = pneg %p114
        $region42: #{tpu_custom_call.1} parent=31 // pred_check_branch
          %340 = sbr.rel (%p338) target = $region44
        $region43: #{tpu_custom_call.1} parent=31 // pred_region
          %s341 = sand.u32 %s28, 1
          %s342 = scalar_lea.sflag [#allocation6], %s341
          %s343 = sand.u32 %s104, 1
          %s344 = smul.addr %s343, 8
          %s345 = scalar_lea.vmem [#allocation7], %s344
          %s347 = ssub.s32 128, 128
          %348 = vsyncadd %s342, %s347
          %s349 = smul.addr %s35, 128
          %s350 = scalar_lea.hbm %s2, %s349
          %s352 = sshll.u32 %s345, 4
          %s353 = int_to_ptr.vmem [resolvable:$true] %s352
          %355 = dma.hbm_to_vmem [thread:$0]  %s350, 128, %s353, %s342
        $region44: #{tpu_custom_call.1} parent=31 // pred_fallthru
          _
      $region32: #{tpu_custom_call.1} parent=5 // pred_fallthru
        _
      %p356 = scmp.le.s32.totalorder 1, %s28
      %p357 = scmp.lt.s32.totalorder %s28, 3
      %p358 = pnand %p356, %p357
      %p359 = pneg %p358
      // Predicated region
      $region45: #{tpu_custom_call.1} parent=5 // pred_check
        _
      $region46: #{tpu_custom_call.1} parent=5 // pred_check_branch
        %361 = sbr.rel (%p358) target = $region48
      $region47: #{tpu_custom_call.1} parent=5 // pred_region
        %s362 = ssub.s32 %s28, 1
        %s363 = sand.u32 %s55, 1
        %s364 = scalar_lea.sflag [#allocation3], %s363
        %s365 = sand.u32 %s55, 1
        %s366 = smul.addr %s365, 8
        %s367 = scalar_lea.vmem [#allocation2], %s366
        // Predicated region
        $region49: #{tpu_custom_call.1} parent=47 // pred_check
          %p368 = pneg %p68
        $region50: #{tpu_custom_call.1} parent=47 // pred_check_branch
          %370 = sbr.rel (%p368) target = $region52
        $region51: #{tpu_custom_call.1} parent=47 // pred_region
          %371 = dma.done %s364, 128
        $region52: #{tpu_custom_call.1} parent=47 // pred_fallthru
          _
        %s372 = sand.u32 %s33, 1
        %s373 = scalar_lea.sflag [#allocation6], %s372
        %s374 = sand.u32 %s81, 1
        %s375 = smul.addr %s374, 8
        %s376 = scalar_lea.vmem [#allocation5], %s375
        // Predicated region
        $region53: #{tpu_custom_call.1} parent=47 // pred_check
          %p377 = pneg %p94
        $region54: #{tpu_custom_call.1} parent=47 // pred_check_branch
          %379 = sbr.rel (%p377) target = $region56
        $region55: #{tpu_custom_call.1} parent=47 // pred_region
          %380 = dma.done %s373, 128
        $region56: #{tpu_custom_call.1} parent=47 // pred_fallthru
          _
        %s381 = sand.u32 %s33, 1
        %s382 = scalar_lea.sflag [#allocation6], %s381
        %s383 = sand.u32 %s107, 1
        %s384 = smul.addr %s383, 8
        %s385 = scalar_lea.vmem [#allocation7], %s384
        // Predicated region
        $region57: #{tpu_custom_call.1} parent=47 // pred_check
          %p386 = pneg %p120
        $region58: #{tpu_custom_call.1} parent=47 // pred_check_branch
          %388 = sbr.rel (%p386) target = $region60
        $region59: #{tpu_custom_call.1} parent=47 // pred_region
          %389 = dma.done %s382, 128
        $region60: #{tpu_custom_call.1} parent=47 // pred_fallthru
          _
        // Predicated region
        $region61: #{tpu_custom_call.1} parent=47 // pred_check
          %p390 = pneg %p183
        $region62: #{tpu_custom_call.1} parent=47 // pred_check_branch
          %392 = sbr.rel (%p390) target = $region64
        $region63: #{tpu_custom_call.1} parent=47 // pred_region
          %393 = dma.done [#allocation9], 1024
        $region64: #{tpu_custom_call.1} parent=47 // pred_fallthru
          _
        %s394 = sand.u32 %s55, 1
        %s395 = scalar_lea.sflag [#allocation3], %s394
        %s396 = sand.u32 %s55, 1
        %s397 = smul.addr %s396, 8
        %s398 = scalar_lea.vmem [#allocation2], %s397
        %p399 = pneg %p68
        %p400 = pneg %p65
        %s401 = sand.u32 %s33, 1
        %s402 = scalar_lea.sflag [#allocation6], %s401
        %s403 = sand.u32 %s81, 1
        %s404 = smul.addr %s403, 8
        %s405 = scalar_lea.vmem [#allocation5], %s404
        %p406 = pneg %p94
        %p407 = pneg %p91
        %s408 = sand.u32 %s33, 1
        %s409 = scalar_lea.sflag [#allocation6], %s408
        %s410 = sand.u32 %s107, 1
        %s411 = smul.addr %s410, 8
        %s412 = scalar_lea.vmem [#allocation7], %s411
        %p413 = pneg %p120
        %p414 = pneg %p117
        %p415 = pneg %p141
        %p416 = pneg %p138
        %p417 = pneg %p162
        %p418 = pneg %p159
        %p419 = pneg %p183
        %p420 = pneg %p180
        %p421 = pneg %p204
        %p422 = pneg %p201
        %p423 = pneg %p232
        %p424 = pneg %p229
        %s425 = sand.u32 %s219, 1
        %s426 = scalar_lea.sflag [#allocation4], %s425
        %s427 = sand.u32 %s219, 1
        %s428 = smul.addr %s427, 8
        %s429 = scalar_lea.vmem [#allocation10], %s428
        %p430 = pneg %p260
        %p431 = pneg %p257
        %s432 = sand.u32 %s247, 1
        %s433 = scalar_lea.sflag [#allocation12], %s432
        %s434 = sand.u32 %s247, 1
        %s435 = smul.addr %s434, 64
        %s436 = scalar_lea.vmem [#allocation11], %s435
        %v437 = vld [vmem:[%s367] sm:$0xff]
        %v438 = vld [vmem:[%s376] sm:$0xff]
        %v439 = vld [vmem:[%s385] sm:$0xff]
        %v440 = vld [vmem:[%s3] sm:$0xff]
        %v441 = vld [vmem:[%s3 + $0x8] sm:$0xff]
        %v442 = vld [vmem:[%s3 + $0x10] sm:$0xff]
        %v443 = vld [vmem:[%s3 + $0x18] sm:$0xff]
        %v444 = vld [vmem:[%s3 + $0x20] sm:$0xff]
        %v445 = vld [vmem:[%s3 + $0x28] sm:$0xff]
        %v446 = vld [vmem:[%s3 + $0x30] sm:$0xff]
        %v447 = vld [vmem:[%s3 + $0x38] sm:$0xff]
        %s448 = scalar_lea.vmem %s3, 64
        %v449 = vld [vmem:[%s448] sm:$0xff]
        %v450 = vld [vmem:[%s448 + $0x8] sm:$0xff]
        %v451 = vld [vmem:[%s448 + $0x10] sm:$0xff]
        %v452 = vld [vmem:[%s448 + $0x18] sm:$0xff]
        %v453 = vld [vmem:[%s448 + $0x20] sm:$0xff]
        %v454 = vld [vmem:[%s448 + $0x28] sm:$0xff]
        %v455 = vld [vmem:[%s448 + $0x30] sm:$0xff]
        %v456 = vld [vmem:[%s448 + $0x38] sm:$0xff]
        %s457 = scalar_lea.vmem %s3, 128
        %v458 = vld [vmem:[%s457] sm:$0xff]
        %v459 = vld [vmem:[%s457 + $0x8] sm:$0xff]
        %v460 = vld [vmem:[%s457 + $0x10] sm:$0xff]
        %v461 = vld [vmem:[%s457 + $0x18] sm:$0xff]
        %v462 = vld [vmem:[%s457 + $0x20] sm:$0xff]
        %v463 = vld [vmem:[%s457 + $0x28] sm:$0xff]
        %v464 = vld [vmem:[%s457 + $0x30] sm:$0xff]
        %v465 = vld [vmem:[%s457 + $0x38] sm:$0xff]
        %v466 = vld [vmem:[%s4] sm:$0xff]
        %v467 = vld [vmem:[%s4 + $0x8] sm:$0xff]
        %v468 = vld [vmem:[%s4 + $0x10] sm:$0xff]
        %v469 = vld [vmem:[%s4 + $0x18] sm:$0xff]
        %v470 = vld [vmem:[%s4 + $0x20] sm:$0xff]
        %v471 = vld [vmem:[%s4 + $0x28] sm:$0xff]
        %v472 = vld [vmem:[%s4 + $0x30] sm:$0xff]
        %v473 = vld [vmem:[%s4 + $0x38] sm:$0xff]
        %s474 = scalar_lea.vmem %s4, 64
        %v475 = vld [vmem:[%s474] sm:$0xff]
        %v476 = vld [vmem:[%s474 + $0x8] sm:$0xff]
        %v477 = vld [vmem:[%s474 + $0x10] sm:$0xff]
        %v478 = vld [vmem:[%s474 + $0x18] sm:$0xff]
        %v479 = vld [vmem:[%s474 + $0x20] sm:$0xff]
        %v480 = vld [vmem:[%s474 + $0x28] sm:$0xff]
        %v481 = vld [vmem:[%s474 + $0x30] sm:$0xff]
        %v482 = vld [vmem:[%s474 + $0x38] sm:$0xff]
        %s483 = scalar_lea.vmem %s4, 128
        %v484 = vld [vmem:[%s483] sm:$0xff]
        %v485 = vld [vmem:[%s483 + $0x8] sm:$0xff]
        %v486 = vld [vmem:[%s483 + $0x10] sm:$0xff]
        %v487 = vld [vmem:[%s483 + $0x18] sm:$0xff]
        %v488 = vld [vmem:[%s483 + $0x20] sm:$0xff]
        %v489 = vld [vmem:[%s483 + $0x28] sm:$0xff]
        %v490 = vld [vmem:[%s483 + $0x30] sm:$0xff]
        %v491 = vld [vmem:[%s483 + $0x38] sm:$0xff]
        %493 = vset.pattern.permute.xlu0 0
        %494 = vperm.xlu0 %493, %v466
        %v495 = vpop.permute.xlu0 %494
        %498 = vset.pattern.permute.xlu0 0
        %499 = vperm.xlu0 %498, %v467
        %v500 = vpop.permute.xlu0 %499
        %503 = vset.pattern.permute.xlu0 0
        %504 = vperm.xlu0 %503, %v468
        %v505 = vpop.permute.xlu0 %504
        %508 = vset.pattern.permute.xlu0 0
        %509 = vperm.xlu0 %508, %v469
        %v510 = vpop.permute.xlu0 %509
        %513 = vset.pattern.permute.xlu0 0
        %514 = vperm.xlu0 %513, %v470
        %v515 = vpop.permute.xlu0 %514
        %518 = vset.pattern.permute.xlu0 0
        %519 = vperm.xlu0 %518, %v471
        %v520 = vpop.permute.xlu0 %519
        %523 = vset.pattern.permute.xlu0 0
        %524 = vperm.xlu0 %523, %v472
        %v525 = vpop.permute.xlu0 %524
        %528 = vset.pattern.permute.xlu0 0
        %529 = vperm.xlu0 %528, %v473
        %v530 = vpop.permute.xlu0 %529
        %vm532 = vcmask 523264
        %v534 = vsel %vm532, %v440, 0
        %v537 = vsel %vm532, %v441, 0
        %v540 = vsel %vm532, %v442, 0
        %v543 = vsel %vm532, %v443, 0
        %v546 = vsel %vm532, %v444, 0
        %v549 = vsel %vm532, %v445, 0
        %v552 = vsel %vm532, %v446, 0
        %v555 = vsel %vm532, %v447, 0
        %v558 = vsel %vm532, %v437, 0
        %560 = vmatprep.subr.mxu0 0.0
        %561 = vmatpush1.xpose.msra.mxu0 %v558
        %562 = vmatprep.subr.mxu0 0.0
        %563 = vmatpush1.xpose.msra.mxu0 0.0
        %564 = vmatprep.subr.mxu0 0.0
        %565 = vmatpush1.xpose.msra.mxu0 0.0
        %566 = vmatprep.subr.mxu0 0.0
        %567 = vmatpush1.xpose.msra.mxu0 0.0
        %568 = vmatprep.subr.mxu0 0.0
        %569 = vmatpush1.xpose.msra.mxu0 0.0
        %570 = vmatprep.subr.mxu0 0.0
        %571 = vmatpush1.xpose.msra.mxu0 0.0
        %572 = vmatprep.subr.mxu0 0.0
        %573 = vmatpush1.xpose.msra.mxu0 0.0
        %574 = vmatprep.subr.mxu0 0.0
        %575 = vmatpush1.xpose.msra.mxu0 0.0
        %576 = vmatprep.subr.mxu0 0.0
        %577 = vmatpush1.xpose.msra.mxu0 0.0
        %578 = vmatprep.subr.mxu0 0.0
        %579 = vmatpush1.xpose.msra.mxu0 0.0
        %580 = vmatprep.subr.mxu0 0.0
        %581 = vmatpush1.xpose.msra.mxu0 0.0
        %582 = vmatprep.subr.mxu0 0.0
        %583 = vmatpush1.xpose.msra.mxu0 0.0
        %584 = vmatprep.subr.mxu0 0.0
        %585 = vmatpush1.xpose.msra.mxu0 0.0
        %586 = vmatprep.subr.mxu0 0.0
        %587 = vmatpush1.xpose.msra.mxu0 0.0
        %588 = vmatprep.subr.mxu0 0.0
        %589 = vmatpush1.xpose.msra.mxu0 0.0
        %590 = vmatprep.subr.mxu0 0.0
        %591 = vmatpush1.xpose.msra.mxu0 0.0
        %592 = vmatprep.subr.mxu0 0.0
        %593 = vmatpush1.xpose.msra.mxu0 0.0
        %594 = vmatprep.subr.mxu0 0.0
        %595 = vmatpush1.xpose.msra.mxu0 0.0
        %596 = vmatprep.subr.mxu0 0.0
        %597 = vmatpush1.xpose.msra.mxu0 0.0
        %598 = vmatprep.subr.mxu0 0.0
        %599 = vmatpush1.xpose.msra.mxu0 0.0
        %600 = vmatprep.subr.mxu0 0.0
        %601 = vmatpush1.xpose.msra.mxu0 0.0
        %602 = vmatprep.subr.mxu0 0.0
        %603 = vmatpush1.xpose.msra.mxu0 0.0
        %604 = vmatprep.subr.mxu0 0.0
        %605 = vmatpush1.xpose.msra.mxu0 0.0
        %606 = vmatprep.subr.mxu0 0.0
        %607 = vmatpush1.xpose.msra.mxu0 0.0
        %608 = vmatprep.subr.mxu0 0.0
        %609 = vmatpush1.xpose.msra.mxu0 0.0
        %610 = vmatprep.subr.mxu0 0.0
        %611 = vmatpush1.xpose.msra.mxu0 0.0
        %612 = vmatprep.subr.mxu0 0.0
        %613 = vmatpush1.xpose.msra.mxu0 0.0
        %614 = vmatprep.subr.mxu0 0.0
        %615 = vmatpush1.xpose.msra.mxu0 0.0
        %616 = vmatprep.subr.mxu0 0.0
        %617 = vmatpush1.xpose.msra.mxu0 0.0
        %618 = vmatprep.subr.mxu0 0.0
        %619 = vmatpush1.xpose.msra.mxu0 0.0
        %620 = vmatprep.subr.mxu0 0.0
        %621 = vmatpush1.xpose.msra.mxu0 0.0
        %622 = vmatprep.subr.mxu0 0.0
        %623 = vmatpush1.xpose.msra.mxu0 0.0
        %624 = vmatprep.mubr.f32.mxu0 0.0
        %625 = vmatmul.mubr.f32.gmra.mrb[0].mxu0 %v534
        %v626 = vpop.f32.mrb[0].mxu0
        %v627 = vadd.f32 %v495, %v626
        %v628 = vpop.f32.mrb[0].mxu0
        %629 = vmatprep.mubr.f32.mxu0 0.0
        %630 = vmatmul.mubr.f32.gmra.mrb[0].mxu0 %v537
        %v631 = vpop.f32.mrb[0].mxu0
        %v632 = vadd.f32 %v500, %v631
        %v633 = vpop.f32.mrb[0].mxu0
        %634 = vmatprep.mubr.f32.mxu0 0.0
        %635 = vmatmul.mubr.f32.gmra.mrb[0].mxu0 %v540
        %v636 = vpop.f32.mrb[0].mxu0
        %v637 = vadd.f32 %v505, %v636
        %v638 = vpop.f32.mrb[0].mxu0
        %639 = vmatprep.mubr.f32.mxu0 0.0
        %640 = vmatmul.mubr.f32.gmra.mrb[0].mxu0 %v543
        %v641 = vpop.f32.mrb[0].mxu0
        %v642 = vadd.f32 %v510, %v641
        %v643 = vpop.f32.mrb[0].mxu0
        %644 = vmatprep.mubr.f32.mxu0 0.0
        %645 = vmatmul.mubr.f32.gmra.mrb[0].mxu0 %v546
        %v646 = vpop.f32.mrb[0].mxu0
        %v647 = vadd.f32 %v515, %v646
        %v648 = vpop.f32.mrb[0].mxu0
        %649 = vmatprep.mubr.f32.mxu0 0.0
        %650 = vmatmul.mubr.f32.gmra.mrb[0].mxu0 %v549
        %v651 = vpop.f32.mrb[0].mxu0
        %v652 = vadd.f32 %v520, %v651
        %v653 = vpop.f32.mrb[0].mxu0
        %654 = vmatprep.mubr.f32.mxu0 0.0
        %655 = vmatmul.mubr.f32.gmra.mrb[0].mxu0 %v552
        %v656 = vpop.f32.mrb[0].mxu0
        %v657 = vadd.f32 %v525, %v656
        %v658 = vpop.f32.mrb[0].mxu0
        %659 = vmatprep.mubr.f32.mxu0 0.0
        %660 = vmatmul.mubr.f32.gmra.mrb[0].mxu0 %v555
        %v661 = vpop.f32.mrb[0].mxu0
        %v662 = vadd.f32 %v530, %v661
        %v663 = vpop.f32.mrb[0].mxu0
        %664 = vdwg.mxu0
        %666 = vset.pattern.permute.xlu0 0
        %667 = vperm.xlu0 %666, %v475
        %v668 = vpop.permute.xlu0 %667
        %671 = vset.pattern.permute.xlu0 0
        %672 = vperm.xlu0 %671, %v476
        %v673 = vpop.permute.xlu0 %672
        %676 = vset.pattern.permute.xlu0 0
        %677 = vperm.xlu0 %676, %v477
        %v678 = vpop.permute.xlu0 %677
        %681 = vset.pattern.permute.xlu0 0
        %682 = vperm.xlu0 %681, %v478
        %v683 = vpop.permute.xlu0 %682
        %686 = vset.pattern.permute.xlu0 0
        %687 = vperm.xlu0 %686, %v479
        %v688 = vpop.permute.xlu0 %687
        %691 = vset.pattern.permute.xlu0 0
        %692 = vperm.xlu0 %691, %v480
        %v693 = vpop.permute.xlu0 %692
        %696 = vset.pattern.permute.xlu0 0
        %697 = vperm.xlu0 %696, %v481
        %v698 = vpop.permute.xlu0 %697
        %701 = vset.pattern.permute.xlu0 0
        %702 = vperm.xlu0 %701, %v482
        %v703 = vpop.permute.xlu0 %702
        %v706 = vsel %vm532, %v449, 0
        %v709 = vsel %vm532, %v450, 0
        %v712 = vsel %vm532, %v451, 0
        %v715 = vsel %vm532, %v452, 0
        %v718 = vsel %vm532, %v453, 0
        %v721 = vsel %vm532, %v454, 0
        %v724 = vsel %vm532, %v455, 0
        %v727 = vsel %vm532, %v456, 0
        %v730 = vsel %vm532, %v438, 0
        %732 = vmatprep.subr.mxu0 0.0
        %733 = vmatpush1.xpose.msra.mxu0 %v730
        %734 = vmatprep.subr.mxu0 0.0
        %735 = vmatpush1.xpose.msra.mxu0 0.0
        %736 = vmatprep.subr.mxu0 0.0
        %737 = vmatpush1.xpose.msra.mxu0 0.0
        %738 = vmatprep.subr.mxu0 0.0
        %739 = vmatpush1.xpose.msra.mxu0 0.0
        %740 = vmatprep.subr.mxu0 0.0
        %741 = vmatpush1.xpose.msra.mxu0 0.0
        %742 = vmatprep.subr.mxu0 0.0
        %743 = vmatpush1.xpose.msra.mxu0 0.0
        %744 = vmatprep.subr.mxu0 0.0
        %745 = vmatpush1.xpose.msra.mxu0 0.0
        %746 = vmatprep.subr.mxu0 0.0
        %747 = vmatpush1.xpose.msra.mxu0 0.0
        %748 = vmatprep.subr.mxu0 0.0
        %749 = vmatpush1.xpose.msra.mxu0 0.0
        %750 = vmatprep.subr.mxu0 0.0
        %751 = vmatpush1.xpose.msra.mxu0 0.0
        %752 = vmatprep.subr.mxu0 0.0
        %753 = vmatpush1.xpose.msra.mxu0 0.0
        %754 = vmatprep.subr.mxu0 0.0
        %755 = vmatpush1.xpose.msra.mxu0 0.0
        %756 = vmatprep.subr.mxu0 0.0
        %757 = vmatpush1.xpose.msra.mxu0 0.0
        %758 = vmatprep.subr.mxu0 0.0
        %759 = vmatpush1.xpose.msra.mxu0 0.0
        %760 = vmatprep.subr.mxu0 0.0
        %761 = vmatpush1.xpose.msra.mxu0 0.0
        %762 = vmatprep.subr.mxu0 0.0
        %763 = vmatpush1.xpose.msra.mxu0 0.0
        %764 = vmatprep.subr.mxu0 0.0
        %765 = vmatpush1.xpose.msra.mxu0 0.0
        %766 = vmatprep.subr.mxu0 0.0
        %767 = vmatpush1.xpose.msra.mxu0 0.0
        %768 = vmatprep.subr.mxu0 0.0
        %769 = vmatpush1.xpose.msra.mxu0 0.0
        %770 = vmatprep.subr.mxu0 0.0
        %771 = vmatpush1.xpose.msra.mxu0 0.0
        %772 = vmatprep.subr.mxu0 0.0
        %773 = vmatpush1.xpose.msra.mxu0 0.0
        %774 = vmatprep.subr.mxu0 0.0
        %775 = vmatpush1.xpose.msra.mxu0 0.0
        %776 = vmatprep.subr.mxu0 0.0
        %777 = vmatpush1.xpose.msra.mxu0 0.0
        %778 = vmatprep.subr.mxu0 0.0
        %779 = vmatpush1.xpose.msra.mxu0 0.0
        %780 = vmatprep.subr.mxu0 0.0
        %781 = vmatpush1.xpose.msra.mxu0 0.0
        %782 = vmatprep.subr.mxu0 0.0
        %783 = vmatpush1.xpose.msra.mxu0 0.0
        %784 = vmatprep.subr.mxu0 0.0
        %785 = vmatpush1.xpose.msra.mxu0 0.0
        %786 = vmatprep.subr.mxu0 0.0
        %787 = vmatpush1.xpose.msra.mxu0 0.0
        %788 = vmatprep.subr.mxu0 0.0
        %789 = vmatpush1.xpose.msra.mxu0 0.0
        %790 = vmatprep.subr.mxu0 0.0
        %791 = vmatpush1.xpose.msra.mxu0 0.0
        %792 = vmatprep.subr.mxu0 0.0
        %793 = vmatpush1.xpose.msra.mxu0 0.0
        %794 = vmatprep.subr.mxu0 0.0
        %795 = vmatpush1.xpose.msra.mxu0 0.0
        %796 = vmatprep.mubr.f32.mxu0 0.0
        %797 = vmatmul.mubr.f32.gmra.mrb[0].mxu0 %v706
        %v798 = vpop.f32.mrb[0].mxu0
        %v799 = vadd.f32 %v668, %v798
        %v800 = vpop.f32.mrb[0].mxu0
        %801 = vmatprep.mubr.f32.mxu0 0.0
        %802 = vmatmul.mubr.f32.gmra.mrb[0].mxu0 %v709
        %v803 = vpop.f32.mrb[0].mxu0
        %v804 = vadd.f32 %v673, %v803
        %v805 = vpop.f32.mrb[0].mxu0
        %806 = vmatprep.mubr.f32.mxu0 0.0
        %807 = vmatmul.mubr.f32.gmra.mrb[0].mxu0 %v712
        %v808 = vpop.f32.mrb[0].mxu0
        %v809 = vadd.f32 %v678, %v808
        %v810 = vpop.f32.mrb[0].mxu0
        %811 = vmatprep.mubr.f32.mxu0 0.0
        %812 = vmatmul.mubr.f32.gmra.mrb[0].mxu0 %v715
        %v813 = vpop.f32.mrb[0].mxu0
        %v814 = vadd.f32 %v683, %v813
        %v815 = vpop.f32.mrb[0].mxu0
        %816 = vmatprep.mubr.f32.mxu0 0.0
        %817 = vmatmul.mubr.f32.gmra.mrb[0].mxu0 %v718
        %v818 = vpop.f32.mrb[0].mxu0
        %v819 = vadd.f32 %v688, %v818
        %v820 = vpop.f32.mrb[0].mxu0
        %821 = vmatprep.mubr.f32.mxu0 0.0
        %822 = vmatmul.mubr.f32.gmra.mrb[0].mxu0 %v721
        %v823 = vpop.f32.mrb[0].mxu0
        %v824 = vadd.f32 %v693, %v823
        %v825 = vpop.f32.mrb[0].mxu0
        %826 = vmatprep.mubr.f32.mxu0 0.0
        %827 = vmatmul.mubr.f32.gmra.mrb[0].mxu0 %v724
        %v828 = vpop.f32.mrb[0].mxu0
        %v829 = vadd.f32 %v698, %v828
        %v830 = vpop.f32.mrb[0].mxu0
        %831 = vmatprep.mubr.f32.mxu0 0.0
        %832 = vmatmul.mubr.f32.gmra.mrb[0].mxu0 %v727
        %v833 = vpop.f32.mrb[0].mxu0
        %v834 = vadd.f32 %v703, %v833
        %v835 = vpop.f32.mrb[0].mxu0
        %836 = vdwg.mxu0
        %838 = vset.pattern.permute.xlu0 0
        %839 = vperm.xlu0 %838, %v484
        %v840 = vpop.permute.xlu0 %839
        %843 = vset.pattern.permute.xlu0 0
        %844 = vperm.xlu0 %843, %v485
        %v845 = vpop.permute.xlu0 %844
        %848 = vset.pattern.permute.xlu0 0
        %849 = vperm.xlu0 %848, %v486
        %v850 = vpop.permute.xlu0 %849
        %853 = vset.pattern.permute.xlu0 0
        %854 = vperm.xlu0 %853, %v487
        %v855 = vpop.permute.xlu0 %854
        %858 = vset.pattern.permute.xlu0 0
        %859 = vperm.xlu0 %858, %v488
        %v860 = vpop.permute.xlu0 %859
        %863 = vset.pattern.permute.xlu0 0
        %864 = vperm.xlu0 %863, %v489
        %v865 = vpop.permute.xlu0 %864
        %868 = vset.pattern.permute.xlu0 0
        %869 = vperm.xlu0 %868, %v490
        %v870 = vpop.permute.xlu0 %869
        %873 = vset.pattern.permute.xlu0 0
        %874 = vperm.xlu0 %873, %v491
        %v875 = vpop.permute.xlu0 %874
        %v878 = vsel %vm532, %v458, 0
        %v881 = vsel %vm532, %v459, 0
        %v884 = vsel %vm532, %v460, 0
        %v887 = vsel %vm532, %v461, 0
        %v890 = vsel %vm532, %v462, 0
        %v893 = vsel %vm532, %v463, 0
        %v896 = vsel %vm532, %v464, 0
        %v899 = vsel %vm532, %v465, 0
        %v902 = vsel %vm532, %v439, 0
        %904 = vmatprep.subr.mxu0 0.0
        %905 = vmatpush1.xpose.msra.mxu0 %v902
        %906 = vmatprep.subr.mxu0 0.0
        %907 = vmatpush1.xpose.msra.mxu0 0.0
        %908 = vmatprep.subr.mxu0 0.0
        %909 = vmatpush1.xpose.msra.mxu0 0.0
        %910 = vmatprep.subr.mxu0 0.0
        %911 = vmatpush1.xpose.msra.mxu0 0.0
        %912 = vmatprep.subr.mxu0 0.0
        %913 = vmatpush1.xpose.msra.mxu0 0.0
        %914 = vmatprep.subr.mxu0 0.0
        %915 = vmatpush1.xpose.msra.mxu0 0.0
        %916 = vmatprep.subr.mxu0 0.0
        %917 = vmatpush1.xpose.msra.mxu0 0.0
        %918 = vmatprep.subr.mxu0 0.0
        %919 = vmatpush1.xpose.msra.mxu0 0.0
        %920 = vmatprep.subr.mxu0 0.0
        %921 = vmatpush1.xpose.msra.mxu0 0.0
        %922 = vmatprep.subr.mxu0 0.0
        %923 = vmatpush1.xpose.msra.mxu0 0.0
        %924 = vmatprep.subr.mxu0 0.0
        %925 = vmatpush1.xpose.msra.mxu0 0.0
        %926 = vmatprep.subr.mxu0 0.0
        %927 = vmatpush1.xpose.msra.mxu0 0.0
        %928 = vmatprep.subr.mxu0 0.0
        %929 = vmatpush1.xpose.msra.mxu0 0.0
        %930 = vmatprep.subr.mxu0 0.0
        %931 = vmatpush1.xpose.msra.mxu0 0.0
        %932 = vmatprep.subr.mxu0 0.0
        %933 = vmatpush1.xpose.msra.mxu0 0.0
        %934 = vmatprep.subr.mxu0 0.0
        %935 = vmatpush1.xpose.msra.mxu0 0.0
        %936 = vmatprep.subr.mxu0 0.0
        %937 = vmatpush1.xpose.msra.mxu0 0.0
        %938 = vmatprep.subr.mxu0 0.0
        %939 = vmatpush1.xpose.msra.mxu0 0.0
        %940 = vmatprep.subr.mxu0 0.0
        %941 = vmatpush1.xpose.msra.mxu0 0.0
        %942 = vmatprep.subr.mxu0 0.0
        %943 = vmatpush1.xpose.msra.mxu0 0.0
        %944 = vmatprep.subr.mxu0 0.0
        %945 = vmatpush1.xpose.msra.mxu0 0.0
        %946 = vmatprep.subr.mxu0 0.0
        %947 = vmatpush1.xpose.msra.mxu0 0.0
        %948 = vmatprep.subr.mxu0 0.0
        %949 = vmatpush1.xpose.msra.mxu0 0.0
        %950 = vmatprep.subr.mxu0 0.0
        %951 = vmatpush1.xpose.msra.mxu0 0.0
        %952 = vmatprep.subr.mxu0 0.0
        %953 = vmatpush1.xpose.msra.mxu0 0.0
        %954 = vmatprep.subr.mxu0 0.0
        %955 = vmatpush1.xpose.msra.mxu0 0.0
        %956 = vmatprep.subr.mxu0 0.0
        %957 = vmatpush1.xpose.msra.mxu0 0.0
        %958 = vmatprep.subr.mxu0 0.0
        %959 = vmatpush1.xpose.msra.mxu0 0.0
        %960 = vmatprep.subr.mxu0 0.0
        %961 = vmatpush1.xpose.msra.mxu0 0.0
        %962 = vmatprep.subr.mxu0 0.0
        %963 = vmatpush1.xpose.msra.mxu0 0.0
        %964 = vmatprep.subr.mxu0 0.0
        %965 = vmatpush1.xpose.msra.mxu0 0.0
        %966 = vmatprep.subr.mxu0 0.0
        %967 = vmatpush1.xpose.msra.mxu0 0.0
        %968 = vmatprep.mubr.f32.mxu0 0.0
        %969 = vmatmul.mubr.f32.gmra.mrb[0].mxu0 %v878
        %v970 = vpop.f32.mrb[0].mxu0
        %v971 = vadd.f32 %v840, %v970
        %v972 = vpop.f32.mrb[0].mxu0
        %973 = vmatprep.mubr.f32.mxu0 0.0
        %974 = vmatmul.mubr.f32.gmra.mrb[0].mxu0 %v881
        %v975 = vpop.f32.mrb[0].mxu0
        %v976 = vadd.f32 %v845, %v975
        %v977 = vpop.f32.mrb[0].mxu0
        %978 = vmatprep.mubr.f32.mxu0 0.0
        %979 = vmatmul.mubr.f32.gmra.mrb[0].mxu0 %v884
        %v980 = vpop.f32.mrb[0].mxu0
        %v981 = vadd.f32 %v850, %v980
        %v982 = vpop.f32.mrb[0].mxu0
        %983 = vmatprep.mubr.f32.mxu0 0.0
        %984 = vmatmul.mubr.f32.gmra.mrb[0].mxu0 %v887
        %v985 = vpop.f32.mrb[0].mxu0
        %v986 = vadd.f32 %v855, %v985
        %v987 = vpop.f32.mrb[0].mxu0
        %988 = vmatprep.mubr.f32.mxu0 0.0
        %989 = vmatmul.mubr.f32.gmra.mrb[0].mxu0 %v890
        %v990 = vpop.f32.mrb[0].mxu0
        %v991 = vadd.f32 %v860, %v990
        %v992 = vpop.f32.mrb[0].mxu0
        %993 = vmatprep.mubr.f32.mxu0 0.0
        %994 = vmatmul.mubr.f32.gmra.mrb[0].mxu0 %v893
        %v995 = vpop.f32.mrb[0].mxu0
        %v996 = vadd.f32 %v865, %v995
        %v997 = vpop.f32.mrb[0].mxu0
        %998 = vmatprep.mubr.f32.mxu0 0.0
        %999 = vmatmul.mubr.f32.gmra.mrb[0].mxu0 %v896
        %v1000 = vpop.f32.mrb[0].mxu0
        %v1001 = vadd.f32 %v870, %v1000
        %v1002 = vpop.f32.mrb[0].mxu0
        %1003 = vmatprep.mubr.f32.mxu0 0.0
        %1004 = vmatmul.mubr.f32.gmra.mrb[0].mxu0 %v899
        %v1005 = vpop.f32.mrb[0].mxu0
        %v1006 = vadd.f32 %v875, %v1005
        %v1007 = vpop.f32.mrb[0].mxu0
        %1008 = vdwg.mxu0
        %1009 = vxpose.xlu0.b32.start [1/16] %v627, 128
        %1010 = vxpose.xlu0.b32.cont [2/16] 0.0, 128
        %1011 = vxpose.xlu0.b32.cont [3/16] 0.0, 128
        %1012 = vxpose.xlu0.b32.cont [4/16] 0.0, 128
        %1013 = vxpose.xlu0.b32.cont [5/16] 0.0, 128
        %1014 = vxpose.xlu0.b32.cont [6/16] 0.0, 128
        %1015 = vxpose.xlu0.b32.cont [7/16] 0.0, 128
        %1016 = vxpose.xlu0.b32.cont [8/16] 0.0, 128
        %1017 = vxpose.xlu0.b32.cont [9/16] 0.0, 128
        %1018 = vxpose.xlu0.b32.cont [10/16] 0.0, 128
        %1019 = vxpose.xlu0.b32.cont [11/16] 0.0, 128
        %1020 = vxpose.xlu0.b32.cont [12/16] 0.0, 128
        %1021 = vxpose.xlu0.b32.cont [13/16] 0.0, 128
        %1022 = vxpose.xlu0.b32.cont [14/16] 0.0, 128
        %1023 = vxpose.xlu0.b32.cont [15/16] 0.0, 128
        %1024 = vxpose.xlu0.b32.end [16/16] 0.0, 128
        %v1025 = vpop.trf.xlu0
        %v1026 = vpop.trf.xlu0
        %v1027 = vpop.trf.xlu0
        %v1028 = vpop.trf.xlu0
        %v1029 = vpop.trf.xlu0
        %v1030 = vpop.trf.xlu0
        %v1031 = vpop.trf.xlu0
        %v1032 = vpop.trf.xlu0
        %v1033 = vpop.trf.xlu0
        %v1034 = vpop.trf.xlu0
        %v1035 = vpop.trf.xlu0
        %v1036 = vpop.trf.xlu0
        %v1037 = vpop.trf.xlu0
        %v1038 = vpop.trf.xlu0
        %v1039 = vpop.trf.xlu0
        %v1040 = vpop.trf.xlu0
        %vm1041 = vcmask 64512
        %v1043 = vsel %vm1041, %v1025, 0
        %1045 = vmatprep.subr.mxu0 0.0
        %1046 = vmatpush1.msra.mxu0 %v799
        %1047 = vmatprep.subr.mxu0 0.0
        %1048 = vmatpush1.msra.mxu0 0.0
        %1049 = vmatprep.subr.mxu0 0.0
        %1050 = vmatpush1.msra.mxu0 0.0
        %1051 = vmatprep.subr.mxu0 0.0
        %1052 = vmatpush1.msra.mxu0 0.0
        %1053 = vmatprep.subr.mxu0 0.0
        %1054 = vmatpush1.msra.mxu0 0.0
        %1055 = vmatprep.subr.mxu0 0.0
        %1056 = vmatpush1.msra.mxu0 0.0
        %1057 = vmatprep.subr.mxu0 0.0
        %1058 = vmatpush1.msra.mxu0 0.0
        %1059 = vmatprep.subr.mxu0 0.0
        %1060 = vmatpush1.msra.mxu0 0.0
        %1061 = vmatprep.subr.mxu0 0.0
        %1062 = vmatpush1.msra.mxu0 0.0
        %1063 = vmatprep.subr.mxu0 0.0
        %1064 = vmatpush1.msra.mxu0 0.0
        %1065 = vmatprep.subr.mxu0 0.0
        %1066 = vmatpush1.msra.mxu0 0.0
        %1067 = vmatprep.subr.mxu0 0.0
        %1068 = vmatpush1.msra.mxu0 0.0
        %1069 = vmatprep.subr.mxu0 0.0
        %1070 = vmatpush1.msra.mxu0 0.0
        %1071 = vmatprep.subr.mxu0 0.0
        %1072 = vmatpush1.msra.mxu0 0.0
        %1073 = vmatprep.subr.mxu0 0.0
        %1074 = vmatpush1.msra.mxu0 0.0
        %1075 = vmatprep.subr.mxu0 0.0
        %1076 = vmatpush1.msra.mxu0 0.0
        %1077 = vmatprep.subr.mxu0 0.0
        %1078 = vmatpush1.msra.mxu0 0.0
        %1079 = vmatprep.subr.mxu0 0.0
        %1080 = vmatpush1.msra.mxu0 0.0
        %1081 = vmatprep.subr.mxu0 0.0
        %1082 = vmatpush1.msra.mxu0 0.0
        %1083 = vmatprep.subr.mxu0 0.0
        %1084 = vmatpush1.msra.mxu0 0.0
        %1085 = vmatprep.subr.mxu0 0.0
        %1086 = vmatpush1.msra.mxu0 0.0
        %1087 = vmatprep.subr.mxu0 0.0
        %1088 = vmatpush1.msra.mxu0 0.0
        %1089 = vmatprep.subr.mxu0 0.0
        %1090 = vmatpush1.msra.mxu0 0.0
        %1091 = vmatprep.subr.mxu0 0.0
        %1092 = vmatpush1.msra.mxu0 0.0
        %1093 = vmatprep.subr.mxu0 0.0
        %1094 = vmatpush1.msra.mxu0 0.0
        %1095 = vmatprep.subr.mxu0 0.0
        %1096 = vmatpush1.msra.mxu0 0.0
        %1097 = vmatprep.subr.mxu0 0.0
        %1098 = vmatpush1.msra.mxu0 0.0
        %1099 = vmatprep.subr.mxu0 0.0
        %1100 = vmatpush1.msra.mxu0 0.0
        %1101 = vmatprep.subr.mxu0 0.0
        %1102 = vmatpush1.msra.mxu0 0.0
        %1103 = vmatprep.subr.mxu0 0.0
        %1104 = vmatpush1.msra.mxu0 0.0
        %1105 = vmatprep.subr.mxu0 0.0
        %1106 = vmatpush1.msra.mxu0 0.0
        %1107 = vmatprep.subr.mxu0 0.0
        %1108 = vmatpush1.msra.mxu0 0.0
        %1109 = vmatprep.mubr.f32.mxu0 0.0
        %1110 = vmatmul.mubr.f32.gmra.mrb[0].mxu0 %v1043
        %v1111 = vpop.f32.mrb[0].mxu0
        %v1112 = vadd.f32 0.0, %v1111
        %v1113 = vpop.f32.mrb[0].mxu0
        %1114 = vdwg.mxu0
        %1115 = vxpose.xlu0.b32.start [1/16] %v632, 128
        %1116 = vxpose.xlu0.b32.cont [2/16] 0.0, 128
        %1117 = vxpose.xlu0.b32.cont [3/16] 0.0, 128
        %1118 = vxpose.xlu0.b32.cont [4/16] 0.0, 128
        %1119 = vxpose.xlu0.b32.cont [5/16] 0.0, 128
        %1120 = vxpose.xlu0.b32.cont [6/16] 0.0, 128
        %1121 = vxpose.xlu0.b32.cont [7/16] 0.0, 128
        %1122 = vxpose.xlu0.b32.cont [8/16] 0.0, 128
        %1123 = vxpose.xlu0.b32.cont [9/16] 0.0, 128
        %1124 = vxpose.xlu0.b32.cont [10/16] 0.0, 128
        %1125 = vxpose.xlu0.b32.cont [11/16] 0.0, 128
        %1126 = vxpose.xlu0.b32.cont [12/16] 0.0, 128
        %1127 = vxpose.xlu0.b32.cont [13/16] 0.0, 128
        %1128 = vxpose.xlu0.b32.cont [14/16] 0.0, 128
        %1129 = vxpose.xlu0.b32.cont [15/16] 0.0, 128
        %1130 = vxpose.xlu0.b32.end [16/16] 0.0, 128
        %v1131 = vpop.trf.xlu0
        %v1132 = vpop.trf.xlu0
        %v1133 = vpop.trf.xlu0
        %v1134 = vpop.trf.xlu0
        %v1135 = vpop.trf.xlu0
        %v1136 = vpop.trf.xlu0
        %v1137 = vpop.trf.xlu0
        %v1138 = vpop.trf.xlu0
        %v1139 = vpop.trf.xlu0
        %v1140 = vpop.trf.xlu0
        %v1141 = vpop.trf.xlu0
        %v1142 = vpop.trf.xlu0
        %v1143 = vpop.trf.xlu0
        %v1144 = vpop.trf.xlu0
        %v1145 = vpop.trf.xlu0
        %v1146 = vpop.trf.xlu0
        %v1148 = vsel %vm1041, %v1131, 0
        %1150 = vmatprep.subr.mxu0 0.0
        %1151 = vmatpush1.msra.mxu0 %v804
        %1152 = vmatprep.subr.mxu0 0.0
        %1153 = vmatpush1.msra.mxu0 0.0
        %1154 = vmatprep.subr.mxu0 0.0
        %1155 = vmatpush1.msra.mxu0 0.0
        %1156 = vmatprep.subr.mxu0 0.0
        %1157 = vmatpush1.msra.mxu0 0.0
        %1158 = vmatprep.subr.mxu0 0.0
        %1159 = vmatpush1.msra.mxu0 0.0
        %1160 = vmatprep.subr.mxu0 0.0
        %1161 = vmatpush1.msra.mxu0 0.0
        %1162 = vmatprep.subr.mxu0 0.0
        %1163 = vmatpush1.msra.mxu0 0.0
        %1164 = vmatprep.subr.mxu0 0.0
        %1165 = vmatpush1.msra.mxu0 0.0
        %1166 = vmatprep.subr.mxu0 0.0
        %1167 = vmatpush1.msra.mxu0 0.0
        %1168 = vmatprep.subr.mxu0 0.0
        %1169 = vmatpush1.msra.mxu0 0.0
        %1170 = vmatprep.subr.mxu0 0.0
        %1171 = vmatpush1.msra.mxu0 0.0
        %1172 = vmatprep.subr.mxu0 0.0
        %1173 = vmatpush1.msra.mxu0 0.0
        %1174 = vmatprep.subr.mxu0 0.0
        %1175 = vmatpush1.msra.mxu0 0.0
        %1176 = vmatprep.subr.mxu0 0.0
        %1177 = vmatpush1.msra.mxu0 0.0
        %1178 = vmatprep.subr.mxu0 0.0
        %1179 = vmatpush1.msra.mxu0 0.0
        %1180 = vmatprep.subr.mxu0 0.0
        %1181 = vmatpush1.msra.mxu0 0.0
        %1182 = vmatprep.subr.mxu0 0.0
        %1183 = vmatpush1.msra.mxu0 0.0
        %1184 = vmatprep.subr.mxu0 0.0
        %1185 = vmatpush1.msra.mxu0 0.0
        %1186 = vmatprep.subr.mxu0 0.0
        %1187 = vmatpush1.msra.mxu0 0.0
        %1188 = vmatprep.subr.mxu0 0.0
        %1189 = vmatpush1.msra.mxu0 0.0
        %1190 = vmatprep.subr.mxu0 0.0
        %1191 = vmatpush1.msra.mxu0 0.0
        %1192 = vmatprep.subr.mxu0 0.0
        %1193 = vmatpush1.msra.mxu0 0.0
        %1194 = vmatprep.subr.mxu0 0.0
        %1195 = vmatpush1.msra.mxu0 0.0
        %1196 = vmatprep.subr.mxu0 0.0
        %1197 = vmatpush1.msra.mxu0 0.0
        %1198 = vmatprep.subr.mxu0 0.0
        %1199 = vmatpush1.msra.mxu0 0.0
        %1200 = vmatprep.subr.mxu0 0.0
        %1201 = vmatpush1.msra.mxu0 0.0
        %1202 = vmatprep.subr.mxu0 0.0
        %1203 = vmatpush1.msra.mxu0 0.0
        %1204 = vmatprep.subr.mxu0 0.0
        %1205 = vmatpush1.msra.mxu0 0.0
        %1206 = vmatprep.subr.mxu0 0.0
        %1207 = vmatpush1.msra.mxu0 0.0
        %1208 = vmatprep.subr.mxu0 0.0
        %1209 = vmatpush1.msra.mxu0 0.0
        %1210 = vmatprep.subr.mxu0 0.0
        %1211 = vmatpush1.msra.mxu0 0.0
        %1212 = vmatprep.subr.mxu0 0.0
        %1213 = vmatpush1.msra.mxu0 0.0
        %1214 = vmatprep.mubr.f32.mxu0 0.0
        %1215 = vmatmul.mubr.f32.gmra.mrb[0].mxu0 %v1148
        %v1216 = vpop.f32.mrb[0].mxu0
        %v1217 = vadd.f32 0.0, %v1216
        %v1218 = vpop.f32.mrb[0].mxu0
        %1219 = vdwg.mxu0
        %1220 = vxpose.xlu0.b32.start [1/16] %v637, 128
        %1221 = vxpose.xlu0.b32.cont [2/16] 0.0, 128
        %1222 = vxpose.xlu0.b32.cont [3/16] 0.0, 128
        %1223 = vxpose.xlu0.b32.cont [4/16] 0.0, 128
        %1224 = vxpose.xlu0.b32.cont [5/16] 0.0, 128
        %1225 = vxpose.xlu0.b32.cont [6/16] 0.0, 128
        %1226 = vxpose.xlu0.b32.cont [7/16] 0.0, 128
        %1227 = vxpose.xlu0.b32.cont [8/16] 0.0, 128
        %1228 = vxpose.xlu0.b32.cont [9/16] 0.0, 128
        %1229 = vxpose.xlu0.b32.cont [10/16] 0.0, 128
        %1230 = vxpose.xlu0.b32.cont [11/16] 0.0, 128
        %1231 = vxpose.xlu0.b32.cont [12/16] 0.0, 128
        %1232 = vxpose.xlu0.b32.cont [13/16] 0.0, 128
        %1233 = vxpose.xlu0.b32.cont [14/16] 0.0, 128
        %1234 = vxpose.xlu0.b32.cont [15/16] 0.0, 128
        %1235 = vxpose.xlu0.b32.end [16/16] 0.0, 128
        %v1236 = vpop.trf.xlu0
        %v1237 = vpop.trf.xlu0
        %v1238 = vpop.trf.xlu0
        %v1239 = vpop.trf.xlu0
        %v1240 = vpop.trf.xlu0
        %v1241 = vpop.trf.xlu0
        %v1242 = vpop.trf.xlu0
        %v1243 = vpop.trf.xlu0
        %v1244 = vpop.trf.xlu0
        %v1245 = vpop.trf.xlu0
        %v1246 = vpop.trf.xlu0
        %v1247 = vpop.trf.xlu0
        %v1248 = vpop.trf.xlu0
        %v1249 = vpop.trf.xlu0
        %v1250 = vpop.trf.xlu0
        %v1251 = vpop.trf.xlu0
        %v1253 = vsel %vm1041, %v1236, 0
        %1255 = vmatprep.subr.mxu0 0.0
        %1256 = vmatpush1.msra.mxu0 %v809
        %1257 = vmatprep.subr.mxu0 0.0
        %1258 = vmatpush1.msra.mxu0 0.0
        %1259 = vmatprep.subr.mxu0 0.0
        %1260 = vmatpush1.msra.mxu0 0.0
        %1261 = vmatprep.subr.mxu0 0.0
        %1262 = vmatpush1.msra.mxu0 0.0
        %1263 = vmatprep.subr.mxu0 0.0
        %1264 = vmatpush1.msra.mxu0 0.0
        %1265 = vmatprep.subr.mxu0 0.0
        %1266 = vmatpush1.msra.mxu0 0.0
        %1267 = vmatprep.subr.mxu0 0.0
        %1268 = vmatpush1.msra.mxu0 0.0
        %1269 = vmatprep.subr.mxu0 0.0
        %1270 = vmatpush1.msra.mxu0 0.0
        %1271 = vmatprep.subr.mxu0 0.0
        %1272 = vmatpush1.msra.mxu0 0.0
        %1273 = vmatprep.subr.mxu0 0.0
        %1274 = vmatpush1.msra.mxu0 0.0
        %1275 = vmatprep.subr.mxu0 0.0
        %1276 = vmatpush1.msra.mxu0 0.0
        %1277 = vmatprep.subr.mxu0 0.0
        %1278 = vmatpush1.msra.mxu0 0.0
        %1279 = vmatprep.subr.mxu0 0.0
        %1280 = vmatpush1.msra.mxu0 0.0
        %1281 = vmatprep.subr.mxu0 0.0
        %1282 = vmatpush1.msra.mxu0 0.0
        %1283 = vmatprep.subr.mxu0 0.0
        %1284 = vmatpush1.msra.mxu0 0.0
        %1285 = vmatprep.subr.mxu0 0.0
        %1286 = vmatpush1.msra.mxu0 0.0
        %1287 = vmatprep.subr.mxu0 0.0
        %1288 = vmatpush1.msra.mxu0 0.0
        %1289 = vmatprep.subr.mxu0 0.0
        %1290 = vmatpush1.msra.mxu0 0.0
        %1291 = vmatprep.subr.mxu0 0.0
        %1292 = vmatpush1.msra.mxu0 0.0
        %1293 = vmatprep.subr.mxu0 0.0
        %1294 = vmatpush1.msra.mxu0 0.0
        %1295 = vmatprep.subr.mxu0 0.0
        %1296 = vmatpush1.msra.mxu0 0.0
        %1297 = vmatprep.subr.mxu0 0.0
        %1298 = vmatpush1.msra.mxu0 0.0
        %1299 = vmatprep.subr.mxu0 0.0
        %1300 = vmatpush1.msra.mxu0 0.0
        %1301 = vmatprep.subr.mxu0 0.0
        %1302 = vmatpush1.msra.mxu0 0.0
        %1303 = vmatprep.subr.mxu0 0.0
        %1304 = vmatpush1.msra.mxu0 0.0
        %1305 = vmatprep.subr.mxu0 0.0
        %1306 = vmatpush1.msra.mxu0 0.0
        %1307 = vmatprep.subr.mxu0 0.0
        %1308 = vmatpush1.msra.mxu0 0.0
        %1309 = vmatprep.subr.mxu0 0.0
        %1310 = vmatpush1.msra.mxu0 0.0
        %1311 = vmatprep.subr.mxu0 0.0
        %1312 = vmatpush1.msra.mxu0 0.0
        %1313 = vmatprep.subr.mxu0 0.0
        %1314 = vmatpush1.msra.mxu0 0.0
        %1315 = vmatprep.subr.mxu0 0.0
        %1316 = vmatpush1.msra.mxu0 0.0
        %1317 = vmatprep.subr.mxu0 0.0
        %1318 = vmatpush1.msra.mxu0 0.0
        %1319 = vmatprep.mubr.f32.mxu0 0.0
        %1320 = vmatmul.mubr.f32.gmra.mrb[0].mxu0 %v1253
        %v1321 = vpop.f32.mrb[0].mxu0
        %v1322 = vadd.f32 0.0, %v1321
        %v1323 = vpop.f32.mrb[0].mxu0
        %1324 = vdwg.mxu0
        %1325 = vxpose.xlu0.b32.start [1/16] %v642, 128
        %1326 = vxpose.xlu0.b32.cont [2/16] 0.0, 128
        %1327 = vxpose.xlu0.b32.cont [3/16] 0.0, 128
        %1328 = vxpose.xlu0.b32.cont [4/16] 0.0, 128
        %1329 = vxpose.xlu0.b32.cont [5/16] 0.0, 128
        %1330 = vxpose.xlu0.b32.cont [6/16] 0.0, 128
        %1331 = vxpose.xlu0.b32.cont [7/16] 0.0, 128
        %1332 = vxpose.xlu0.b32.cont [8/16] 0.0, 128
        %1333 = vxpose.xlu0.b32.cont [9/16] 0.0, 128
        %1334 = vxpose.xlu0.b32.cont [10/16] 0.0, 128
        %1335 = vxpose.xlu0.b32.cont [11/16] 0.0, 128
        %1336 = vxpose.xlu0.b32.cont [12/16] 0.0, 128
        %1337 = vxpose.xlu0.b32.cont [13/16] 0.0, 128
        %1338 = vxpose.xlu0.b32.cont [14/16] 0.0, 128
        %1339 = vxpose.xlu0.b32.cont [15/16] 0.0, 128
        %1340 = vxpose.xlu0.b32.end [16/16] 0.0, 128
        %v1341 = vpop.trf.xlu0
        %v1342 = vpop.trf.xlu0
        %v1343 = vpop.trf.xlu0
        %v1344 = vpop.trf.xlu0
        %v1345 = vpop.trf.xlu0
        %v1346 = vpop.trf.xlu0
        %v1347 = vpop.trf.xlu0
        %v1348 = vpop.trf.xlu0
        %v1349 = vpop.trf.xlu0
        %v1350 = vpop.trf.xlu0
        %v1351 = vpop.trf.xlu0
        %v1352 = vpop.trf.xlu0
        %v1353 = vpop.trf.xlu0
        %v1354 = vpop.trf.xlu0
        %v1355 = vpop.trf.xlu0
        %v1356 = vpop.trf.xlu0
        %v1358 = vsel %vm1041, %v1341, 0
        %1360 = vmatprep.subr.mxu0 0.0
        %1361 = vmatpush1.msra.mxu0 %v814
        %1362 = vmatprep.subr.mxu0 0.0
        %1363 = vmatpush1.msra.mxu0 0.0
        %1364 = vmatprep.subr.mxu0 0.0
        %1365 = vmatpush1.msra.mxu0 0.0
        %1366 = vmatprep.subr.mxu0 0.0
        %1367 = vmatpush1.msra.mxu0 0.0
        %1368 = vmatprep.subr.mxu0 0.0
        %1369 = vmatpush1.msra.mxu0 0.0
        %1370 = vmatprep.subr.mxu0 0.0
        %1371 = vmatpush1.msra.mxu0 0.0
        %1372 = vmatprep.subr.mxu0 0.0
        %1373 = vmatpush1.msra.mxu0 0.0
        %1374 = vmatprep.subr.mxu0 0.0
        %1375 = vmatpush1.msra.mxu0 0.0
        %1376 = vmatprep.subr.mxu0 0.0
        %1377 = vmatpush1.msra.mxu0 0.0
        %1378 = vmatprep.subr.mxu0 0.0
        %1379 = vmatpush1.msra.mxu0 0.0
        %1380 = vmatprep.subr.mxu0 0.0
        %1381 = vmatpush1.msra.mxu0 0.0
        %1382 = vmatprep.subr.mxu0 0.0
        %1383 = vmatpush1.msra.mxu0 0.0
        %1384 = vmatprep.subr.mxu0 0.0
        %1385 = vmatpush1.msra.mxu0 0.0
        %1386 = vmatprep.subr.mxu0 0.0
        %1387 = vmatpush1.msra.mxu0 0.0
        %1388 = vmatprep.subr.mxu0 0.0
        %1389 = vmatpush1.msra.mxu0 0.0
        %1390 = vmatprep.subr.mxu0 0.0
        %1391 = vmatpush1.msra.mxu0 0.0
        %1392 = vmatprep.subr.mxu0 0.0
        %1393 = vmatpush1.msra.mxu0 0.0
        %1394 = vmatprep.subr.mxu0 0.0
        %1395 = vmatpush1.msra.mxu0 0.0
        %1396 = vmatprep.subr.mxu0 0.0
        %1397 = vmatpush1.msra.mxu0 0.0
        %1398 = vmatprep.subr.mxu0 0.0
        %1399 = vmatpush1.msra.mxu0 0.0
        %1400 = vmatprep.subr.mxu0 0.0
        %1401 = vmatpush1.msra.mxu0 0.0
        %1402 = vmatprep.subr.mxu0 0.0
        %1403 = vmatpush1.msra.mxu0 0.0
        %1404 = vmatprep.subr.mxu0 0.0
        %1405 = vmatpush1.msra.mxu0 0.0
        %1406 = vmatprep.subr.mxu0 0.0
        %1407 = vmatpush1.msra.mxu0 0.0
        %1408 = vmatprep.subr.mxu0 0.0
        %1409 = vmatpush1.msra.mxu0 0.0
        %1410 = vmatprep.subr.mxu0 0.0
        %1411 = vmatpush1.msra.mxu0 0.0
        %1412 = vmatprep.subr.mxu0 0.0
        %1413 = vmatpush1.msra.mxu0 0.0
        %1414 = vmatprep.subr.mxu0 0.0
        %1415 = vmatpush1.msra.mxu0 0.0
        %1416 = vmatprep.subr.mxu0 0.0
        %1417 = vmatpush1.msra.mxu0 0.0
        %1418 = vmatprep.subr.mxu0 0.0
        %1419 = vmatpush1.msra.mxu0 0.0
        %1420 = vmatprep.subr.mxu0 0.0
        %1421 = vmatpush1.msra.mxu0 0.0
        %1422 = vmatprep.subr.mxu0 0.0
        %1423 = vmatpush1.msra.mxu0 0.0
        %1424 = vmatprep.mubr.f32.mxu0 0.0
        %1425 = vmatmul.mubr.f32.gmra.mrb[0].mxu0 %v1358
        %v1426 = vpop.f32.mrb[0].mxu0
        %v1427 = vadd.f32 0.0, %v1426
        %v1428 = vpop.f32.mrb[0].mxu0
        %1429 = vdwg.mxu0
        %1430 = vxpose.xlu0.b32.start [1/16] %v647, 128
        %1431 = vxpose.xlu0.b32.cont [2/16] 0.0, 128
        %1432 = vxpose.xlu0.b32.cont [3/16] 0.0, 128
        %1433 = vxpose.xlu0.b32.cont [4/16] 0.0, 128
        %1434 = vxpose.xlu0.b32.cont [5/16] 0.0, 128
        %1435 = vxpose.xlu0.b32.cont [6/16] 0.0, 128
        %1436 = vxpose.xlu0.b32.cont [7/16] 0.0, 128
        %1437 = vxpose.xlu0.b32.cont [8/16] 0.0, 128
        %1438 = vxpose.xlu0.b32.cont [9/16] 0.0, 128
        %1439 = vxpose.xlu0.b32.cont [10/16] 0.0, 128
        %1440 = vxpose.xlu0.b32.cont [11/16] 0.0, 128
        %1441 = vxpose.xlu0.b32.cont [12/16] 0.0, 128
        %1442 = vxpose.xlu0.b32.cont [13/16] 0.0, 128
        %1443 = vxpose.xlu0.b32.cont [14/16] 0.0, 128
        %1444 = vxpose.xlu0.b32.cont [15/16] 0.0, 128
        %1445 = vxpose.xlu0.b32.end [16/16] 0.0, 128
        %v1446 = vpop.trf.xlu0
        %v1447 = vpop.trf.xlu0
        %v1448 = vpop.trf.xlu0
        %v1449 = vpop.trf.xlu0
        %v1450 = vpop.trf.xlu0
        %v1451 = vpop.trf.xlu0
        %v1452 = vpop.trf.xlu0
        %v1453 = vpop.trf.xlu0
        %v1454 = vpop.trf.xlu0
        %v1455 = vpop.trf.xlu0
        %v1456 = vpop.trf.xlu0
        %v1457 = vpop.trf.xlu0
        %v1458 = vpop.trf.xlu0
        %v1459 = vpop.trf.xlu0
        %v1460 = vpop.trf.xlu0
        %v1461 = vpop.trf.xlu0
        %v1463 = vsel %vm1041, %v1446, 0
        %1465 = vmatprep.subr.mxu0 0.0
        %1466 = vmatpush1.msra.mxu0 %v819
        %1467 = vmatprep.subr.mxu0 0.0
        %1468 = vmatpush1.msra.mxu0 0.0
        %1469 = vmatprep.subr.mxu0 0.0
        %1470 = vmatpush1.msra.mxu0 0.0
        %1471 = vmatprep.subr.mxu0 0.0
        %1472 = vmatpush1.msra.mxu0 0.0
        %1473 = vmatprep.subr.mxu0 0.0
        %1474 = vmatpush1.msra.mxu0 0.0
        %1475 = vmatprep.subr.mxu0 0.0
        %1476 = vmatpush1.msra.mxu0 0.0
        %1477 = vmatprep.subr.mxu0 0.0
        %1478 = vmatpush1.msra.mxu0 0.0
        %1479 = vmatprep.subr.mxu0 0.0
        %1480 = vmatpush1.msra.mxu0 0.0
        %1481 = vmatprep.subr.mxu0 0.0
        %1482 = vmatpush1.msra.mxu0 0.0
        %1483 = vmatprep.subr.mxu0 0.0
        %1484 = vmatpush1.msra.mxu0 0.0
        %1485 = vmatprep.subr.mxu0 0.0
        %1486 = vmatpush1.msra.mxu0 0.0
        %1487 = vmatprep.subr.mxu0 0.0
        %1488 = vmatpush1.msra.mxu0 0.0
        %1489 = vmatprep.subr.mxu0 0.0
        %1490 = vmatpush1.msra.mxu0 0.0
        %1491 = vmatprep.subr.mxu0 0.0
        %1492 = vmatpush1.msra.mxu0 0.0
        %1493 = vmatprep.subr.mxu0 0.0
        %1494 = vmatpush1.msra.mxu0 0.0
        %1495 = vmatprep.subr.mxu0 0.0
        %1496 = vmatpush1.msra.mxu0 0.0
        %1497 = vmatprep.subr.mxu0 0.0
        %1498 = vmatpush1.msra.mxu0 0.0
        %1499 = vmatprep.subr.mxu0 0.0
        %1500 = vmatpush1.msra.mxu0 0.0
        %1501 = vmatprep.subr.mxu0 0.0
        %1502 = vmatpush1.msra.mxu0 0.0
        %1503 = vmatprep.subr.mxu0 0.0
        %1504 = vmatpush1.msra.mxu0 0.0
        %1505 = vmatprep.subr.mxu0 0.0
        %1506 = vmatpush1.msra.mxu0 0.0
        %1507 = vmatprep.subr.mxu0 0.0
        %1508 = vmatpush1.msra.mxu0 0.0
        %1509 = vmatprep.subr.mxu0 0.0
        %1510 = vmatpush1.msra.mxu0 0.0
        %1511 = vmatprep.subr.mxu0 0.0
        %1512 = vmatpush1.msra.mxu0 0.0
        %1513 = vmatprep.subr.mxu0 0.0
        %1514 = vmatpush1.msra.mxu0 0.0
        %1515 = vmatprep.subr.mxu0 0.0
        %1516 = vmatpush1.msra.mxu0 0.0
        %1517 = vmatprep.subr.mxu0 0.0
        %1518 = vmatpush1.msra.mxu0 0.0
        %1519 = vmatprep.subr.mxu0 0.0
        %1520 = vmatpush1.msra.mxu0 0.0
        %1521 = vmatprep.subr.mxu0 0.0
        %1522 = vmatpush1.msra.mxu0 0.0
        %1523 = vmatprep.subr.mxu0 0.0
        %1524 = vmatpush1.msra.mxu0 0.0
        %1525 = vmatprep.subr.mxu0 0.0
        %1526 = vmatpush1.msra.mxu0 0.0
        %1527 = vmatprep.subr.mxu0 0.0
        %1528 = vmatpush1.msra.mxu0 0.0
        %1529 = vmatprep.mubr.f32.mxu0 0.0
        %1530 = vmatmul.mubr.f32.gmra.mrb[0].mxu0 %v1463
        %v1531 = vpop.f32.mrb[0].mxu0
        %v1532 = vadd.f32 0.0, %v1531
        %v1533 = vpop.f32.mrb[0].mxu0
        %1534 = vdwg.mxu0
        %1535 = vxpose.xlu0.b32.start [1/16] %v652, 128
        %1536 = vxpose.xlu0.b32.cont [2/16] 0.0, 128
        %1537 = vxpose.xlu0.b32.cont [3/16] 0.0, 128
        %1538 = vxpose.xlu0.b32.cont [4/16] 0.0, 128
        %1539 = vxpose.xlu0.b32.cont [5/16] 0.0, 128
        %1540 = vxpose.xlu0.b32.cont [6/16] 0.0, 128
        %1541 = vxpose.xlu0.b32.cont [7/16] 0.0, 128
        %1542 = vxpose.xlu0.b32.cont [8/16] 0.0, 128
        %1543 = vxpose.xlu0.b32.cont [9/16] 0.0, 128
        %1544 = vxpose.xlu0.b32.cont [10/16] 0.0, 128
        %1545 = vxpose.xlu0.b32.cont [11/16] 0.0, 128
        %1546 = vxpose.xlu0.b32.cont [12/16] 0.0, 128
        %1547 = vxpose.xlu0.b32.cont [13/16] 0.0, 128
        %1548 = vxpose.xlu0.b32.cont [14/16] 0.0, 128
        %1549 = vxpose.xlu0.b32.cont [15/16] 0.0, 128
        %1550 = vxpose.xlu0.b32.end [16/16] 0.0, 128
        %v1551 = vpop.trf.xlu0
        %v1552 = vpop.trf.xlu0
        %v1553 = vpop.trf.xlu0
        %v1554 = vpop.trf.xlu0
        %v1555 = vpop.trf.xlu0
        %v1556 = vpop.trf.xlu0
        %v1557 = vpop.trf.xlu0
        %v1558 = vpop.trf.xlu0
        %v1559 = vpop.trf.xlu0
        %v1560 = vpop.trf.xlu0
        %v1561 = vpop.trf.xlu0
        %v1562 = vpop.trf.xlu0
        %v1563 = vpop.trf.xlu0
        %v1564 = vpop.trf.xlu0
        %v1565 = vpop.trf.xlu0
        %v1566 = vpop.trf.xlu0
        %v1568 = vsel %vm1041, %v1551, 0
        %1570 = vmatprep.subr.mxu0 0.0
        %1571 = vmatpush1.msra.mxu0 %v824
        %1572 = vmatprep.subr.mxu0 0.0
        %1573 = vmatpush1.msra.mxu0 0.0
        %1574 = vmatprep.subr.mxu0 0.0
        %1575 = vmatpush1.msra.mxu0 0.0
        %1576 = vmatprep.subr.mxu0 0.0
        %1577 = vmatpush1.msra.mxu0 0.0
        %1578 = vmatprep.subr.mxu0 0.0
        %1579 = vmatpush1.msra.mxu0 0.0
        %1580 = vmatprep.subr.mxu0 0.0
        %1581 = vmatpush1.msra.mxu0 0.0
        %1582 = vmatprep.subr.mxu0 0.0
        %1583 = vmatpush1.msra.mxu0 0.0
        %1584 = vmatprep.subr.mxu0 0.0
        %1585 = vmatpush1.msra.mxu0 0.0
        %1586 = vmatprep.subr.mxu0 0.0
        %1587 = vmatpush1.msra.mxu0 0.0
        %1588 = vmatprep.subr.mxu0 0.0
        %1589 = vmatpush1.msra.mxu0 0.0
        %1590 = vmatprep.subr.mxu0 0.0
        %1591 = vmatpush1.msra.mxu0 0.0
        %1592 = vmatprep.subr.mxu0 0.0
        %1593 = vmatpush1.msra.mxu0 0.0
        %1594 = vmatprep.subr.mxu0 0.0
        %1595 = vmatpush1.msra.mxu0 0.0
        %1596 = vmatprep.subr.mxu0 0.0
        %1597 = vmatpush1.msra.mxu0 0.0
        %1598 = vmatprep.subr.mxu0 0.0
        %1599 = vmatpush1.msra.mxu0 0.0
        %1600 = vmatprep.subr.mxu0 0.0
        %1601 = vmatpush1.msra.mxu0 0.0
        %1602 = vmatprep.subr.mxu0 0.0
        %1603 = vmatpush1.msra.mxu0 0.0
        %1604 = vmatprep.subr.mxu0 0.0
        %1605 = vmatpush1.msra.mxu0 0.0
        %1606 = vmatprep.subr.mxu0 0.0
        %1607 = vmatpush1.msra.mxu0 0.0
        %1608 = vmatprep.subr.mxu0 0.0
        %1609 = vmatpush1.msra.mxu0 0.0
        %1610 = vmatprep.subr.mxu0 0.0
        %1611 = vmatpush1.msra.mxu0 0.0
        %1612 = vmatprep.subr.mxu0 0.0
        %1613 = vmatpush1.msra.mxu0 0.0
        %1614 = vmatprep.subr.mxu0 0.0
        %1615 = vmatpush1.msra.mxu0 0.0
        %1616 = vmatprep.subr.mxu0 0.0
        %1617 = vmatpush1.msra.mxu0 0.0
        %1618 = vmatprep.subr.mxu0 0.0
        %1619 = vmatpush1.msra.mxu0 0.0
        %1620 = vmatprep.subr.mxu0 0.0
        %1621 = vmatpush1.msra.mxu0 0.0
        %1622 = vmatprep.subr.mxu0 0.0
        %1623 = vmatpush1.msra.mxu0 0.0
        %1624 = vmatprep.subr.mxu0 0.0
        %1625 = vmatpush1.msra.mxu0 0.0
        %1626 = vmatprep.subr.mxu0 0.0
        %1627 = vmatpush1.msra.mxu0 0.0
        %1628 = vmatprep.subr.mxu0 0.0
        %1629 = vmatpush1.msra.mxu0 0.0
        %1630 = vmatprep.subr.mxu0 0.0
        %1631 = vmatpush1.msra.mxu0 0.0
        %1632 = vmatprep.subr.mxu0 0.0
        %1633 = vmatpush1.msra.mxu0 0.0
        %1634 = vmatprep.mubr.f32.mxu0 0.0
        %1635 = vmatmul.mubr.f32.gmra.mrb[0].mxu0 %v1568
        %v1636 = vpop.f32.mrb[0].mxu0
        %v1637 = vadd.f32 0.0, %v1636
        %v1638 = vpop.f32.mrb[0].mxu0
        %1639 = vdwg.mxu0
        %1640 = vxpose.xlu0.b32.start [1/16] %v657, 128
        %1641 = vxpose.xlu0.b32.cont [2/16] 0.0, 128
        %1642 = vxpose.xlu0.b32.cont [3/16] 0.0, 128
        %1643 = vxpose.xlu0.b32.cont [4/16] 0.0, 128
        %1644 = vxpose.xlu0.b32.cont [5/16] 0.0, 128
        %1645 = vxpose.xlu0.b32.cont [6/16] 0.0, 128
        %1646 = vxpose.xlu0.b32.cont [7/16] 0.0, 128
        %1647 = vxpose.xlu0.b32.cont [8/16] 0.0, 128
        %1648 = vxpose.xlu0.b32.cont [9/16] 0.0, 128
        %1649 = vxpose.xlu0.b32.cont [10/16] 0.0, 128
        %1650 = vxpose.xlu0.b32.cont [11/16] 0.0, 128
        %1651 = vxpose.xlu0.b32.cont [12/16] 0.0, 128
        %1652 = vxpose.xlu0.b32.cont [13/16] 0.0, 128
        %1653 = vxpose.xlu0.b32.cont [14/16] 0.0, 128
        %1654 = vxpose.xlu0.b32.cont [15/16] 0.0, 128
        %1655 = vxpose.xlu0.b32.end [16/16] 0.0, 128
        %v1656 = vpop.trf.xlu0
        %v1657 = vpop.trf.xlu0
        %v1658 = vpop.trf.xlu0
        %v1659 = vpop.trf.xlu0
        %v1660 = vpop.trf.xlu0
        %v1661 = vpop.trf.xlu0
        %v1662 = vpop.trf.xlu0
        %v1663 = vpop.trf.xlu0
        %v1664 = vpop.trf.xlu0
        %v1665 = vpop.trf.xlu0
        %v1666 = vpop.trf.xlu0
        %v1667 = vpop.trf.xlu0
        %v1668 = vpop.trf.xlu0
        %v1669 = vpop.trf.xlu0
        %v1670 = vpop.trf.xlu0
        %v1671 = vpop.trf.xlu0
        %v1673 = vsel %vm1041, %v1656, 0
        %1675 = vmatprep.subr.mxu0 0.0
        %1676 = vmatpush1.msra.mxu0 %v829
        %1677 = vmatprep.subr.mxu0 0.0
        %1678 = vmatpush1.msra.mxu0 0.0
        %1679 = vmatprep.subr.mxu0 0.0
        %1680 = vmatpush1.msra.mxu0 0.0
        %1681 = vmatprep.subr.mxu0 0.0
        %1682 = vmatpush1.msra.mxu0 0.0
        %1683 = vmatprep.subr.mxu0 0.0
        %1684 = vmatpush1.msra.mxu0 0.0
        %1685 = vmatprep.subr.mxu0 0.0
        %1686 = vmatpush1.msra.mxu0 0.0
        %1687 = vmatprep.subr.mxu0 0.0
        %1688 = vmatpush1.msra.mxu0 0.0
        %1689 = vmatprep.subr.mxu0 0.0
        %1690 = vmatpush1.msra.mxu0 0.0
        %1691 = vmatprep.subr.mxu0 0.0
        %1692 = vmatpush1.msra.mxu0 0.0
        %1693 = vmatprep.subr.mxu0 0.0
        %1694 = vmatpush1.msra.mxu0 0.0
        %1695 = vmatprep.subr.mxu0 0.0
        %1696 = vmatpush1.msra.mxu0 0.0
        %1697 = vmatprep.subr.mxu0 0.0
        %1698 = vmatpush1.msra.mxu0 0.0
        %1699 = vmatprep.subr.mxu0 0.0
        %1700 = vmatpush1.msra.mxu0 0.0
        %1701 = vmatprep.subr.mxu0 0.0
        %1702 = vmatpush1.msra.mxu0 0.0
        %1703 = vmatprep.subr.mxu0 0.0
        %1704 = vmatpush1.msra.mxu0 0.0
        %1705 = vmatprep.subr.mxu0 0.0
        %1706 = vmatpush1.msra.mxu0 0.0
        %1707 = vmatprep.subr.mxu0 0.0
        %1708 = vmatpush1.msra.mxu0 0.0
        %1709 = vmatprep.subr.mxu0 0.0
        %1710 = vmatpush1.msra.mxu0 0.0
        %1711 = vmatprep.subr.mxu0 0.0
        %1712 = vmatpush1.msra.mxu0 0.0
        %1713 = vmatprep.subr.mxu0 0.0
        %1714 = vmatpush1.msra.mxu0 0.0
        %1715 = vmatprep.subr.mxu0 0.0
        %1716 = vmatpush1.msra.mxu0 0.0
        %1717 = vmatprep.subr.mxu0 0.0
        %1718 = vmatpush1.msra.mxu0 0.0
        %1719 = vmatprep.subr.mxu0 0.0
        %1720 = vmatpush1.msra.mxu0 0.0
        %1721 = vmatprep.subr.mxu0 0.0
        %1722 = vmatpush1.msra.mxu0 0.0
        %1723 = vmatprep.subr.mxu0 0.0
        %1724 = vmatpush1.msra.mxu0 0.0
        %1725 = vmatprep.subr.mxu0 0.0
        %1726 = vmatpush1.msra.mxu0 0.0
        %1727 = vmatprep.subr.mxu0 0.0
        %1728 = vmatpush1.msra.mxu0 0.0
        %1729 = vmatprep.subr.mxu0 0.0
        %1730 = vmatpush1.msra.mxu0 0.0
        %1731 = vmatprep.subr.mxu0 0.0
        %1732 = vmatpush1.msra.mxu0 0.0
        %1733 = vmatprep.subr.mxu0 0.0
        %1734 = vmatpush1.msra.mxu0 0.0
        %1735 = vmatprep.subr.mxu0 0.0
        %1736 = vmatpush1.msra.mxu0 0.0
        %1737 = vmatprep.subr.mxu0 0.0
        %1738 = vmatpush1.msra.mxu0 0.0
        %1739 = vmatprep.mubr.f32.mxu0 0.0
        %1740 = vmatmul.mubr.f32.gmra.mrb[0].mxu0 %v1673
        %v1741 = vpop.f32.mrb[0].mxu0
        %v1742 = vadd.f32 0.0, %v1741
        %v1743 = vpop.f32.mrb[0].mxu0
        %1744 = vdwg.mxu0
        %1745 = vxpose.xlu0.b32.start [1/16] %v662, 128
        %1746 = vxpose.xlu0.b32.cont [2/16] 0.0, 128
        %1747 = vxpose.xlu0.b32.cont [3/16] 0.0, 128
        %1748 = vxpose.xlu0.b32.cont [4/16] 0.0, 128
        %1749 = vxpose.xlu0.b32.cont [5/16] 0.0, 128
        %1750 = vxpose.xlu0.b32.cont [6/16] 0.0, 128
        %1751 = vxpose.xlu0.b32.cont [7/16] 0.0, 128
        %1752 = vxpose.xlu0.b32.cont [8/16] 0.0, 128
        %1753 = vxpose.xlu0.b32.cont [9/16] 0.0, 128
        %1754 = vxpose.xlu0.b32.cont [10/16] 0.0, 128
        %1755 = vxpose.xlu0.b32.cont [11/16] 0.0, 128
        %1756 = vxpose.xlu0.b32.cont [12/16] 0.0, 128
        %1757 = vxpose.xlu0.b32.cont [13/16] 0.0, 128
        %1758 = vxpose.xlu0.b32.cont [14/16] 0.0, 128
        %1759 = vxpose.xlu0.b32.cont [15/16] 0.0, 128
        %1760 = vxpose.xlu0.b32.end [16/16] 0.0, 128
        %v1761 = vpop.trf.xlu0
        %v1762 = vpop.trf.xlu0
        %v1763 = vpop.trf.xlu0
        %v1764 = vpop.trf.xlu0
        %v1765 = vpop.trf.xlu0
        %v1766 = vpop.trf.xlu0
        %v1767 = vpop.trf.xlu0
        %v1768 = vpop.trf.xlu0
        %v1769 = vpop.trf.xlu0
        %v1770 = vpop.trf.xlu0
        %v1771 = vpop.trf.xlu0
        %v1772 = vpop.trf.xlu0
        %v1773 = vpop.trf.xlu0
        %v1774 = vpop.trf.xlu0
        %v1775 = vpop.trf.xlu0
        %v1776 = vpop.trf.xlu0
        %v1778 = vsel %vm1041, %v1761, 0
        %1780 = vmatprep.subr.mxu0 0.0
        %1781 = vmatpush1.msra.mxu0 %v834
        %1782 = vmatprep.subr.mxu0 0.0
        %1783 = vmatpush1.msra.mxu0 0.0
        %1784 = vmatprep.subr.mxu0 0.0
        %1785 = vmatpush1.msra.mxu0 0.0
        %1786 = vmatprep.subr.mxu0 0.0
        %1787 = vmatpush1.msra.mxu0 0.0
        %1788 = vmatprep.subr.mxu0 0.0
        %1789 = vmatpush1.msra.mxu0 0.0
        %1790 = vmatprep.subr.mxu0 0.0
        %1791 = vmatpush1.msra.mxu0 0.0
        %1792 = vmatprep.subr.mxu0 0.0
        %1793 = vmatpush1.msra.mxu0 0.0
        %1794 = vmatprep.subr.mxu0 0.0
        %1795 = vmatpush1.msra.mxu0 0.0
        %1796 = vmatprep.subr.mxu0 0.0
        %1797 = vmatpush1.msra.mxu0 0.0
        %1798 = vmatprep.subr.mxu0 0.0
        %1799 = vmatpush1.msra.mxu0 0.0
        %1800 = vmatprep.subr.mxu0 0.0
        %1801 = vmatpush1.msra.mxu0 0.0
        %1802 = vmatprep.subr.mxu0 0.0
        %1803 = vmatpush1.msra.mxu0 0.0
        %1804 = vmatprep.subr.mxu0 0.0
        %1805 = vmatpush1.msra.mxu0 0.0
        %1806 = vmatprep.subr.mxu0 0.0
        %1807 = vmatpush1.msra.mxu0 0.0
        %1808 = vmatprep.subr.mxu0 0.0
        %1809 = vmatpush1.msra.mxu0 0.0
        %1810 = vmatprep.subr.mxu0 0.0
        %1811 = vmatpush1.msra.mxu0 0.0
        %1812 = vmatprep.subr.mxu0 0.0
        %1813 = vmatpush1.msra.mxu0 0.0
        %1814 = vmatprep.subr.mxu0 0.0
        %1815 = vmatpush1.msra.mxu0 0.0
        %1816 = vmatprep.subr.mxu0 0.0
        %1817 = vmatpush1.msra.mxu0 0.0
        %1818 = vmatprep.subr.mxu0 0.0
        %1819 = vmatpush1.msra.mxu0 0.0
        %1820 = vmatprep.subr.mxu0 0.0
        %1821 = vmatpush1.msra.mxu0 0.0
        %1822 = vmatprep.subr.mxu0 0.0
        %1823 = vmatpush1.msra.mxu0 0.0
        %1824 = vmatprep.subr.mxu0 0.0
        %1825 = vmatpush1.msra.mxu0 0.0
        %1826 = vmatprep.subr.mxu0 0.0
        %1827 = vmatpush1.msra.mxu0 0.0
        %1828 = vmatprep.subr.mxu0 0.0
        %1829 = vmatpush1.msra.mxu0 0.0
        %1830 = vmatprep.subr.mxu0 0.0
        %1831 = vmatpush1.msra.mxu0 0.0
        %1832 = vmatprep.subr.mxu0 0.0
        %1833 = vmatpush1.msra.mxu0 0.0
        %1834 = vmatprep.subr.mxu0 0.0
        %1835 = vmatpush1.msra.mxu0 0.0
        %1836 = vmatprep.subr.mxu0 0.0
        %1837 = vmatpush1.msra.mxu0 0.0
        %1838 = vmatprep.subr.mxu0 0.0
        %1839 = vmatpush1.msra.mxu0 0.0
        %1840 = vmatprep.subr.mxu0 0.0
        %1841 = vmatpush1.msra.mxu0 0.0
        %1842 = vmatprep.subr.mxu0 0.0
        %1843 = vmatpush1.msra.mxu0 0.0
        %1844 = vmatprep.mubr.f32.mxu0 0.0
        %1845 = vmatmul.mubr.f32.gmra.mrb[0].mxu0 %v1778
        %v1846 = vpop.f32.mrb[0].mxu0
        %v1847 = vadd.f32 0.0, %v1846
        %v1848 = vpop.f32.mrb[0].mxu0
        %1849 = vdwg.mxu0
        %v1850 = vsel %vm1041, %v1112, -inf
        %1851 = vmax.xlane.f32.xlu0 %v1850
        %v1852 = vpop.xlane.xlu0 %1851
        %v1853 = vsel %vm1041, %v1217, -inf
        %1854 = vmax.xlane.f32.xlu0 %v1853
        %v1855 = vpop.xlane.xlu0 %1854
        %v1856 = vsel %vm1041, %v1322, -inf
        %1857 = vmax.xlane.f32.xlu0 %v1856
        %v1858 = vpop.xlane.xlu0 %1857
        %v1859 = vsel %vm1041, %v1427, -inf
        %1860 = vmax.xlane.f32.xlu0 %v1859
        %v1861 = vpop.xlane.xlu0 %1860
        %v1862 = vsel %vm1041, %v1532, -inf
        %1863 = vmax.xlane.f32.xlu0 %v1862
        %v1864 = vpop.xlane.xlu0 %1863
        %v1865 = vsel %vm1041, %v1637, -inf
        %1866 = vmax.xlane.f32.xlu0 %v1865
        %v1867 = vpop.xlane.xlu0 %1866
        %v1868 = vsel %vm1041, %v1742, -inf
        %1869 = vmax.xlane.f32.xlu0 %v1868
        %v1870 = vpop.xlane.xlu0 %1869
        %v1871 = vsel %vm1041, %v1847, -inf
        %1872 = vmax.xlane.f32.xlu0 %v1871
        %v1873 = vpop.xlane.xlu0 %1872
        %v1874 = vsub.f32 %v1112, %v1852
        %v1875 = vsub.f32 %v1217, %v1855
        %v1876 = vsub.f32 %v1322, %v1858
        %v1877 = vsub.f32 %v1427, %v1861
        %v1878 = vsub.f32 %v1532, %v1864
        %v1879 = vsub.f32 %v1637, %v1867
        %v1880 = vsub.f32 %v1742, %v1870
        %v1881 = vsub.f32 %v1847, %v1873
        %v1882 = vmul.f32 %v1874, 1.442695
        %v1883 = vpow.pop %v1882
        %v1884 = vmul.f32 %v1875, 1.442695
        %v1885 = vpow.pop %v1884
        %v1886 = vmul.f32 %v1876, 1.442695
        %v1887 = vpow.pop %v1886
        %v1888 = vmul.f32 %v1877, 1.442695
        %v1889 = vpow.pop %v1888
        %v1890 = vmul.f32 %v1878, 1.442695
        %v1891 = vpow.pop %v1890
        %v1892 = vmul.f32 %v1879, 1.442695
        %v1893 = vpow.pop %v1892
        %v1894 = vmul.f32 %v1880, 1.442695
        %v1895 = vpow.pop %v1894
        %v1896 = vmul.f32 %v1881, 1.442695
        %v1897 = vpow.pop %v1896
        %v1898 = vsel %vm1041, %v1883, 0.0
        %1899 = vadd.xlane.f32.xlu0 %v1898
        %v1900 = vpop.xlane.xlu0 %1899
        %v1901 = vsel %vm1041, %v1885, 0.0
        %1902 = vadd.xlane.f32.xlu0 %v1901
        %v1903 = vpop.xlane.xlu0 %1902
        %v1904 = vsel %vm1041, %v1887, 0.0
        %1905 = vadd.xlane.f32.xlu0 %v1904
        %v1906 = vpop.xlane.xlu0 %1905
        %v1907 = vsel %vm1041, %v1889, 0.0
        %1908 = vadd.xlane.f32.xlu0 %v1907
        %v1909 = vpop.xlane.xlu0 %1908
        %v1910 = vsel %vm1041, %v1891, 0.0
        %1911 = vadd.xlane.f32.xlu0 %v1910
        %v1912 = vpop.xlane.xlu0 %1911
        %v1913 = vsel %vm1041, %v1893, 0.0
        %1914 = vadd.xlane.f32.xlu0 %v1913
        %v1915 = vpop.xlane.xlu0 %1914
        %v1916 = vsel %vm1041, %v1895, 0.0
        %1917 = vadd.xlane.f32.xlu0 %v1916
        %v1918 = vpop.xlane.xlu0 %1917
        %v1919 = vsel %vm1041, %v1897, 0.0
        %1920 = vadd.xlane.f32.xlu0 %v1919
        %v1921 = vpop.xlane.xlu0 %1920
        %v1922 = vrcp.pop %v1900
        %v1923 = vmul.f32 %v1883, %v1922
        %v1924 = vrcp.pop %v1903
        %v1925 = vmul.f32 %v1885, %v1924
        %v1926 = vrcp.pop %v1906
        %v1927 = vmul.f32 %v1887, %v1926
        %v1928 = vrcp.pop %v1909
        %v1929 = vmul.f32 %v1889, %v1928
        %v1930 = vrcp.pop %v1912
        %v1931 = vmul.f32 %v1891, %v1930
        %v1932 = vrcp.pop %v1915
        %v1933 = vmul.f32 %v1893, %v1932
        %v1934 = vrcp.pop %v1918
        %v1935 = vmul.f32 %v1895, %v1934
        %v1936 = vrcp.pop %v1921
        %v1937 = vmul.f32 %v1897, %v1936
        %1938 = vst.msk [vmem:[%s436] sm:$0xff] %vm1041, %v1923
        %1939 = vst.msk [vmem:[%s436 + $0x8] sm:$0xff] %vm1041, %v1925
        %1940 = vst.msk [vmem:[%s436 + $0x10] sm:$0xff] %vm1041, %v1927
        %1941 = vst.msk [vmem:[%s436 + $0x18] sm:$0xff] %vm1041, %v1929
        %1942 = vst.msk [vmem:[%s436 + $0x20] sm:$0xff] %vm1041, %v1931
        %1943 = vst.msk [vmem:[%s436 + $0x28] sm:$0xff] %vm1041, %v1933
        %1944 = vst.msk [vmem:[%s436 + $0x30] sm:$0xff] %vm1041, %v1935
        %1945 = vst.msk [vmem:[%s436 + $0x38] sm:$0xff] %vm1041, %v1937
        %v1947 = vsel %vm1041, %v1923, 0
        %v1950 = vsel %vm1041, %v971, 0
        %1952 = vmatprep.subr.mxu0 0.0
        %1953 = vmatpush1.xpose.msra.mxu0 %v1950
        %1954 = vmatprep.subr.mxu0 0.0
        %1955 = vmatpush1.xpose.msra.mxu0 0.0
        %1956 = vmatprep.subr.mxu0 0.0
        %1957 = vmatpush1.xpose.msra.mxu0 0.0
        %1958 = vmatprep.subr.mxu0 0.0
        %1959 = vmatpush1.xpose.msra.mxu0 0.0
        %1960 = vmatprep.subr.mxu0 0.0
        %1961 = vmatpush1.xpose.msra.mxu0 0.0
        %1962 = vmatprep.subr.mxu0 0.0
        %1963 = vmatpush1.xpose.msra.mxu0 0.0
        %1964 = vmatprep.subr.mxu0 0.0
        %1965 = vmatpush1.xpose.msra.mxu0 0.0
        %1966 = vmatprep.subr.mxu0 0.0
        %1967 = vmatpush1.xpose.msra.mxu0 0.0
        %1968 = vmatprep.subr.mxu0 0.0
        %1969 = vmatpush1.xpose.msra.mxu0 0.0
        %1970 = vmatprep.subr.mxu0 0.0
        %1971 = vmatpush1.xpose.msra.mxu0 0.0
        %1972 = vmatprep.subr.mxu0 0.0
        %1973 = vmatpush1.xpose.msra.mxu0 0.0
        %1974 = vmatprep.subr.mxu0 0.0
        %1975 = vmatpush1.xpose.msra.mxu0 0.0
        %1976 = vmatprep.subr.mxu0 0.0
        %1977 = vmatpush1.xpose.msra.mxu0 0.0
        %1978 = vmatprep.subr.mxu0 0.0
        %1979 = vmatpush1.xpose.msra.mxu0 0.0
        %1980 = vmatprep.subr.mxu0 0.0
        %1981 = vmatpush1.xpose.msra.mxu0 0.0
        %1982 = vmatprep.subr.mxu0 0.0
        %1983 = vmatpush1.xpose.msra.mxu0 0.0
        %1984 = vmatprep.subr.mxu0 0.0
        %1985 = vmatpush1.xpose.msra.mxu0 0.0
        %1986 = vmatprep.subr.mxu0 0.0
        %1987 = vmatpush1.xpose.msra.mxu0 0.0
        %1988 = vmatprep.subr.mxu0 0.0
        %1989 = vmatpush1.xpose.msra.mxu0 0.0
        %1990 = vmatprep.subr.mxu0 0.0
        %1991 = vmatpush1.xpose.msra.mxu0 0.0
        %1992 = vmatprep.subr.mxu0 0.0
        %1993 = vmatpush1.xpose.msra.mxu0 0.0
        %1994 = vmatprep.subr.mxu0 0.0
        %1995 = vmatpush1.xpose.msra.mxu0 0.0
        %1996 = vmatprep.subr.mxu0 0.0
        %1997 = vmatpush1.xpose.msra.mxu0 0.0
        %1998 = vmatprep.subr.mxu0 0.0
        %1999 = vmatpush1.xpose.msra.mxu0 0.0
        %2000 = vmatprep.subr.mxu0 0.0
        %2001 = vmatpush1.xpose.msra.mxu0 0.0
        %2002 = vmatprep.subr.mxu0 0.0
        %2003 = vmatpush1.xpose.msra.mxu0 0.0
        %2004 = vmatprep.subr.mxu0 0.0
        %2005 = vmatpush1.xpose.msra.mxu0 0.0
        %2006 = vmatprep.subr.mxu0 0.0
        %2007 = vmatpush1.xpose.msra.mxu0 0.0
        %2008 = vmatprep.subr.mxu0 0.0
        %2009 = vmatpush1.xpose.msra.mxu0 0.0
        %2010 = vmatprep.subr.mxu0 0.0
        %2011 = vmatpush1.xpose.msra.mxu0 0.0
        %2012 = vmatprep.subr.mxu0 0.0
        %2013 = vmatpush1.xpose.msra.mxu0 0.0
        %2014 = vmatprep.subr.mxu0 0.0
        %2015 = vmatpush1.xpose.msra.mxu0 0.0
        %2016 = vmatprep.mubr.f32.mxu0 0.0
        %2017 = vmatmul.mubr.f32.gmra.mrb[0].mxu0 %v1947
        %v2018 = vpop.f32.mrb[0].mxu0
        %v2019 = vadd.f32 0.0, %v2018
        %v2020 = vpop.f32.mrb[0].mxu0
        %2021 = vdwg.mxu0
        %v2023 = vsel %vm1041, %v1925, 0
        %v2026 = vsel %vm1041, %v976, 0
        %2028 = vmatprep.subr.mxu0 0.0
        %2029 = vmatpush1.xpose.msra.mxu0 %v2026
        %2030 = vmatprep.subr.mxu0 0.0
        %2031 = vmatpush1.xpose.msra.mxu0 0.0
        %2032 = vmatprep.subr.mxu0 0.0
        %2033 = vmatpush1.xpose.msra.mxu0 0.0
        %2034 = vmatprep.subr.mxu0 0.0
        %2035 = vmatpush1.xpose.msra.mxu0 0.0
        %2036 = vmatprep.subr.mxu0 0.0
        %2037 = vmatpush1.xpose.msra.mxu0 0.0
        %2038 = vmatprep.subr.mxu0 0.0
        %2039 = vmatpush1.xpose.msra.mxu0 0.0
        %2040 = vmatprep.subr.mxu0 0.0
        %2041 = vmatpush1.xpose.msra.mxu0 0.0
        %2042 = vmatprep.subr.mxu0 0.0
        %2043 = vmatpush1.xpose.msra.mxu0 0.0
        %2044 = vmatprep.subr.mxu0 0.0
        %2045 = vmatpush1.xpose.msra.mxu0 0.0
        %2046 = vmatprep.subr.mxu0 0.0
        %2047 = vmatpush1.xpose.msra.mxu0 0.0
        %2048 = vmatprep.subr.mxu0 0.0
        %2049 = vmatpush1.xpose.msra.mxu0 0.0
        %2050 = vmatprep.subr.mxu0 0.0
        %2051 = vmatpush1.xpose.msra.mxu0 0.0
        %2052 = vmatprep.subr.mxu0 0.0
        %2053 = vmatpush1.xpose.msra.mxu0 0.0
        %2054 = vmatprep.subr.mxu0 0.0
        %2055 = vmatpush1.xpose.msra.mxu0 0.0
        %2056 = vmatprep.subr.mxu0 0.0
        %2057 = vmatpush1.xpose.msra.mxu0 0.0
        %2058 = vmatprep.subr.mxu0 0.0
        %2059 = vmatpush1.xpose.msra.mxu0 0.0
        %2060 = vmatprep.subr.mxu0 0.0
        %2061 = vmatpush1.xpose.msra.mxu0 0.0
        %2062 = vmatprep.subr.mxu0 0.0
        %2063 = vmatpush1.xpose.msra.mxu0 0.0
        %2064 = vmatprep.subr.mxu0 0.0
        %2065 = vmatpush1.xpose.msra.mxu0 0.0
        %2066 = vmatprep.subr.mxu0 0.0
        %2067 = vmatpush1.xpose.msra.mxu0 0.0
        %2068 = vmatprep.subr.mxu0 0.0
        %2069 = vmatpush1.xpose.msra.mxu0 0.0
        %2070 = vmatprep.subr.mxu0 0.0
        %2071 = vmatpush1.xpose.msra.mxu0 0.0
        %2072 = vmatprep.subr.mxu0 0.0
        %2073 = vmatpush1.xpose.msra.mxu0 0.0
        %2074 = vmatprep.subr.mxu0 0.0
        %2075 = vmatpush1.xpose.msra.mxu0 0.0
        %2076 = vmatprep.subr.mxu0 0.0
        %2077 = vmatpush1.xpose.msra.mxu0 0.0
        %2078 = vmatprep.subr.mxu0 0.0
        %2079 = vmatpush1.xpose.msra.mxu0 0.0
        %2080 = vmatprep.subr.mxu0 0.0
        %2081 = vmatpush1.xpose.msra.mxu0 0.0
        %2082 = vmatprep.subr.mxu0 0.0
        %2083 = vmatpush1.xpose.msra.mxu0 0.0
        %2084 = vmatprep.subr.mxu0 0.0
        %2085 = vmatpush1.xpose.msra.mxu0 0.0
        %2086 = vmatprep.subr.mxu0 0.0
        %2087 = vmatpush1.xpose.msra.mxu0 0.0
        %2088 = vmatprep.subr.mxu0 0.0
        %2089 = vmatpush1.xpose.msra.mxu0 0.0
        %2090 = vmatprep.subr.mxu0 0.0
        %2091 = vmatpush1.xpose.msra.mxu0 0.0
        %2092 = vmatprep.mubr.f32.mxu0 0.0
        %2093 = vmatmul.mubr.f32.gmra.mrb[0].mxu0 %v2023
        %v2094 = vpop.f32.mrb[0].mxu0
        %v2095 = vadd.f32 0.0, %v2094
        %v2096 = vpop.f32.mrb[0].mxu0
        %2097 = vdwg.mxu0
        %v2099 = vsel %vm1041, %v1927, 0
        %v2102 = vsel %vm1041, %v981, 0
        %2104 = vmatprep.subr.mxu0 0.0
        %2105 = vmatpush1.xpose.msra.mxu0 %v2102
        %2106 = vmatprep.subr.mxu0 0.0
        %2107 = vmatpush1.xpose.msra.mxu0 0.0
        %2108 = vmatprep.subr.mxu0 0.0
        %2109 = vmatpush1.xpose.msra.mxu0 0.0
        %2110 = vmatprep.subr.mxu0 0.0
        %2111 = vmatpush1.xpose.msra.mxu0 0.0
        %2112 = vmatprep.subr.mxu0 0.0
        %2113 = vmatpush1.xpose.msra.mxu0 0.0
        %2114 = vmatprep.subr.mxu0 0.0
        %2115 = vmatpush1.xpose.msra.mxu0 0.0
        %2116 = vmatprep.subr.mxu0 0.0
        %2117 = vmatpush1.xpose.msra.mxu0 0.0
        %2118 = vmatprep.subr.mxu0 0.0
        %2119 = vmatpush1.xpose.msra.mxu0 0.0
        %2120 = vmatprep.subr.mxu0 0.0
        %2121 = vmatpush1.xpose.msra.mxu0 0.0
        %2122 = vmatprep.subr.mxu0 0.0
        %2123 = vmatpush1.xpose.msra.mxu0 0.0
        %2124 = vmatprep.subr.mxu0 0.0
        %2125 = vmatpush1.xpose.msra.mxu0 0.0
        %2126 = vmatprep.subr.mxu0 0.0
        %2127 = vmatpush1.xpose.msra.mxu0 0.0
        %2128 = vmatprep.subr.mxu0 0.0
        %2129 = vmatpush1.xpose.msra.mxu0 0.0
        %2130 = vmatprep.subr.mxu0 0.0
        %2131 = vmatpush1.xpose.msra.mxu0 0.0
        %2132 = vmatprep.subr.mxu0 0.0
        %2133 = vmatpush1.xpose.msra.mxu0 0.0
        %2134 = vmatprep.subr.mxu0 0.0
        %2135 = vmatpush1.xpose.msra.mxu0 0.0
        %2136 = vmatprep.subr.mxu0 0.0
        %2137 = vmatpush1.xpose.msra.mxu0 0.0
        %2138 = vmatprep.subr.mxu0 0.0
        %2139 = vmatpush1.xpose.msra.mxu0 0.0
        %2140 = vmatprep.subr.mxu0 0.0
        %2141 = vmatpush1.xpose.msra.mxu0 0.0
        %2142 = vmatprep.subr.mxu0 0.0
        %2143 = vmatpush1.xpose.msra.mxu0 0.0
        %2144 = vmatprep.subr.mxu0 0.0
        %2145 = vmatpush1.xpose.msra.mxu0 0.0
        %2146 = vmatprep.subr.mxu0 0.0
        %2147 = vmatpush1.xpose.msra.mxu0 0.0
        %2148 = vmatprep.subr.mxu0 0.0
        %2149 = vmatpush1.xpose.msra.mxu0 0.0
        %2150 = vmatprep.subr.mxu0 0.0
        %2151 = vmatpush1.xpose.msra.mxu0 0.0
        %2152 = vmatprep.subr.mxu0 0.0
        %2153 = vmatpush1.xpose.msra.mxu0 0.0
        %2154 = vmatprep.subr.mxu0 0.0
        %2155 = vmatpush1.xpose.msra.mxu0 0.0
        %2156 = vmatprep.subr.mxu0 0.0
        %2157 = vmatpush1.xpose.msra.mxu0 0.0
        %2158 = vmatprep.subr.mxu0 0.0
        %2159 = vmatpush1.xpose.msra.mxu0 0.0
        %2160 = vmatprep.subr.mxu0 0.0
        %2161 = vmatpush1.xpose.msra.mxu0 0.0
        %2162 = vmatprep.subr.mxu0 0.0
        %2163 = vmatpush1.xpose.msra.mxu0 0.0
        %2164 = vmatprep.subr.mxu0 0.0
        %2165 = vmatpush1.xpose.msra.mxu0 0.0
        %2166 = vmatprep.subr.mxu0 0.0
        %2167 = vmatpush1.xpose.msra.mxu0 0.0
        %2168 = vmatprep.mubr.f32.mxu0 0.0
        %2169 = vmatmul.mubr.f32.gmra.mrb[0].mxu0 %v2099
        %v2170 = vpop.f32.mrb[0].mxu0
        %v2171 = vadd.f32 0.0, %v2170
        %v2172 = vpop.f32.mrb[0].mxu0
        %2173 = vdwg.mxu0
        %v2175 = vsel %vm1041, %v1929, 0
        %v2178 = vsel %vm1041, %v986, 0
        %2180 = vmatprep.subr.mxu0 0.0
        %2181 = vmatpush1.xpose.msra.mxu0 %v2178
        %2182 = vmatprep.subr.mxu0 0.0
        %2183 = vmatpush1.xpose.msra.mxu0 0.0
        %2184 = vmatprep.subr.mxu0 0.0
        %2185 = vmatpush1.xpose.msra.mxu0 0.0
        %2186 = vmatprep.subr.mxu0 0.0
        %2187 = vmatpush1.xpose.msra.mxu0 0.0
        %2188 = vmatprep.subr.mxu0 0.0
        %2189 = vmatpush1.xpose.msra.mxu0 0.0
        %2190 = vmatprep.subr.mxu0 0.0
        %2191 = vmatpush1.xpose.msra.mxu0 0.0
        %2192 = vmatprep.subr.mxu0 0.0
        %2193 = vmatpush1.xpose.msra.mxu0 0.0
        %2194 = vmatprep.subr.mxu0 0.0
        %2195 = vmatpush1.xpose.msra.mxu0 0.0
        %2196 = vmatprep.subr.mxu0 0.0
        %2197 = vmatpush1.xpose.msra.mxu0 0.0
        %2198 = vmatprep.subr.mxu0 0.0
        %2199 = vmatpush1.xpose.msra.mxu0 0.0
        %2200 = vmatprep.subr.mxu0 0.0
        %2201 = vmatpush1.xpose.msra.mxu0 0.0
        %2202 = vmatprep.subr.mxu0 0.0
        %2203 = vmatpush1.xpose.msra.mxu0 0.0
        %2204 = vmatprep.subr.mxu0 0.0
        %2205 = vmatpush1.xpose.msra.mxu0 0.0
        %2206 = vmatprep.subr.mxu0 0.0
        %2207 = vmatpush1.xpose.msra.mxu0 0.0
        %2208 = vmatprep.subr.mxu0 0.0
        %2209 = vmatpush1.xpose.msra.mxu0 0.0
        %2210 = vmatprep.subr.mxu0 0.0
        %2211 = vmatpush1.xpose.msra.mxu0 0.0
        %2212 = vmatprep.subr.mxu0 0.0
        %2213 = vmatpush1.xpose.msra.mxu0 0.0
        %2214 = vmatprep.subr.mxu0 0.0
        %2215 = vmatpush1.xpose.msra.mxu0 0.0
        %2216 = vmatprep.subr.mxu0 0.0
        %2217 = vmatpush1.xpose.msra.mxu0 0.0
        %2218 = vmatprep.subr.mxu0 0.0
        %2219 = vmatpush1.xpose.msra.mxu0 0.0
        %2220 = vmatprep.subr.mxu0 0.0
        %2221 = vmatpush1.xpose.msra.mxu0 0.0
        %2222 = vmatprep.subr.mxu0 0.0
        %2223 = vmatpush1.xpose.msra.mxu0 0.0
        %2224 = vmatprep.subr.mxu0 0.0
        %2225 = vmatpush1.xpose.msra.mxu0 0.0
        %2226 = vmatprep.subr.mxu0 0.0
        %2227 = vmatpush1.xpose.msra.mxu0 0.0
        %2228 = vmatprep.subr.mxu0 0.0
        %2229 = vmatpush1.xpose.msra.mxu0 0.0
        %2230 = vmatprep.subr.mxu0 0.0
        %2231 = vmatpush1.xpose.msra.mxu0 0.0
        %2232 = vmatprep.subr.mxu0 0.0
        %2233 = vmatpush1.xpose.msra.mxu0 0.0
        %2234 = vmatprep.subr.mxu0 0.0
        %2235 = vmatpush1.xpose.msra.mxu0 0.0
        %2236 = vmatprep.subr.mxu0 0.0
        %2237 = vmatpush1.xpose.msra.mxu0 0.0
        %2238 = vmatprep.subr.mxu0 0.0
        %2239 = vmatpush1.xpose.msra.mxu0 0.0
        %2240 = vmatprep.subr.mxu0 0.0
        %2241 = vmatpush1.xpose.msra.mxu0 0.0
        %2242 = vmatprep.subr.mxu0 0.0
        %2243 = vmatpush1.xpose.msra.mxu0 0.0
        %2244 = vmatprep.mubr.f32.mxu0 0.0
        %2245 = vmatmul.mubr.f32.gmra.mrb[0].mxu0 %v2175
        %v2246 = vpop.f32.mrb[0].mxu0
        %v2247 = vadd.f32 0.0, %v2246
        %v2248 = vpop.f32.mrb[0].mxu0
        %2249 = vdwg.mxu0
        %v2251 = vsel %vm1041, %v1931, 0
        %v2254 = vsel %vm1041, %v991, 0
        %2256 = vmatprep.subr.mxu0 0.0
        %2257 = vmatpush1.xpose.msra.mxu0 %v2254
        %2258 = vmatprep.subr.mxu0 0.0
        %2259 = vmatpush1.xpose.msra.mxu0 0.0
        %2260 = vmatprep.subr.mxu0 0.0
        %2261 = vmatpush1.xpose.msra.mxu0 0.0
        %2262 = vmatprep.subr.mxu0 0.0
        %2263 = vmatpush1.xpose.msra.mxu0 0.0
        %2264 = vmatprep.subr.mxu0 0.0
        %2265 = vmatpush1.xpose.msra.mxu0 0.0
        %2266 = vmatprep.subr.mxu0 0.0
        %2267 = vmatpush1.xpose.msra.mxu0 0.0
        %2268 = vmatprep.subr.mxu0 0.0
        %2269 = vmatpush1.xpose.msra.mxu0 0.0
        %2270 = vmatprep.subr.mxu0 0.0
        %2271 = vmatpush1.xpose.msra.mxu0 0.0
        %2272 = vmatprep.subr.mxu0 0.0
        %2273 = vmatpush1.xpose.msra.mxu0 0.0
        %2274 = vmatprep.subr.mxu0 0.0
        %2275 = vmatpush1.xpose.msra.mxu0 0.0
        %2276 = vmatprep.subr.mxu0 0.0
        %2277 = vmatpush1.xpose.msra.mxu0 0.0
        %2278 = vmatprep.subr.mxu0 0.0
        %2279 = vmatpush1.xpose.msra.mxu0 0.0
        %2280 = vmatprep.subr.mxu0 0.0
        %2281 = vmatpush1.xpose.msra.mxu0 0.0
        %2282 = vmatprep.subr.mxu0 0.0
        %2283 = vmatpush1.xpose.msra.mxu0 0.0
        %2284 = vmatprep.subr.mxu0 0.0
        %2285 = vmatpush1.xpose.msra.mxu0 0.0
        %2286 = vmatprep.subr.mxu0 0.0
        %2287 = vmatpush1.xpose.msra.mxu0 0.0
        %2288 = vmatprep.subr.mxu0 0.0
        %2289 = vmatpush1.xpose.msra.mxu0 0.0
        %2290 = vmatprep.subr.mxu0 0.0
        %2291 = vmatpush1.xpose.msra.mxu0 0.0
        %2292 = vmatprep.subr.mxu0 0.0
        %2293 = vmatpush1.xpose.msra.mxu0 0.0
        %2294 = vmatprep.subr.mxu0 0.0
        %2295 = vmatpush1.xpose.msra.mxu0 0.0
        %2296 = vmatprep.subr.mxu0 0.0
        %2297 = vmatpush1.xpose.msra.mxu0 0.0
        %2298 = vmatprep.subr.mxu0 0.0
        %2299 = vmatpush1.xpose.msra.mxu0 0.0
        %2300 = vmatprep.subr.mxu0 0.0
        %2301 = vmatpush1.xpose.msra.mxu0 0.0
        %2302 = vmatprep.subr.mxu0 0.0
        %2303 = vmatpush1.xpose.msra.mxu0 0.0
        %2304 = vmatprep.subr.mxu0 0.0
        %2305 = vmatpush1.xpose.msra.mxu0 0.0
        %2306 = vmatprep.subr.mxu0 0.0
        %2307 = vmatpush1.xpose.msra.mxu0 0.0
        %2308 = vmatprep.subr.mxu0 0.0
        %2309 = vmatpush1.xpose.msra.mxu0 0.0
        %2310 = vmatprep.subr.mxu0 0.0
        %2311 = vmatpush1.xpose.msra.mxu0 0.0
        %2312 = vmatprep.subr.mxu0 0.0
        %2313 = vmatpush1.xpose.msra.mxu0 0.0
        %2314 = vmatprep.subr.mxu0 0.0
        %2315 = vmatpush1.xpose.msra.mxu0 0.0
        %2316 = vmatprep.subr.mxu0 0.0
        %2317 = vmatpush1.xpose.msra.mxu0 0.0
        %2318 = vmatprep.subr.mxu0 0.0
        %2319 = vmatpush1.xpose.msra.mxu0 0.0
        %2320 = vmatprep.mubr.f32.mxu0 0.0
        %2321 = vmatmul.mubr.f32.gmra.mrb[0].mxu0 %v2251
        %v2322 = vpop.f32.mrb[0].mxu0
        %v2323 = vadd.f32 0.0, %v2322
        %v2324 = vpop.f32.mrb[0].mxu0
        %2325 = vdwg.mxu0
        %v2327 = vsel %vm1041, %v1933, 0
        %v2330 = vsel %vm1041, %v996, 0
        %2332 = vmatprep.subr.mxu0 0.0
        %2333 = vmatpush1.xpose.msra.mxu0 %v2330
        %2334 = vmatprep.subr.mxu0 0.0
        %2335 = vmatpush1.xpose.msra.mxu0 0.0
        %2336 = vmatprep.subr.mxu0 0.0
        %2337 = vmatpush1.xpose.msra.mxu0 0.0
        %2338 = vmatprep.subr.mxu0 0.0
        %2339 = vmatpush1.xpose.msra.mxu0 0.0
        %2340 = vmatprep.subr.mxu0 0.0
        %2341 = vmatpush1.xpose.msra.mxu0 0.0
        %2342 = vmatprep.subr.mxu0 0.0
        %2343 = vmatpush1.xpose.msra.mxu0 0.0
        %2344 = vmatprep.subr.mxu0 0.0
        %2345 = vmatpush1.xpose.msra.mxu0 0.0
        %2346 = vmatprep.subr.mxu0 0.0
        %2347 = vmatpush1.xpose.msra.mxu0 0.0
        %2348 = vmatprep.subr.mxu0 0.0
        %2349 = vmatpush1.xpose.msra.mxu0 0.0
        %2350 = vmatprep.subr.mxu0 0.0
        %2351 = vmatpush1.xpose.msra.mxu0 0.0
        %2352 = vmatprep.subr.mxu0 0.0
        %2353 = vmatpush1.xpose.msra.mxu0 0.0
        %2354 = vmatprep.subr.mxu0 0.0
        %2355 = vmatpush1.xpose.msra.mxu0 0.0
        %2356 = vmatprep.subr.mxu0 0.0
        %2357 = vmatpush1.xpose.msra.mxu0 0.0
        %2358 = vmatprep.subr.mxu0 0.0
        %2359 = vmatpush1.xpose.msra.mxu0 0.0
        %2360 = vmatprep.subr.mxu0 0.0
        %2361 = vmatpush1.xpose.msra.mxu0 0.0
        %2362 = vmatprep.subr.mxu0 0.0
        %2363 = vmatpush1.xpose.msra.mxu0 0.0
        %2364 = vmatprep.subr.mxu0 0.0
        %2365 = vmatpush1.xpose.msra.mxu0 0.0
        %2366 = vmatprep.subr.mxu0 0.0
        %2367 = vmatpush1.xpose.msra.mxu0 0.0
        %2368 = vmatprep.subr.mxu0 0.0
        %2369 = vmatpush1.xpose.msra.mxu0 0.0
        %2370 = vmatprep.subr.mxu0 0.0
        %2371 = vmatpush1.xpose.msra.mxu0 0.0
        %2372 = vmatprep.subr.mxu0 0.0
        %2373 = vmatpush1.xpose.msra.mxu0 0.0
        %2374 = vmatprep.subr.mxu0 0.0
        %2375 = vmatpush1.xpose.msra.mxu0 0.0
        %2376 = vmatprep.subr.mxu0 0.0
        %2377 = vmatpush1.xpose.msra.mxu0 0.0
        %2378 = vmatprep.subr.mxu0 0.0
        %2379 = vmatpush1.xpose.msra.mxu0 0.0
        %2380 = vmatprep.subr.mxu0 0.0
        %2381 = vmatpush1.xpose.msra.mxu0 0.0
        %2382 = vmatprep.subr.mxu0 0.0
        %2383 = vmatpush1.xpose.msra.mxu0 0.0
        %2384 = vmatprep.subr.mxu0 0.0
        %2385 = vmatpush1.xpose.msra.mxu0 0.0
        %2386 = vmatprep.subr.mxu0 0.0
        %2387 = vmatpush1.xpose.msra.mxu0 0.0
        %2388 = vmatprep.subr.mxu0 0.0
        %2389 = vmatpush1.xpose.msra.mxu0 0.0
        %2390 = vmatprep.subr.mxu0 0.0
        %2391 = vmatpush1.xpose.msra.mxu0 0.0
        %2392 = vmatprep.subr.mxu0 0.0
        %2393 = vmatpush1.xpose.msra.mxu0 0.0
        %2394 = vmatprep.subr.mxu0 0.0
        %2395 = vmatpush1.xpose.msra.mxu0 0.0
        %2396 = vmatprep.mubr.f32.mxu0 0.0
        %2397 = vmatmul.mubr.f32.gmra.mrb[0].mxu0 %v2327
        %v2398 = vpop.f32.mrb[0].mxu0
        %v2399 = vadd.f32 0.0, %v2398
        %v2400 = vpop.f32.mrb[0].mxu0
        %2401 = vdwg.mxu0
        %v2403 = vsel %vm1041, %v1935, 0
        %v2406 = vsel %vm1041, %v1001, 0
        %2408 = vmatprep.subr.mxu0 0.0
        %2409 = vmatpush1.xpose.msra.mxu0 %v2406
        %2410 = vmatprep.subr.mxu0 0.0
        %2411 = vmatpush1.xpose.msra.mxu0 0.0
        %2412 = vmatprep.subr.mxu0 0.0
        %2413 = vmatpush1.xpose.msra.mxu0 0.0
        %2414 = vmatprep.subr.mxu0 0.0
        %2415 = vmatpush1.xpose.msra.mxu0 0.0
        %2416 = vmatprep.subr.mxu0 0.0
        %2417 = vmatpush1.xpose.msra.mxu0 0.0
        %2418 = vmatprep.subr.mxu0 0.0
        %2419 = vmatpush1.xpose.msra.mxu0 0.0
        %2420 = vmatprep.subr.mxu0 0.0
        %2421 = vmatpush1.xpose.msra.mxu0 0.0
        %2422 = vmatprep.subr.mxu0 0.0
        %2423 = vmatpush1.xpose.msra.mxu0 0.0
        %2424 = vmatprep.subr.mxu0 0.0
        %2425 = vmatpush1.xpose.msra.mxu0 0.0
        %2426 = vmatprep.subr.mxu0 0.0
        %2427 = vmatpush1.xpose.msra.mxu0 0.0
        %2428 = vmatprep.subr.mxu0 0.0
        %2429 = vmatpush1.xpose.msra.mxu0 0.0
        %2430 = vmatprep.subr.mxu0 0.0
        %2431 = vmatpush1.xpose.msra.mxu0 0.0
        %2432 = vmatprep.subr.mxu0 0.0
        %2433 = vmatpush1.xpose.msra.mxu0 0.0
        %2434 = vmatprep.subr.mxu0 0.0
        %2435 = vmatpush1.xpose.msra.mxu0 0.0
        %2436 = vmatprep.subr.mxu0 0.0
        %2437 = vmatpush1.xpose.msra.mxu0 0.0
        %2438 = vmatprep.subr.mxu0 0.0
        %2439 = vmatpush1.xpose.msra.mxu0 0.0
        %2440 = vmatprep.subr.mxu0 0.0
        %2441 = vmatpush1.xpose.msra.mxu0 0.0
        %2442 = vmatprep.subr.mxu0 0.0
        %2443 = vmatpush1.xpose.msra.mxu0 0.0
        %2444 = vmatprep.subr.mxu0 0.0
        %2445 = vmatpush1.xpose.msra.mxu0 0.0
        %2446 = vmatprep.subr.mxu0 0.0
        %2447 = vmatpush1.xpose.msra.mxu0 0.0
        %2448 = vmatprep.subr.mxu0 0.0
        %2449 = vmatpush1.xpose.msra.mxu0 0.0
        %2450 = vmatprep.subr.mxu0 0.0
        %2451 = vmatpush1.xpose.msra.mxu0 0.0
        %2452 = vmatprep.subr.mxu0 0.0
        %2453 = vmatpush1.xpose.msra.mxu0 0.0
        %2454 = vmatprep.subr.mxu0 0.0
        %2455 = vmatpush1.xpose.msra.mxu0 0.0
        %2456 = vmatprep.subr.mxu0 0.0
        %2457 = vmatpush1.xpose.msra.mxu0 0.0
        %2458 = vmatprep.subr.mxu0 0.0
        %2459 = vmatpush1.xpose.msra.mxu0 0.0
        %2460 = vmatprep.subr.mxu0 0.0
        %2461 = vmatpush1.xpose.msra.mxu0 0.0
        %2462 = vmatprep.subr.mxu0 0.0
        %2463 = vmatpush1.xpose.msra.mxu0 0.0
        %2464 = vmatprep.subr.mxu0 0.0
        %2465 = vmatpush1.xpose.msra.mxu0 0.0
        %2466 = vmatprep.subr.mxu0 0.0
        %2467 = vmatpush1.xpose.msra.mxu0 0.0
        %2468 = vmatprep.subr.mxu0 0.0
        %2469 = vmatpush1.xpose.msra.mxu0 0.0
        %2470 = vmatprep.subr.mxu0 0.0
        %2471 = vmatpush1.xpose.msra.mxu0 0.0
        %2472 = vmatprep.mubr.f32.mxu0 0.0
        %2473 = vmatmul.mubr.f32.gmra.mrb[0].mxu0 %v2403
        %v2474 = vpop.f32.mrb[0].mxu0
        %v2475 = vadd.f32 0.0, %v2474
        %v2476 = vpop.f32.mrb[0].mxu0
        %2477 = vdwg.mxu0
        %v2479 = vsel %vm1041, %v1937, 0
        %v2482 = vsel %vm1041, %v1006, 0
        %2484 = vmatprep.subr.mxu0 0.0
        %2485 = vmatpush1.xpose.msra.mxu0 %v2482
        %2486 = vmatprep.subr.mxu0 0.0
        %2487 = vmatpush1.xpose.msra.mxu0 0.0
        %2488 = vmatprep.subr.mxu0 0.0
        %2489 = vmatpush1.xpose.msra.mxu0 0.0
        %2490 = vmatprep.subr.mxu0 0.0
        %2491 = vmatpush1.xpose.msra.mxu0 0.0
        %2492 = vmatprep.subr.mxu0 0.0
        %2493 = vmatpush1.xpose.msra.mxu0 0.0
        %2494 = vmatprep.subr.mxu0 0.0
        %2495 = vmatpush1.xpose.msra.mxu0 0.0
        %2496 = vmatprep.subr.mxu0 0.0
        %2497 = vmatpush1.xpose.msra.mxu0 0.0
        %2498 = vmatprep.subr.mxu0 0.0
        %2499 = vmatpush1.xpose.msra.mxu0 0.0
        %2500 = vmatprep.subr.mxu0 0.0
        %2501 = vmatpush1.xpose.msra.mxu0 0.0
        %2502 = vmatprep.subr.mxu0 0.0
        %2503 = vmatpush1.xpose.msra.mxu0 0.0
        %2504 = vmatprep.subr.mxu0 0.0
        %2505 = vmatpush1.xpose.msra.mxu0 0.0
        %2506 = vmatprep.subr.mxu0 0.0
        %2507 = vmatpush1.xpose.msra.mxu0 0.0
        %2508 = vmatprep.subr.mxu0 0.0
        %2509 = vmatpush1.xpose.msra.mxu0 0.0
        %2510 = vmatprep.subr.mxu0 0.0
        %2511 = vmatpush1.xpose.msra.mxu0 0.0
        %2512 = vmatprep.subr.mxu0 0.0
        %2513 = vmatpush1.xpose.msra.mxu0 0.0
        %2514 = vmatprep.subr.mxu0 0.0
        %2515 = vmatpush1.xpose.msra.mxu0 0.0
        %2516 = vmatprep.subr.mxu0 0.0
        %2517 = vmatpush1.xpose.msra.mxu0 0.0
        %2518 = vmatprep.subr.mxu0 0.0
        %2519 = vmatpush1.xpose.msra.mxu0 0.0
        %2520 = vmatprep.subr.mxu0 0.0
        %2521 = vmatpush1.xpose.msra.mxu0 0.0
        %2522 = vmatprep.subr.mxu0 0.0
        %2523 = vmatpush1.xpose.msra.mxu0 0.0
        %2524 = vmatprep.subr.mxu0 0.0
        %2525 = vmatpush1.xpose.msra.mxu0 0.0
        %2526 = vmatprep.subr.mxu0 0.0
        %2527 = vmatpush1.xpose.msra.mxu0 0.0
        %2528 = vmatprep.subr.mxu0 0.0
        %2529 = vmatpush1.xpose.msra.mxu0 0.0
        %2530 = vmatprep.subr.mxu0 0.0
        %2531 = vmatpush1.xpose.msra.mxu0 0.0
        %2532 = vmatprep.subr.mxu0 0.0
        %2533 = vmatpush1.xpose.msra.mxu0 0.0
        %2534 = vmatprep.subr.mxu0 0.0
        %2535 = vmatpush1.xpose.msra.mxu0 0.0
        %2536 = vmatprep.subr.mxu0 0.0
        %2537 = vmatpush1.xpose.msra.mxu0 0.0
        %2538 = vmatprep.subr.mxu0 0.0
        %2539 = vmatpush1.xpose.msra.mxu0 0.0
        %2540 = vmatprep.subr.mxu0 0.0
        %2541 = vmatpush1.xpose.msra.mxu0 0.0
        %2542 = vmatprep.subr.mxu0 0.0
        %2543 = vmatpush1.xpose.msra.mxu0 0.0
        %2544 = vmatprep.subr.mxu0 0.0
        %2545 = vmatpush1.xpose.msra.mxu0 0.0
        %2546 = vmatprep.subr.mxu0 0.0
        %2547 = vmatpush1.xpose.msra.mxu0 0.0
        %2548 = vmatprep.mubr.f32.mxu0 0.0
        %2549 = vmatmul.mubr.f32.gmra.mrb[0].mxu0 %v2479
        %v2550 = vpop.f32.mrb[0].mxu0
        %v2551 = vadd.f32 0.0, %v2550
        %v2552 = vpop.f32.mrb[0].mxu0
        %2553 = vdwg.mxu0
        %v2554 = vld [vmem:[#allocation8] sm:$0xff]
        %v2555 = vld [vmem:[#allocation8 + $0x8] sm:$0xff]
        %v2556 = vld [vmem:[#allocation8 + $0x10] sm:$0xff]
        %v2557 = vld [vmem:[#allocation8 + $0x18] sm:$0xff]
        %v2558 = vld [vmem:[#allocation8 + $0x20] sm:$0xff]
        %v2559 = vld [vmem:[#allocation8 + $0x28] sm:$0xff]
        %v2560 = vld [vmem:[#allocation8 + $0x30] sm:$0xff]
        %v2561 = vld [vmem:[#allocation8 + $0x38] sm:$0xff]
        %v2563 = vsel %vm1041, %v2019, 0
        %2565 = vmatprep.subr.mxu0 0.0
        %2566 = vmatpush1.msra.mxu0 %v2554
        %2567 = vmatprep.subr.mxu0 0.0
        %2568 = vmatpush1.msra.mxu0 0.0
        %2569 = vmatprep.subr.mxu0 0.0
        %2570 = vmatpush1.msra.mxu0 0.0
        %2571 = vmatprep.subr.mxu0 0.0
        %2572 = vmatpush1.msra.mxu0 0.0
        %2573 = vmatprep.subr.mxu0 0.0
        %2574 = vmatpush1.msra.mxu0 0.0
        %2575 = vmatprep.subr.mxu0 0.0
        %2576 = vmatpush1.msra.mxu0 0.0
        %2577 = vmatprep.subr.mxu0 0.0
        %2578 = vmatpush1.msra.mxu0 0.0
        %2579 = vmatprep.subr.mxu0 0.0
        %2580 = vmatpush1.msra.mxu0 0.0
        %2581 = vmatprep.subr.mxu0 0.0
        %2582 = vmatpush1.msra.mxu0 0.0
        %2583 = vmatprep.subr.mxu0 0.0
        %2584 = vmatpush1.msra.mxu0 0.0
        %2585 = vmatprep.subr.mxu0 0.0
        %2586 = vmatpush1.msra.mxu0 0.0
        %2587 = vmatprep.subr.mxu0 0.0
        %2588 = vmatpush1.msra.mxu0 0.0
        %2589 = vmatprep.subr.mxu0 0.0
        %2590 = vmatpush1.msra.mxu0 0.0
        %2591 = vmatprep.subr.mxu0 0.0
        %2592 = vmatpush1.msra.mxu0 0.0
        %2593 = vmatprep.subr.mxu0 0.0
        %2594 = vmatpush1.msra.mxu0 0.0
        %2595 = vmatprep.subr.mxu0 0.0
        %2596 = vmatpush1.msra.mxu0 0.0
        %2597 = vmatprep.subr.mxu0 0.0
        %2598 = vmatpush1.msra.mxu0 0.0
        %2599 = vmatprep.subr.mxu0 0.0
        %2600 = vmatpush1.msra.mxu0 0.0
        %2601 = vmatprep.subr.mxu0 0.0
        %2602 = vmatpush1.msra.mxu0 0.0
        %2603 = vmatprep.subr.mxu0 0.0
        %2604 = vmatpush1.msra.mxu0 0.0
        %2605 = vmatprep.subr.mxu0 0.0
        %2606 = vmatpush1.msra.mxu0 0.0
        %2607 = vmatprep.subr.mxu0 0.0
        %2608 = vmatpush1.msra.mxu0 0.0
        %2609 = vmatprep.subr.mxu0 0.0
        %2610 = vmatpush1.msra.mxu0 0.0
        %2611 = vmatprep.subr.mxu0 0.0
        %2612 = vmatpush1.msra.mxu0 0.0
        %2613 = vmatprep.subr.mxu0 0.0
        %2614 = vmatpush1.msra.mxu0 0.0
        %2615 = vmatprep.subr.mxu0 0.0
        %2616 = vmatpush1.msra.mxu0 0.0
        %2617 = vmatprep.subr.mxu0 0.0
        %2618 = vmatpush1.msra.mxu0 0.0
        %2619 = vmatprep.subr.mxu0 0.0
        %2620 = vmatpush1.msra.mxu0 0.0
        %2621 = vmatprep.subr.mxu0 0.0
        %2622 = vmatpush1.msra.mxu0 0.0
        %2623 = vmatprep.subr.mxu0 0.0
        %2624 = vmatpush1.msra.mxu0 0.0
        %2625 = vmatprep.subr.mxu0 0.0
        %2626 = vmatpush1.msra.mxu0 0.0
        %2627 = vmatprep.subr.mxu0 0.0
        %2628 = vmatpush1.msra.mxu0 0.0
        %2629 = vmatprep.mubr.f32.mxu0 0.0
        %2630 = vmatmul.mubr.f32.gmra.mrb[0].mxu0 %v2563
        %v2631 = vpop.f32.mrb[0].mxu0
        %v2632 = vadd.f32 0.0, %v2631
        %v2633 = vpop.f32.mrb[0].mxu0
        %2634 = vdwg.mxu0
        %v2636 = vsel %vm1041, %v2095, 0
        %2638 = vmatprep.subr.mxu0 0.0
        %2639 = vmatpush1.msra.mxu0 %v2555
        %2640 = vmatprep.subr.mxu0 0.0
        %2641 = vmatpush1.msra.mxu0 0.0
        %2642 = vmatprep.subr.mxu0 0.0
        %2643 = vmatpush1.msra.mxu0 0.0
        %2644 = vmatprep.subr.mxu0 0.0
        %2645 = vmatpush1.msra.mxu0 0.0
        %2646 = vmatprep.subr.mxu0 0.0
        %2647 = vmatpush1.msra.mxu0 0.0
        %2648 = vmatprep.subr.mxu0 0.0
        %2649 = vmatpush1.msra.mxu0 0.0
        %2650 = vmatprep.subr.mxu0 0.0
        %2651 = vmatpush1.msra.mxu0 0.0
        %2652 = vmatprep.subr.mxu0 0.0
        %2653 = vmatpush1.msra.mxu0 0.0
        %2654 = vmatprep.subr.mxu0 0.0
        %2655 = vmatpush1.msra.mxu0 0.0
        %2656 = vmatprep.subr.mxu0 0.0
        %2657 = vmatpush1.msra.mxu0 0.0
        %2658 = vmatprep.subr.mxu0 0.0
        %2659 = vmatpush1.msra.mxu0 0.0
        %2660 = vmatprep.subr.mxu0 0.0
        %2661 = vmatpush1.msra.mxu0 0.0
        %2662 = vmatprep.subr.mxu0 0.0
        %2663 = vmatpush1.msra.mxu0 0.0
        %2664 = vmatprep.subr.mxu0 0.0
        %2665 = vmatpush1.msra.mxu0 0.0
        %2666 = vmatprep.subr.mxu0 0.0
        %2667 = vmatpush1.msra.mxu0 0.0
        %2668 = vmatprep.subr.mxu0 0.0
        %2669 = vmatpush1.msra.mxu0 0.0
        %2670 = vmatprep.subr.mxu0 0.0
        %2671 = vmatpush1.msra.mxu0 0.0
        %2672 = vmatprep.subr.mxu0 0.0
        %2673 = vmatpush1.msra.mxu0 0.0
        %2674 = vmatprep.subr.mxu0 0.0
        %2675 = vmatpush1.msra.mxu0 0.0
        %2676 = vmatprep.subr.mxu0 0.0
        %2677 = vmatpush1.msra.mxu0 0.0
        %2678 = vmatprep.subr.mxu0 0.0
        %2679 = vmatpush1.msra.mxu0 0.0
        %2680 = vmatprep.subr.mxu0 0.0
        %2681 = vmatpush1.msra.mxu0 0.0
        %2682 = vmatprep.subr.mxu0 0.0
        %2683 = vmatpush1.msra.mxu0 0.0
        %2684 = vmatprep.subr.mxu0 0.0
        %2685 = vmatpush1.msra.mxu0 0.0
        %2686 = vmatprep.subr.mxu0 0.0
        %2687 = vmatpush1.msra.mxu0 0.0
        %2688 = vmatprep.subr.mxu0 0.0
        %2689 = vmatpush1.msra.mxu0 0.0
        %2690 = vmatprep.subr.mxu0 0.0
        %2691 = vmatpush1.msra.mxu0 0.0
        %2692 = vmatprep.subr.mxu0 0.0
        %2693 = vmatpush1.msra.mxu0 0.0
        %2694 = vmatprep.subr.mxu0 0.0
        %2695 = vmatpush1.msra.mxu0 0.0
        %2696 = vmatprep.subr.mxu0 0.0
        %2697 = vmatpush1.msra.mxu0 0.0
        %2698 = vmatprep.subr.mxu0 0.0
        %2699 = vmatpush1.msra.mxu0 0.0
        %2700 = vmatprep.subr.mxu0 0.0
        %2701 = vmatpush1.msra.mxu0 0.0
        %2702 = vmatprep.mubr.f32.mxu0 0.0
        %2703 = vmatmul.mubr.f32.gmra.mrb[0].mxu0 %v2636
        %v2704 = vpop.f32.mrb[0].mxu0
        %v2705 = vadd.f32 0.0, %v2704
        %v2706 = vpop.f32.mrb[0].mxu0
        %2707 = vdwg.mxu0
        %v2709 = vsel %vm1041, %v2171, 0
        %2711 = vmatprep.subr.mxu0 0.0
        %2712 = vmatpush1.msra.mxu0 %v2556
        %2713 = vmatprep.subr.mxu0 0.0
        %2714 = vmatpush1.msra.mxu0 0.0
        %2715 = vmatprep.subr.mxu0 0.0
        %2716 = vmatpush1.msra.mxu0 0.0
        %2717 = vmatprep.subr.mxu0 0.0
        %2718 = vmatpush1.msra.mxu0 0.0
        %2719 = vmatprep.subr.mxu0 0.0
        %2720 = vmatpush1.msra.mxu0 0.0
        %2721 = vmatprep.subr.mxu0 0.0
        %2722 = vmatpush1.msra.mxu0 0.0
        %2723 = vmatprep.subr.mxu0 0.0
        %2724 = vmatpush1.msra.mxu0 0.0
        %2725 = vmatprep.subr.mxu0 0.0
        %2726 = vmatpush1.msra.mxu0 0.0
        %2727 = vmatprep.subr.mxu0 0.0
        %2728 = vmatpush1.msra.mxu0 0.0
        %2729 = vmatprep.subr.mxu0 0.0
        %2730 = vmatpush1.msra.mxu0 0.0
        %2731 = vmatprep.subr.mxu0 0.0
        %2732 = vmatpush1.msra.mxu0 0.0
        %2733 = vmatprep.subr.mxu0 0.0
        %2734 = vmatpush1.msra.mxu0 0.0
        %2735 = vmatprep.subr.mxu0 0.0
        %2736 = vmatpush1.msra.mxu0 0.0
        %2737 = vmatprep.subr.mxu0 0.0
        %2738 = vmatpush1.msra.mxu0 0.0
        %2739 = vmatprep.subr.mxu0 0.0
        %2740 = vmatpush1.msra.mxu0 0.0
        %2741 = vmatprep.subr.mxu0 0.0
        %2742 = vmatpush1.msra.mxu0 0.0
        %2743 = vmatprep.subr.mxu0 0.0
        %2744 = vmatpush1.msra.mxu0 0.0
        %2745 = vmatprep.subr.mxu0 0.0
        %2746 = vmatpush1.msra.mxu0 0.0
        %2747 = vmatprep.subr.mxu0 0.0
        %2748 = vmatpush1.msra.mxu0 0.0
        %2749 = vmatprep.subr.mxu0 0.0
        %2750 = vmatpush1.msra.mxu0 0.0
        %2751 = vmatprep.subr.mxu0 0.0
        %2752 = vmatpush1.msra.mxu0 0.0
        %2753 = vmatprep.subr.mxu0 0.0
        %2754 = vmatpush1.msra.mxu0 0.0
        %2755 = vmatprep.subr.mxu0 0.0
        %2756 = vmatpush1.msra.mxu0 0.0
        %2757 = vmatprep.subr.mxu0 0.0
        %2758 = vmatpush1.msra.mxu0 0.0
        %2759 = vmatprep.subr.mxu0 0.0
        %2760 = vmatpush1.msra.mxu0 0.0
        %2761 = vmatprep.subr.mxu0 0.0
        %2762 = vmatpush1.msra.mxu0 0.0
        %2763 = vmatprep.subr.mxu0 0.0
        %2764 = vmatpush1.msra.mxu0 0.0
        %2765 = vmatprep.subr.mxu0 0.0
        %2766 = vmatpush1.msra.mxu0 0.0
        %2767 = vmatprep.subr.mxu0 0.0
        %2768 = vmatpush1.msra.mxu0 0.0
        %2769 = vmatprep.subr.mxu0 0.0
        %2770 = vmatpush1.msra.mxu0 0.0
        %2771 = vmatprep.subr.mxu0 0.0
        %2772 = vmatpush1.msra.mxu0 0.0
        %2773 = vmatprep.subr.mxu0 0.0
        %2774 = vmatpush1.msra.mxu0 0.0
        %2775 = vmatprep.mubr.f32.mxu0 0.0
        %2776 = vmatmul.mubr.f32.gmra.mrb[0].mxu0 %v2709
        %v2777 = vpop.f32.mrb[0].mxu0
        %v2778 = vadd.f32 0.0, %v2777
        %v2779 = vpop.f32.mrb[0].mxu0
        %2780 = vdwg.mxu0
        %v2782 = vsel %vm1041, %v2247, 0
        %2784 = vmatprep.subr.mxu0 0.0
        %2785 = vmatpush1.msra.mxu0 %v2557
        %2786 = vmatprep.subr.mxu0 0.0
        %2787 = vmatpush1.msra.mxu0 0.0
        %2788 = vmatprep.subr.mxu0 0.0
        %2789 = vmatpush1.msra.mxu0 0.0
        %2790 = vmatprep.subr.mxu0 0.0
        %2791 = vmatpush1.msra.mxu0 0.0
        %2792 = vmatprep.subr.mxu0 0.0
        %2793 = vmatpush1.msra.mxu0 0.0
        %2794 = vmatprep.subr.mxu0 0.0
        %2795 = vmatpush1.msra.mxu0 0.0
        %2796 = vmatprep.subr.mxu0 0.0
        %2797 = vmatpush1.msra.mxu0 0.0
        %2798 = vmatprep.subr.mxu0 0.0
        %2799 = vmatpush1.msra.mxu0 0.0
        %2800 = vmatprep.subr.mxu0 0.0
        %2801 = vmatpush1.msra.mxu0 0.0
        %2802 = vmatprep.subr.mxu0 0.0
        %2803 = vmatpush1.msra.mxu0 0.0
        %2804 = vmatprep.subr.mxu0 0.0
        %2805 = vmatpush1.msra.mxu0 0.0
        %2806 = vmatprep.subr.mxu0 0.0
        %2807 = vmatpush1.msra.mxu0 0.0
        %2808 = vmatprep.subr.mxu0 0.0
        %2809 = vmatpush1.msra.mxu0 0.0
        %2810 = vmatprep.subr.mxu0 0.0
        %2811 = vmatpush1.msra.mxu0 0.0
        %2812 = vmatprep.subr.mxu0 0.0
        %2813 = vmatpush1.msra.mxu0 0.0
        %2814 = vmatprep.subr.mxu0 0.0
        %2815 = vmatpush1.msra.mxu0 0.0
        %2816 = vmatprep.subr.mxu0 0.0
        %2817 = vmatpush1.msra.mxu0 0.0
        %2818 = vmatprep.subr.mxu0 0.0
        %2819 = vmatpush1.msra.mxu0 0.0
        %2820 = vmatprep.subr.mxu0 0.0
        %2821 = vmatpush1.msra.mxu0 0.0
        %2822 = vmatprep.subr.mxu0 0.0
        %2823 = vmatpush1.msra.mxu0 0.0
        %2824 = vmatprep.subr.mxu0 0.0
        %2825 = vmatpush1.msra.mxu0 0.0
        %2826 = vmatprep.subr.mxu0 0.0
        %2827 = vmatpush1.msra.mxu0 0.0
        %2828 = vmatprep.subr.mxu0 0.0
        %2829 = vmatpush1.msra.mxu0 0.0
        %2830 = vmatprep.subr.mxu0 0.0
        %2831 = vmatpush1.msra.mxu0 0.0
        %2832 = vmatprep.subr.mxu0 0.0
        %2833 = vmatpush1.msra.mxu0 0.0
        %2834 = vmatprep.subr.mxu0 0.0
        %2835 = vmatpush1.msra.mxu0 0.0
        %2836 = vmatprep.subr.mxu0 0.0
        %2837 = vmatpush1.msra.mxu0 0.0
        %2838 = vmatprep.subr.mxu0 0.0
        %2839 = vmatpush1.msra.mxu0 0.0
        %2840 = vmatprep.subr.mxu0 0.0
        %2841 = vmatpush1.msra.mxu0 0.0
        %2842 = vmatprep.subr.mxu0 0.0
        %2843 = vmatpush1.msra.mxu0 0.0
        %2844 = vmatprep.subr.mxu0 0.0
        %2845 = vmatpush1.msra.mxu0 0.0
        %2846 = vmatprep.subr.mxu0 0.0
        %2847 = vmatpush1.msra.mxu0 0.0
        %2848 = vmatprep.mubr.f32.mxu0 0.0
        %2849 = vmatmul.mubr.f32.gmra.mrb[0].mxu0 %v2782
        %v2850 = vpop.f32.mrb[0].mxu0
        %v2851 = vadd.f32 0.0, %v2850
        %v2852 = vpop.f32.mrb[0].mxu0
        %2853 = vdwg.mxu0
        %v2855 = vsel %vm1041, %v2323, 0
        %2857 = vmatprep.subr.mxu0 0.0
        %2858 = vmatpush1.msra.mxu0 %v2558
        %2859 = vmatprep.subr.mxu0 0.0
        %2860 = vmatpush1.msra.mxu0 0.0
        %2861 = vmatprep.subr.mxu0 0.0
        %2862 = vmatpush1.msra.mxu0 0.0
        %2863 = vmatprep.subr.mxu0 0.0
        %2864 = vmatpush1.msra.mxu0 0.0
        %2865 = vmatprep.subr.mxu0 0.0
        %2866 = vmatpush1.msra.mxu0 0.0
        %2867 = vmatprep.subr.mxu0 0.0
        %2868 = vmatpush1.msra.mxu0 0.0
        %2869 = vmatprep.subr.mxu0 0.0
        %2870 = vmatpush1.msra.mxu0 0.0
        %2871 = vmatprep.subr.mxu0 0.0
        %2872 = vmatpush1.msra.mxu0 0.0
        %2873 = vmatprep.subr.mxu0 0.0
        %2874 = vmatpush1.msra.mxu0 0.0
        %2875 = vmatprep.subr.mxu0 0.0
        %2876 = vmatpush1.msra.mxu0 0.0
        %2877 = vmatprep.subr.mxu0 0.0
        %2878 = vmatpush1.msra.mxu0 0.0
        %2879 = vmatprep.subr.mxu0 0.0
        %2880 = vmatpush1.msra.mxu0 0.0
        %2881 = vmatprep.subr.mxu0 0.0
        %2882 = vmatpush1.msra.mxu0 0.0
        %2883 = vmatprep.subr.mxu0 0.0
        %2884 = vmatpush1.msra.mxu0 0.0
        %2885 = vmatprep.subr.mxu0 0.0
        %2886 = vmatpush1.msra.mxu0 0.0
        %2887 = vmatprep.subr.mxu0 0.0
        %2888 = vmatpush1.msra.mxu0 0.0
        %2889 = vmatprep.subr.mxu0 0.0
        %2890 = vmatpush1.msra.mxu0 0.0
        %2891 = vmatprep.subr.mxu0 0.0
        %2892 = vmatpush1.msra.mxu0 0.0
        %2893 = vmatprep.subr.mxu0 0.0
        %2894 = vmatpush1.msra.mxu0 0.0
        %2895 = vmatprep.subr.mxu0 0.0
        %2896 = vmatpush1.msra.mxu0 0.0
        %2897 = vmatprep.subr.mxu0 0.0
        %2898 = vmatpush1.msra.mxu0 0.0
        %2899 = vmatprep.subr.mxu0 0.0
        %2900 = vmatpush1.msra.mxu0 0.0
        %2901 = vmatprep.subr.mxu0 0.0
        %2902 = vmatpush1.msra.mxu0 0.0
        %2903 = vmatprep.subr.mxu0 0.0
        %2904 = vmatpush1.msra.mxu0 0.0
        %2905 = vmatprep.subr.mxu0 0.0
        %2906 = vmatpush1.msra.mxu0 0.0
        %2907 = vmatprep.subr.mxu0 0.0
        %2908 = vmatpush1.msra.mxu0 0.0
        %2909 = vmatprep.subr.mxu0 0.0
        %2910 = vmatpush1.msra.mxu0 0.0
        %2911 = vmatprep.subr.mxu0 0.0
        %2912 = vmatpush1.msra.mxu0 0.0
        %2913 = vmatprep.subr.mxu0 0.0
        %2914 = vmatpush1.msra.mxu0 0.0
        %2915 = vmatprep.subr.mxu0 0.0
        %2916 = vmatpush1.msra.mxu0 0.0
        %2917 = vmatprep.subr.mxu0 0.0
        %2918 = vmatpush1.msra.mxu0 0.0
        %2919 = vmatprep.subr.mxu0 0.0
        %2920 = vmatpush1.msra.mxu0 0.0
        %2921 = vmatprep.mubr.f32.mxu0 0.0
        %2922 = vmatmul.mubr.f32.gmra.mrb[0].mxu0 %v2855
        %v2923 = vpop.f32.mrb[0].mxu0
        %v2924 = vadd.f32 0.0, %v2923
        %v2925 = vpop.f32.mrb[0].mxu0
        %2926 = vdwg.mxu0
        %v2928 = vsel %vm1041, %v2399, 0
        %2930 = vmatprep.subr.mxu0 0.0
        %2931 = vmatpush1.msra.mxu0 %v2559
        %2932 = vmatprep.subr.mxu0 0.0
        %2933 = vmatpush1.msra.mxu0 0.0
        %2934 = vmatprep.subr.mxu0 0.0
        %2935 = vmatpush1.msra.mxu0 0.0
        %2936 = vmatprep.subr.mxu0 0.0
        %2937 = vmatpush1.msra.mxu0 0.0
        %2938 = vmatprep.subr.mxu0 0.0
        %2939 = vmatpush1.msra.mxu0 0.0
        %2940 = vmatprep.subr.mxu0 0.0
        %2941 = vmatpush1.msra.mxu0 0.0
        %2942 = vmatprep.subr.mxu0 0.0
        %2943 = vmatpush1.msra.mxu0 0.0
        %2944 = vmatprep.subr.mxu0 0.0
        %2945 = vmatpush1.msra.mxu0 0.0
        %2946 = vmatprep.subr.mxu0 0.0
        %2947 = vmatpush1.msra.mxu0 0.0
        %2948 = vmatprep.subr.mxu0 0.0
        %2949 = vmatpush1.msra.mxu0 0.0
        %2950 = vmatprep.subr.mxu0 0.0
        %2951 = vmatpush1.msra.mxu0 0.0
        %2952 = vmatprep.subr.mxu0 0.0
        %2953 = vmatpush1.msra.mxu0 0.0
        %2954 = vmatprep.subr.mxu0 0.0
        %2955 = vmatpush1.msra.mxu0 0.0
        %2956 = vmatprep.subr.mxu0 0.0
        %2957 = vmatpush1.msra.mxu0 0.0
        %2958 = vmatprep.subr.mxu0 0.0
        %2959 = vmatpush1.msra.mxu0 0.0
        %2960 = vmatprep.subr.mxu0 0.0
        %2961 = vmatpush1.msra.mxu0 0.0
        %2962 = vmatprep.subr.mxu0 0.0
        %2963 = vmatpush1.msra.mxu0 0.0
        %2964 = vmatprep.subr.mxu0 0.0
        %2965 = vmatpush1.msra.mxu0 0.0
        %2966 = vmatprep.subr.mxu0 0.0
        %2967 = vmatpush1.msra.mxu0 0.0
        %2968 = vmatprep.subr.mxu0 0.0
        %2969 = vmatpush1.msra.mxu0 0.0
        %2970 = vmatprep.subr.mxu0 0.0
        %2971 = vmatpush1.msra.mxu0 0.0
        %2972 = vmatprep.subr.mxu0 0.0
        %2973 = vmatpush1.msra.mxu0 0.0
        %2974 = vmatprep.subr.mxu0 0.0
        %2975 = vmatpush1.msra.mxu0 0.0
        %2976 = vmatprep.subr.mxu0 0.0
        %2977 = vmatpush1.msra.mxu0 0.0
        %2978 = vmatprep.subr.mxu0 0.0
        %2979 = vmatpush1.msra.mxu0 0.0
        %2980 = vmatprep.subr.mxu0 0.0
        %2981 = vmatpush1.msra.mxu0 0.0
        %2982 = vmatprep.subr.mxu0 0.0
        %2983 = vmatpush1.msra.mxu0 0.0
        %2984 = vmatprep.subr.mxu0 0.0
        %2985 = vmatpush1.msra.mxu0 0.0
        %2986 = vmatprep.subr.mxu0 0.0
        %2987 = vmatpush1.msra.mxu0 0.0
        %2988 = vmatprep.subr.mxu0 0.0
        %2989 = vmatpush1.msra.mxu0 0.0
        %2990 = vmatprep.subr.mxu0 0.0
        %2991 = vmatpush1.msra.mxu0 0.0
        %2992 = vmatprep.subr.mxu0 0.0
        %2993 = vmatpush1.msra.mxu0 0.0
        %2994 = vmatprep.mubr.f32.mxu0 0.0
        %2995 = vmatmul.mubr.f32.gmra.mrb[0].mxu0 %v2928
        %v2996 = vpop.f32.mrb[0].mxu0
        %v2997 = vadd.f32 0.0, %v2996
        %v2998 = vpop.f32.mrb[0].mxu0
        %2999 = vdwg.mxu0
        %v3001 = vsel %vm1041, %v2475, 0
        %3003 = vmatprep.subr.mxu0 0.0
        %3004 = vmatpush1.msra.mxu0 %v2560
        %3005 = vmatprep.subr.mxu0 0.0
        %3006 = vmatpush1.msra.mxu0 0.0
        %3007 = vmatprep.subr.mxu0 0.0
        %3008 = vmatpush1.msra.mxu0 0.0
        %3009 = vmatprep.subr.mxu0 0.0
        %3010 = vmatpush1.msra.mxu0 0.0
        %3011 = vmatprep.subr.mxu0 0.0
        %3012 = vmatpush1.msra.mxu0 0.0
        %3013 = vmatprep.subr.mxu0 0.0
        %3014 = vmatpush1.msra.mxu0 0.0
        %3015 = vmatprep.subr.mxu0 0.0
        %3016 = vmatpush1.msra.mxu0 0.0
        %3017 = vmatprep.subr.mxu0 0.0
        %3018 = vmatpush1.msra.mxu0 0.0
        %3019 = vmatprep.subr.mxu0 0.0
        %3020 = vmatpush1.msra.mxu0 0.0
        %3021 = vmatprep.subr.mxu0 0.0
        %3022 = vmatpush1.msra.mxu0 0.0
        %3023 = vmatprep.subr.mxu0 0.0
        %3024 = vmatpush1.msra.mxu0 0.0
        %3025 = vmatprep.subr.mxu0 0.0
        %3026 = vmatpush1.msra.mxu0 0.0
        %3027 = vmatprep.subr.mxu0 0.0
        %3028 = vmatpush1.msra.mxu0 0.0
        %3029 = vmatprep.subr.mxu0 0.0
        %3030 = vmatpush1.msra.mxu0 0.0
        %3031 = vmatprep.subr.mxu0 0.0
        %3032 = vmatpush1.msra.mxu0 0.0
        %3033 = vmatprep.subr.mxu0 0.0
        %3034 = vmatpush1.msra.mxu0 0.0
        %3035 = vmatprep.subr.mxu0 0.0
        %3036 = vmatpush1.msra.mxu0 0.0
        %3037 = vmatprep.subr.mxu0 0.0
        %3038 = vmatpush1.msra.mxu0 0.0
        %3039 = vmatprep.subr.mxu0 0.0
        %3040 = vmatpush1.msra.mxu0 0.0
        %3041 = vmatprep.subr.mxu0 0.0
        %3042 = vmatpush1.msra.mxu0 0.0
        %3043 = vmatprep.subr.mxu0 0.0
        %3044 = vmatpush1.msra.mxu0 0.0
        %3045 = vmatprep.subr.mxu0 0.0
        %3046 = vmatpush1.msra.mxu0 0.0
        %3047 = vmatprep.subr.mxu0 0.0
        %3048 = vmatpush1.msra.mxu0 0.0
        %3049 = vmatprep.subr.mxu0 0.0
        %3050 = vmatpush1.msra.mxu0 0.0
        %3051 = vmatprep.subr.mxu0 0.0
        %3052 = vmatpush1.msra.mxu0 0.0
        %3053 = vmatprep.subr.mxu0 0.0
        %3054 = vmatpush1.msra.mxu0 0.0
        %3055 = vmatprep.subr.mxu0 0.0
        %3056 = vmatpush1.msra.mxu0 0.0
        %3057 = vmatprep.subr.mxu0 0.0
        %3058 = vmatpush1.msra.mxu0 0.0
        %3059 = vmatprep.subr.mxu0 0.0
        %3060 = vmatpush1.msra.mxu0 0.0
        %3061 = vmatprep.subr.mxu0 0.0
        %3062 = vmatpush1.msra.mxu0 0.0
        %3063 = vmatprep.subr.mxu0 0.0
        %3064 = vmatpush1.msra.mxu0 0.0
        %3065 = vmatprep.subr.mxu0 0.0
        %3066 = vmatpush1.msra.mxu0 0.0
        %3067 = vmatprep.mubr.f32.mxu0 0.0
        %3068 = vmatmul.mubr.f32.gmra.mrb[0].mxu0 %v3001
        %v3069 = vpop.f32.mrb[0].mxu0
        %v3070 = vadd.f32 0.0, %v3069
        %v3071 = vpop.f32.mrb[0].mxu0
        %3072 = vdwg.mxu0
        %v3074 = vsel %vm1041, %v2551, 0
        %3076 = vmatprep.subr.mxu0 0.0
        %3077 = vmatpush1.msra.mxu0 %v2561
        %3078 = vmatprep.subr.mxu0 0.0
        %3079 = vmatpush1.msra.mxu0 0.0
        %3080 = vmatprep.subr.mxu0 0.0
        %3081 = vmatpush1.msra.mxu0 0.0
        %3082 = vmatprep.subr.mxu0 0.0
        %3083 = vmatpush1.msra.mxu0 0.0
        %3084 = vmatprep.subr.mxu0 0.0
        %3085 = vmatpush1.msra.mxu0 0.0
        %3086 = vmatprep.subr.mxu0 0.0
        %3087 = vmatpush1.msra.mxu0 0.0
        %3088 = vmatprep.subr.mxu0 0.0
        %3089 = vmatpush1.msra.mxu0 0.0
        %3090 = vmatprep.subr.mxu0 0.0
        %3091 = vmatpush1.msra.mxu0 0.0
        %3092 = vmatprep.subr.mxu0 0.0
        %3093 = vmatpush1.msra.mxu0 0.0
        %3094 = vmatprep.subr.mxu0 0.0
        %3095 = vmatpush1.msra.mxu0 0.0
        %3096 = vmatprep.subr.mxu0 0.0
        %3097 = vmatpush1.msra.mxu0 0.0
        %3098 = vmatprep.subr.mxu0 0.0
        %3099 = vmatpush1.msra.mxu0 0.0
        %3100 = vmatprep.subr.mxu0 0.0
        %3101 = vmatpush1.msra.mxu0 0.0
        %3102 = vmatprep.subr.mxu0 0.0
        %3103 = vmatpush1.msra.mxu0 0.0
        %3104 = vmatprep.subr.mxu0 0.0
        %3105 = vmatpush1.msra.mxu0 0.0
        %3106 = vmatprep.subr.mxu0 0.0
        %3107 = vmatpush1.msra.mxu0 0.0
        %3108 = vmatprep.subr.mxu0 0.0
        %3109 = vmatpush1.msra.mxu0 0.0
        %3110 = vmatprep.subr.mxu0 0.0
        %3111 = vmatpush1.msra.mxu0 0.0
        %3112 = vmatprep.subr.mxu0 0.0
        %3113 = vmatpush1.msra.mxu0 0.0
        %3114 = vmatprep.subr.mxu0 0.0
        %3115 = vmatpush1.msra.mxu0 0.0
        %3116 = vmatprep.subr.mxu0 0.0
        %3117 = vmatpush1.msra.mxu0 0.0
        %3118 = vmatprep.subr.mxu0 0.0
        %3119 = vmatpush1.msra.mxu0 0.0
        %3120 = vmatprep.subr.mxu0 0.0
        %3121 = vmatpush1.msra.mxu0 0.0
        %3122 = vmatprep.subr.mxu0 0.0
        %3123 = vmatpush1.msra.mxu0 0.0
        %3124 = vmatprep.subr.mxu0 0.0
        %3125 = vmatpush1.msra.mxu0 0.0
        %3126 = vmatprep.subr.mxu0 0.0
        %3127 = vmatpush1.msra.mxu0 0.0
        %3128 = vmatprep.subr.mxu0 0.0
        %3129 = vmatpush1.msra.mxu0 0.0
        %3130 = vmatprep.subr.mxu0 0.0
        %3131 = vmatpush1.msra.mxu0 0.0
        %3132 = vmatprep.subr.mxu0 0.0
        %3133 = vmatpush1.msra.mxu0 0.0
        %3134 = vmatprep.subr.mxu0 0.0
        %3135 = vmatpush1.msra.mxu0 0.0
        %3136 = vmatprep.subr.mxu0 0.0
        %3137 = vmatpush1.msra.mxu0 0.0
        %3138 = vmatprep.subr.mxu0 0.0
        %3139 = vmatpush1.msra.mxu0 0.0
        %3140 = vmatprep.mubr.f32.mxu0 0.0
        %3141 = vmatmul.mubr.f32.gmra.mrb[0].mxu0 %v3074
        %v3142 = vpop.f32.mrb[0].mxu0
        %v3143 = vadd.f32 0.0, %v3142
        %v3144 = vpop.f32.mrb[0].mxu0
        %3145 = vdwg.mxu0
        %v3146 = vsel %vm532, %v2632, 0.0
        %v3147 = vsel %vm532, %v2705, 0.0
        %v3148 = vadd.f32 %v3146, %v3147
        %v3149 = vsel %vm532, %v2778, 0.0
        %v3150 = vadd.f32 %v3148, %v3149
        %v3151 = vsel %vm532, %v2851, 0.0
        %v3152 = vadd.f32 %v3150, %v3151
        %v3153 = vsel %vm532, %v2924, 0.0
        %v3154 = vadd.f32 %v3152, %v3153
        %v3155 = vsel %vm532, %v2997, 0.0
        %v3156 = vadd.f32 %v3154, %v3155
        %v3157 = vsel %vm532, %v3070, 0.0
        %v3158 = vadd.f32 %v3156, %v3157
        %v3159 = vsel %vm532, %v3143, 0.0
        %v3160 = vadd.f32 %v3158, %v3159
        %v3161 = vld [vmem:[%s6] sm:$0x1]
        %v3163 = vlaneseq
        %v3164 = vshrl.u32 %v3163, 7
        %v3165 = vsub.s32 0, %v3164
        %v3166 = vrot.slane %v3161, %v3165
        %v3168 = vadd.f32 %v3160, %v3166
        %3169 = vst.msk [vmem:[%s429] sm:$0xff] %vm532, %v3168
        %s3170 = sand.u32 %s219, 1
        %s3171 = scalar_lea.sflag [#allocation4], %s3170
        %s3172 = sand.u32 %s219, 1
        %s3173 = smul.addr %s3172, 8
        %s3174 = scalar_lea.vmem [#allocation10], %s3173
        %s3175 = sand.u32 %s247, 1
        %s3176 = scalar_lea.sflag [#allocation12], %s3175
        %s3177 = sand.u32 %s247, 1
        %s3178 = smul.addr %s3177, 64
        %s3179 = scalar_lea.vmem [#allocation11], %s3178
        // Predicated region
        $region65: #{tpu_custom_call.1} parent=47 // pred_check
          %p3180 = pneg %p229
        $region66: #{tpu_custom_call.1} parent=47 // pred_check_branch
          %3182 = sbr.rel (%p3180) target = $region68
        $region67: #{tpu_custom_call.1} parent=47 // pred_region
          %s3184 = ssub.s32 128, 128
          %3185 = vsyncadd %s3171, %s3184
          %s3186 = sadd.s32 %s38, %s37
          %s3187 = smul.addr %s3186, 128
          %s3188 = scalar_lea.hbm %s7, %s3187
          %s3190 = sshll.u32 %s3174, 4
          %s3191 = int_to_ptr.vmem [resolvable:$true] %s3190
          %3193 = dma.vmem_to_hbm [thread:$0]  %s3191, 128, %s3188, %s3171
        $region68: #{tpu_custom_call.1} parent=47 // pred_fallthru
          _
        // Predicated region
        $region69: #{tpu_custom_call.1} parent=47 // pred_check
          %p3194 = pneg %p257
        $region70: #{tpu_custom_call.1} parent=47 // pred_check_branch
          %3196 = sbr.rel (%p3194) target = $region72
        $region71: #{tpu_custom_call.1} parent=47 // pred_region
          %s3198 = ssub.s32 1024, 1024
          %3199 = vsyncadd %s3176, %s3198
          %s3200 = smul.addr %s37, 8
          %s3201 = sadd.s32 %s38, %s3200
          %s3202 = smul.addr %s3201, 128
          %s3203 = scalar_lea.hbm %s8, %s3202
          %s3204 = sshll.u32 %s3179, 4
          %s3205 = int_to_ptr.vmem [resolvable:$true] %s3204
          %3210 = dma.vmem_to_hbm [thread:$0]  %s3205, 1024, %s3203, %s3176, 128, 128, 8
        $region72: #{tpu_custom_call.1} parent=47 // pred_fallthru
          _
      $region48: #{tpu_custom_call.1} parent=5 // pred_fallthru
        _
      %p3211 = scmp.le.s32.totalorder 2, %s28
      // Predicated region
      $region73: #{tpu_custom_call.1} parent=5 // pred_check
        %p3212 = pneg %p3211
      $region74: #{tpu_custom_call.1} parent=5 // pred_check_branch
        %3214 = sbr.rel (%p3212) target = $region76
      $region75: #{tpu_custom_call.1} parent=5 // pred_region
        %s3215 = ssub.s32 %s28, 2
        // Predicated region
        $region77: #{tpu_custom_call.1} parent=75 // pred_check
          %p3216 = pneg %p235
        $region78: #{tpu_custom_call.1} parent=75 // pred_check_branch
          %3218 = sbr.rel (%p3216) target = $region80
        $region79: #{tpu_custom_call.1} parent=75 // pred_region
          %s3219 = sand.u32 %s220, 1
          %s3220 = scalar_lea.sflag [#allocation4], %s3219
          %s3221 = sand.u32 %s220, 1
          %s3222 = smul.addr %s3221, 8
          %s3223 = scalar_lea.vmem [#allocation10], %s3222
          %3224 = dma.done %s3220, 128
        $region80: #{tpu_custom_call.1} parent=75 // pred_fallthru
          _
        // Predicated region
        $region81: #{tpu_custom_call.1} parent=75 // pred_check
          %p3225 = pneg %p263
        $region82: #{tpu_custom_call.1} parent=75 // pred_check_branch
          %3227 = sbr.rel (%p3225) target = $region84
        $region83: #{tpu_custom_call.1} parent=75 // pred_region
          %s3228 = sand.u32 %s248, 1
          %s3229 = scalar_lea.sflag [#allocation12], %s3228
          %s3230 = sand.u32 %s248, 1
          %s3231 = smul.addr %s3230, 64
          %s3232 = scalar_lea.vmem [#allocation11], %s3231
          %3233 = dma.done %s3229, 1024
        $region84: #{tpu_custom_call.1} parent=75 // pred_fallthru
          _
      $region76: #{tpu_custom_call.1} parent=5 // pred_fallthru
        _
    $region6: #{tpu_custom_call.1} parent=1 // loop_footer
      %s32 = sadd.s32 1, %s28
    $region7: #{tpu_custom_call.1} parent=1 // loop_footer_branch
      %27 = sbr.rel target = $region3
    $region8: #{tpu_custom_call.1} parent=1 // loop_exit
      _
    %3234 = vsyncpa [#allocation3], 1
    %s3235 = scalar_lea.sflag [#allocation3], 1
    %3236 = vsyncpa %s3235, 1
    %3237 = vsyncpa [#allocation6], 1
    %s3238 = scalar_lea.sflag [#allocation6], 1
    %3239 = vsyncpa %s3238, 1
    %3240 = vsyncpa [#allocation9], 1
    %3241 = vsyncpa [#allocation4], 1
    %s3242 = scalar_lea.sflag [#allocation4], 1
    %3243 = vsyncpa %s3242, 1
    %3244 = vsyncpa [#allocation12], 1
    %s3245 = scalar_lea.sflag [#allocation12], 1
    %3246 = vsyncpa %s3245, 1

</llo_original>
